<compile_context>
chip_gen: v7x
topology: tpu7x:2x2x1
jax: 0.10.0
libtpu: 0.0.40
codegen_flags: <defaults>
</compile_context>

<pallas_src>
import jax
import jax.numpy as jnp
from jax.experimental import pallas as pl
from jax.experimental.pallas import tpu as pltpu


# ----------------------------------------------------------------------------
# Pallas kernels
# ----------------------------------------------------------------------------
def _conv_pool_gemm_kernel(a_ref, w_ref, b_ref, o_ref):
    """Fused conv-as-GEMM + bias + ReLU + 2x2 max-pool.

    a_ref: [4, tm, Kp] bf16   four pooling-parity im2col blocks
    w_ref: [Kp, 128]  bf16    flattened conv weight (zero padded)
    b_ref: [1, 128]   f32     bias (zero padded)
    o_ref: [tm, 128]  bf16    pooled, ReLU'd activation (NHWC-flat rows)
    """
    w = w_ref[...]
    s = jnp.dot(a_ref[0], w, preferred_element_type=jnp.float32)
    s = jnp.maximum(s, jnp.dot(a_ref[1], w, preferred_element_type=jnp.float32))
    s = jnp.maximum(s, jnp.dot(a_ref[2], w, preferred_element_type=jnp.float32))
    s = jnp.maximum(s, jnp.dot(a_ref[3], w, preferred_element_type=jnp.float32))
    o_ref[...] = jnp.maximum(s + b_ref[...], 0.0).astype(o_ref.dtype)


def _fc_chain_kernel(x_ref, w1_ref, b1_ref, w2_ref, b2_ref, w3_ref, b3_ref,
                     o_ref):
    """Fused fc1+ReLU -> fc2+ReLU -> fc3 (all weights VMEM-resident)."""
    h = jnp.dot(x_ref[...], w1_ref[...], preferred_element_type=jnp.float32)
    h = jnp.maximum(h + b1_ref[...], 0.0)
    h = jnp.dot(h.astype(w2_ref.dtype), w2_ref[...],
                preferred_element_type=jnp.float32)
    h = jnp.maximum(h + b2_ref[...], 0.0)
    o = jnp.dot(h.astype(w3_ref.dtype), w3_ref[...],
                preferred_element_type=jnp.float32)
    o_ref[...] = (o + b3_ref[...]).astype(o_ref.dtype)


# ----------------------------------------------------------------------------
# Pallas wrappers
# ----------------------------------------------------------------------------
def conv_pool_gemm(a, w, b, *, tm_max=512):
    """a: [4, M, Kp] bf16, w: [Kp, Np] bf16, b: [1, Np] f32 -> [M, Np] bf16."""
    _, M, Kp = a.shape
    Np = w.shape[1]
    tm = M if M <= tm_max else tm_max
    grid = (pl.cdiv(M, tm),)
    return pl.pallas_call(
        _conv_pool_gemm_kernel,
        out_shape=jax.ShapeDtypeStruct((M, Np), jnp.bfloat16),
        grid_spec=pltpu.PrefetchScalarGridSpec(
            num_scalar_prefetch=0,
            grid=grid,
            in_specs=[
                pl.BlockSpec((4, tm, Kp), lambda m: (0, m, 0)),
                pl.BlockSpec((Kp, Np), lambda m: (0, 0)),
                pl.BlockSpec((1, Np), lambda m: (0, 0)),
            ],
            out_specs=pl.BlockSpec((tm, Np), lambda m: (m, 0)),
        ),
        compiler_params=pltpu.CompilerParams(
            dimension_semantics=("parallel",)),
    )(a, w, b)


def fc_chain(x, w1, b1, w2, b2, w3, b3, *, tm_max=256):
    """x: [M, K] bf16; all weights bf16 [K*, 128]; biases f32 [1, 128]."""
    M, K = x.shape
    Np = w3.shape[1]
    tm = M if M <= tm_max else tm_max
    grid = (pl.cdiv(M, tm),)

    def full_spec(arr):
        return pl.BlockSpec(arr.shape, lambda m: (0, 0))

    return pl.pallas_call(
        _fc_chain_kernel,
        out_shape=jax.ShapeDtypeStruct((M, Np), jnp.float32),
        grid_spec=pltpu.PrefetchScalarGridSpec(
            num_scalar_prefetch=0,
            grid=grid,
            in_specs=[
                pl.BlockSpec((tm, K), lambda m: (m, 0)),
                full_spec(w1), full_spec(b1),
                full_spec(w2), full_spec(b2),
                full_spec(w3), full_spec(b3),
            ],
            out_specs=pl.BlockSpec((tm, Np), lambda m: (m, 0)),
        ),
        compiler_params=pltpu.CompilerParams(
            dimension_semantics=("parallel",)),
    )(x, w1, b1, w2, b2, w3, b3)


# ----------------------------------------------------------------------------
# Plain-JAX glue: pooling-parity im2col (data movement only, no compute)
# ----------------------------------------------------------------------------
def _pool_im2col(x_nhwc, k, k_pad):
    """x: [B, H, W, C] -> ([4, B*POH*POW, k_pad] bf16, POH, POW).

    Parity p = 2*dy + dx selects the 2x2 max-pool window position; feature
    order inside K is (ki, kj, c), matching the prepped conv weights.
    """
    B, H, W, C = x_nhwc.shape
    OH, OW = H - k + 1, W - k + 1
    POH, POW = OH // 2, OW // 2
    groups = []
    for dy in (0, 1):
        for dx in (0, 1):
            taps = []
            for ki in range(k):
                for kj in range(k):
                    taps.append(
                        x_nhwc[:, dy + ki: dy + ki + 2 * POH: 2,
                               dx + kj: dx + kj + 2 * POW: 2, :])
            p = jnp.stack(taps, axis=3)                      # [B,POH,POW,k*k,C]
            groups.append(p.reshape(B * POH * POW, k * k * C))
    a = jnp.stack(groups, axis=0)                            # [4, Bp, K]
    K = k * k * C
    if k_pad > K:
        a = jnp.pad(a, ((0, 0), (0, 0), (0, k_pad - K)))
    return a.astype(jnp.bfloat16), POH, POW


# ----------------------------------------------------------------------------
# Parameters (torch-layout init) and one-time weight preparation
# ----------------------------------------------------------------------------
def init_params(key, in_channels, out_dim):
    ks = jax.random.split(key, 10)

    def uni(k, shape, fan_in):
        bound = 1.0 / jnp.sqrt(float(fan_in))
        return jax.random.uniform(k, shape, jnp.float32, -bound, bound)

    return {
        "conv1_w": uni(ks[0], (6, in_channels, 5, 5), in_channels * 25),
        "conv1_b": uni(ks[1], (6,), in_channels * 25),
        "conv2_w": uni(ks[2], (16, 6, 5, 5), 6 * 25),
        "conv2_b": uni(ks[3], (16,), 6 * 25),
        "fc1_w": uni(ks[4], (120, 400), 400),
        "fc1_b": uni(ks[5], (120,), 400),
        "fc2_w": uni(ks[6], (84, 120), 120),
        "fc2_b": uni(ks[7], (84,), 120),
        "fc3_w": uni(ks[8], (out_dim, 84), 84),
        "fc3_b": uni(ks[9], (out_dim,), 84),
    }


def prepare_params(raw):
    """Pre-permute / pad / cast weights ONCE (outside the jitted forward)."""
    NP = 128  # lane-dense output width for every kernel

    def conv_prep(w, b, k_pad):
        oc, c, k, _ = w.shape
        # torch weight [OC, C, kh, kw] -> feature order (kh, kw, c) to match
        # the NHWC im2col, then [K, OC], zero-padded to [k_pad, 128].
        wm = w.transpose(0, 2, 3, 1).reshape(oc, k * k * c).T
        wm = jnp.pad(wm, ((0, k_pad - k * k * c), (0, NP - oc)))
        bm = jnp.pad(b, (0, NP - oc)).reshape(1, NP)
        return wm.astype(jnp.bfloat16), bm.astype(jnp.float32)

    def fc1_prep(w, b):
        # Fold torch's NCHW flatten (c, h, w) into the weight so the kernel
        # can consume the NHWC-flat, channel-padded activation [B, 5*5*128].
        out_f = w.shape[0]                                   # 120
        w4 = w.reshape(out_f, 16, 5, 5).transpose(0, 2, 3, 1)  # [120,5,5,16]
        w4 = jnp.pad(w4, ((0, 0), (0, 0), (0, 0), (0, NP - 16)))
        wm = w4.reshape(out_f, 5 * 5 * NP).T                 # [3200, 120]
        wm = jnp.pad(wm, ((0, 0), (0, NP - out_f)))          # [3200, 128]
        bm = jnp.pad(b, (0, NP - out_f)).reshape(1, NP)
        return wm.astype(jnp.bfloat16), bm.astype(jnp.float32)

    def fc_prep(w, b):
        out_f, in_f = w.shape
        wm = jnp.pad(w.T, ((0, NP - in_f), (0, NP - out_f)))  # [128, 128]
        bm = jnp.pad(b, (0, NP - out_f)).reshape(1, NP)
        return wm.astype(jnp.bfloat16), bm.astype(jnp.float32)

    c1w, c1b = conv_prep(raw["conv1_w"], raw["conv1_b"], 128)   # K=75  -> 128
    c2w, c2b = conv_prep(raw["conv2_w"], raw["conv2_b"], 256)   # K=150 -> 256
    f1w, f1b = fc1_prep(raw["fc1_w"], raw["fc1_b"])
    f2w, f2b = fc_prep(raw["fc2_w"], raw["fc2_b"])
    f3w, f3b = fc_prep(raw["fc3_w"], raw["fc3_b"])
    return {
        "conv1_w": c1w, "conv1_b": c1b,
        "conv2_w": c2w, "conv2_b": c2b,
        "fc1_w": f1w, "fc1_b": f1b,
        "fc2_w": f2w, "fc2_b": f2b,
        "fc3_w": f3w, "fc3_b": f3b,
    }


# ----------------------------------------------------------------------------
# LeNet3 forward
# ----------------------------------------------------------------------------
def lenet3_forward(p, x, *, out_dim):
    """x: [B, C, 32, 32] NCHW f32 (PyTorch layout) -> [B, out_dim] f32."""
    B = x.shape[0]
    x = jnp.transpose(x, (0, 2, 3, 1))                       # NHWC, done once

    # conv1 + ReLU + 2x2 max-pool, fully fused into one Pallas call.
    a1, ph1, pw1 = _pool_im2col(x, 5, 128)                   # [4, B*196, 128]
    h1 = conv_pool_gemm(a1, p["conv1_w"], p["conv1_b"])      # [B*196, 128] bf16
    h1 = h1.reshape(B, ph1, pw1, 128)[:, :, :, :6]           # NHWC, 6 channels

    # conv2 + ReLU + 2x2 max-pool.
    a2, ph2, pw2 = _pool_im2col(h1, 5, 256)                  # [4, B*25, 256]
    h2 = conv_pool_gemm(a2, p["conv2_w"], p["conv2_b"])      # [B*25, 128] bf16

    # Flatten (free reshape; fc1 weight already encodes the NCHW flatten
    # permutation and the channel padding), then fused fc1/fc2/fc3.
    feat = h2.reshape(B, ph2 * pw2 * 128)                    # [B, 3200]
    logits = fc_chain(feat, p["fc1_w"], p["fc1_b"],
                      p["fc2_w"], p["fc2_b"],
                      p["fc3_w"], p["fc3_b"])                # [B, 128] f32
    return logits[:, :out_dim]                               # strip padding


if __name__ == "__main__":
    # LeNet geometry requires 32x32 spatial input (-> 5x5 before flatten).
    B, C, H, W = 2, 3, 32, 32
    OUT_DIM = 10

    key = jax.random.PRNGKey(0)
    kx, kp = jax.random.split(key)
    x = jax.random.normal(kx, (B, C, H, W), jnp.float32)
    params = prepare_params(init_params(kp, C, OUT_DIM))     # one-time prep

    fwd = jax.jit(lambda pr, xx: lenet3_forward(pr, xx, out_dim=OUT_DIM))
    y = fwd(params, x)
    jax.block_until_ready(y)

    assert y.shape == (B, OUT_DIM), y.shape
    assert bool(jnp.all(jnp.isfinite(y)))
    print("KERNEL_OK")
</pallas_src>

<mosaic_0001>
module attributes {stable_mosaic.version = 11 : i64} {
  func.func @_conv_pool_gemm_kernel(%arg0: i32, %arg1: memref<4x392x128xbf16, #tpu.memory_space<vmem>>, %arg2: memref<128x128xbf16, #tpu.memory_space<vmem>>, %arg3: memref<1x128xf32, #tpu.memory_space<vmem>>, %arg4: memref<392x128xbf16, #tpu.memory_space<vmem>>) attributes {dimension_semantics = [#tpu.dimension_semantics<parallel>], iteration_bounds = array<i64: 1>, scalar_prefetch = 0 : i64, scratch_operands = 0 : i64, tpu.core_type = #tpu.core_type<tc>, window_params = [{transform_indices = @transform_0, window_bounds = array<i64: 4, 392, 128>}, {pipeline_mode = #tpu.pipeline_mode<synchronous>, transform_indices = @transform_1, window_bounds = array<i64: 128, 128>}, {pipeline_mode = #tpu.pipeline_mode<synchronous>, transform_indices = @transform_2, window_bounds = array<i64: 1, 128>}, {transform_indices = @transform_3, window_bounds = array<i64: 392, 128>}]} {
    %c0 = arith.constant 0 : index
    %c0_0 = arith.constant 0 : index
    %0 = vector.load %arg2[%c0, %c0_0] : memref<128x128xbf16, #tpu.memory_space<vmem>>, vector<128x128xbf16>
    %c0_1 = arith.constant 0 : index
    %c0_2 = arith.constant 0 : index
    %c0_3 = arith.constant 0 : index
    %1 = vector.load %arg1[%c0_1, %c0_2, %c0_3] : memref<4x392x128xbf16, #tpu.memory_space<vmem>>, vector<1x392x128xbf16>
    %2 = vector.shape_cast %1 : vector<1x392x128xbf16> to vector<392x128xbf16>
    %cst = arith.constant dense<0.000000e+00> : vector<392x128xf32>
    %3 = tpu.matmul %2, %0, %cst {dimension_numbers = #tpu.dot_dimension_numbers<[1], [0], [0], [1], [0, 0, 1, 1], [], []>} : vector<392x128xbf16>, vector<128x128xbf16>, vector<392x128xf32> -> vector<392x128xf32>
    %c1 = arith.constant 1 : index
    %c0_4 = arith.constant 0 : index
    %c0_5 = arith.constant 0 : index
    %4 = vector.load %arg1[%c1, %c0_4, %c0_5] : memref<4x392x128xbf16, #tpu.memory_space<vmem>>, vector<1x392x128xbf16>
    %5 = vector.shape_cast %4 : vector<1x392x128xbf16> to vector<392x128xbf16>
    %cst_6 = arith.constant dense<0.000000e+00> : vector<392x128xf32>
    %6 = tpu.matmul %5, %0, %cst_6 {dimension_numbers = #tpu.dot_dimension_numbers<[1], [0], [0], [1], [0, 0, 1, 1], [], []>} : vector<392x128xbf16>, vector<128x128xbf16>, vector<392x128xf32> -> vector<392x128xf32>
    %7 = arith.maximumf %3, %6 : vector<392x128xf32>
    %c2 = arith.constant 2 : index
    %c0_7 = arith.constant 0 : index
    %c0_8 = arith.constant 0 : index
    %8 = vector.load %arg1[%c2, %c0_7, %c0_8] : memref<4x392x128xbf16, #tpu.memory_space<vmem>>, vector<1x392x128xbf16>
    %9 = vector.shape_cast %8 : vector<1x392x128xbf16> to vector<392x128xbf16>
    %cst_9 = arith.constant dense<0.000000e+00> : vector<392x128xf32>
    %10 = tpu.matmul %9, %0, %cst_9 {dimension_numbers = #tpu.dot_dimension_numbers<[1], [0], [0], [1], [0, 0, 1, 1], [], []>} : vector<392x128xbf16>, vector<128x128xbf16>, vector<392x128xf32> -> vector<392x128xf32>
    %11 = arith.maximumf %7, %10 : vector<392x128xf32>
    %c3 = arith.constant 3 : index
    %c0_10 = arith.constant 0 : index
    %c0_11 = arith.constant 0 : index
    %12 = vector.load %arg1[%c3, %c0_10, %c0_11] : memref<4x392x128xbf16, #tpu.memory_space<vmem>>, vector<1x392x128xbf16>
    %13 = vector.shape_cast %12 : vector<1x392x128xbf16> to vector<392x128xbf16>
    %cst_12 = arith.constant dense<0.000000e+00> : vector<392x128xf32>
    %14 = tpu.matmul %13, %0, %cst_12 {dimension_numbers = #tpu.dot_dimension_numbers<[1], [0], [0], [1], [0, 0, 1, 1], [], []>} : vector<392x128xbf16>, vector<128x128xbf16>, vector<392x128xf32> -> vector<392x128xf32>
    %15 = arith.maximumf %11, %14 : vector<392x128xf32>
    %c0_13 = arith.constant 0 : index
    %c0_14 = arith.constant 0 : index
    %16 = vector.load %arg3[%c0_13, %c0_14] : memref<1x128xf32, #tpu.memory_space<vmem>>, vector<1x128xf32>
    %17 = vector.broadcast %16 : vector<1x128xf32> to vector<392x128xf32>
    %18 = arith.addf %15, %17 : vector<392x128xf32>
    %cst_15 = arith.constant 0.000000e+00 : f32
    %19 = vector.broadcast %cst_15 : f32 to vector<392x128xf32>
    %20 = arith.maximumf %18, %19 : vector<392x128xf32>
    %21 = arith.truncf %20 : vector<392x128xf32> to vector<392x128xbf16>
    %c0_16 = arith.constant 0 : index
    %c0_17 = arith.constant 0 : index
    %22 = vector.load %arg4[%c0_16, %c0_17] : memref<392x128xbf16, #tpu.memory_space<vmem>>, vector<392x128xbf16>
    tpu.vector_store %arg4[%c0_16, %c0_17], %21 {strides = array<i32>} : memref<392x128xbf16, #tpu.memory_space<vmem>>, vector<392x128xbf16>,
    return
  }
  func.func @transform_0(%arg0: i32) -> (i32, i32, i32) {
    %c0_i32 = arith.constant 0 : i32
    %c0_i32_0 = arith.constant 0 : i32
    %c0_i32_1 = arith.constant 0 : i32
    return %c0_i32, %arg0, %c0_i32_0 : i32, i32, i32
  }
  func.func @transform_1(%arg0: i32) -> (i32, i32) {
    %c0_i32 = arith.constant 0 : i32
    %c0_i32_0 = arith.constant 0 : i32
    %c0_i32_1 = arith.constant 0 : i32
    return %c0_i32, %c0_i32_0 : i32, i32
  }
  func.func @transform_2(%arg0: i32) -> (i32, i32) {
    %c0_i32 = arith.constant 0 : i32
    %c0_i32_0 = arith.constant 0 : i32
    %c0_i32_1 = arith.constant 0 : i32
    return %c0_i32, %c0_i32_0 : i32, i32
  }
  func.func @transform_3(%arg0: i32) -> (i32, i32) {
    %c0_i32 = arith.constant 0 : i32
    %c0_i32_0 = arith.constant 0 : i32
    return %arg0, %c0_i32 : i32, i32
  }
}

module attributes {stable_mosaic.version = 11 : i64} {
  func.func @_conv_pool_gemm_kernel(%arg0: i32, %arg1: memref<4x50x256xbf16, #tpu.memory_space<vmem>>, %arg2: memref<256x128xbf16, #tpu.memory_space<vmem>>, %arg3: memref<1x128xf32, #tpu.memory_space<vmem>>, %arg4: memref<50x128xbf16, #tpu.memory_space<vmem>>) attributes {dimension_semantics = [#tpu.dimension_semantics<parallel>], iteration_bounds = array<i64: 1>, scalar_prefetch = 0 : i64, scratch_operands = 0 : i64, tpu.core_type = #tpu.core_type<tc>, window_params = [{transform_indices = @transform_0, window_bounds = array<i64: 4, 50, 256>}, {pipeline_mode = #tpu.pipeline_mode<synchronous>, transform_indices = @transform_1, window_bounds = array<i64: 256, 128>}, {pipeline_mode = #tpu.pipeline_mode<synchronous>, transform_indices = @transform_2, window_bounds = array<i64: 1, 128>}, {transform_indices = @transform_3, window_bounds = array<i64: 50, 128>}]} {
    %c0 = arith.constant 0 : index
    %c0_0 = arith.constant 0 : index
    %0 = vector.load %arg2[%c0, %c0_0] : memref<256x128xbf16, #tpu.memory_space<vmem>>, vector<256x128xbf16>
    %c0_1 = arith.constant 0 : index
    %c0_2 = arith.constant 0 : index
    %c0_3 = arith.constant 0 : index
    %1 = vector.load %arg1[%c0_1, %c0_2, %c0_3] : memref<4x50x256xbf16, #tpu.memory_space<vmem>>, vector<1x50x256xbf16>
    %2 = vector.shape_cast %1 : vector<1x50x256xbf16> to vector<50x256xbf16>
    %cst = arith.constant dense<0.000000e+00> : vector<50x128xf32>
    %3 = tpu.matmul %2, %0, %cst {dimension_numbers = #tpu.dot_dimension_numbers<[1], [0], [0], [1], [0, 0, 1, 1], [], []>} : vector<50x256xbf16>, vector<256x128xbf16>, vector<50x128xf32> -> vector<50x128xf32>
    %c1 = arith.constant 1 : index
    %c0_4 = arith.constant 0 : index
    %c0_5 = arith.constant 0 : index
    %4 = vector.load %arg1[%c1, %c0_4, %c0_5] : memref<4x50x256xbf16, #tpu.memory_space<vmem>>, vector<1x50x256xbf16>
    %5 = vector.shape_cast %4 : vector<1x50x256xbf16> to vector<50x256xbf16>
    %cst_6 = arith.constant dense<0.000000e+00> : vector<50x128xf32>
    %6 = tpu.matmul %5, %0, %cst_6 {dimension_numbers = #tpu.dot_dimension_numbers<[1], [0], [0], [1], [0, 0, 1, 1], [], []>} : vector<50x256xbf16>, vector<256x128xbf16>, vector<50x128xf32> -> vector<50x128xf32>
    %7 = arith.maximumf %3, %6 : vector<50x128xf32>
    %c2 = arith.constant 2 : index
    %c0_7 = arith.constant 0 : index
    %c0_8 = arith.constant 0 : index
    %8 = vector.load %arg1[%c2, %c0_7, %c0_8] : memref<4x50x256xbf16, #tpu.memory_space<vmem>>, vector<1x50x256xbf16>
    %9 = vector.shape_cast %8 : vector<1x50x256xbf16> to vector<50x256xbf16>
    %cst_9 = arith.constant dense<0.000000e+00> : vector<50x128xf32>
    %10 = tpu.matmul %9, %0, %cst_9 {dimension_numbers = #tpu.dot_dimension_numbers<[1], [0], [0], [1], [0, 0, 1, 1], [], []>} : vector<50x256xbf16>, vector<256x128xbf16>, vector<50x128xf32> -> vector<50x128xf32>
    %11 = arith.maximumf %7, %10 : vector<50x128xf32>
    %c3 = arith.constant 3 : index
    %c0_10 = arith.constant 0 : index
    %c0_11 = arith.constant 0 : index
    %12 = vector.load %arg1[%c3, %c0_10, %c0_11] : memref<4x50x256xbf16, #tpu.memory_space<vmem>>, vector<1x50x256xbf16>
    %13 = vector.shape_cast %12 : vector<1x50x256xbf16> to vector<50x256xbf16>
    %cst_12 = arith.constant dense<0.000000e+00> : vector<50x128xf32>
    %14 = tpu.matmul %13, %0, %cst_12 {dimension_numbers = #tpu.dot_dimension_numbers<[1], [0], [0], [1], [0, 0, 1, 1], [], []>} : vector<50x256xbf16>, vector<256x128xbf16>, vector<50x128xf32> -> vector<50x128xf32>
    %15 = arith.maximumf %11, %14 : vector<50x128xf32>
    %c0_13 = arith.constant 0 : index
    %c0_14 = arith.constant 0 : index
    %16 = vector.load %arg3[%c0_13, %c0_14] : memref<1x128xf32, #tpu.memory_space<vmem>>, vector<1x128xf32>
    %17 = vector.broadcast %16 : vector<1x128xf32> to vector<50x128xf32>
    %18 = arith.addf %15, %17 : vector<50x128xf32>
    %cst_15 = arith.constant 0.000000e+00 : f32
    %19 = vector.broadcast %cst_15 : f32 to vector<50x128xf32>
    %20 = arith.maximumf %18, %19 : vector<50x128xf32>
    %21 = arith.truncf %20 : vector<50x128xf32> to vector<50x128xbf16>
    %c0_16 = arith.constant 0 : index
    %c0_17 = arith.constant 0 : index
    %22 = vector.load %arg4[%c0_16, %c0_17] : memref<50x128xbf16, #tpu.memory_space<vmem>>, vector<50x128xbf16>
    tpu.vector_store %arg4[%c0_16, %c0_17], %21 {strides = array<i32>} : memref<50x128xbf16, #tpu.memory_space<vmem>>, vector<50x128xbf16>,
    return
  }
  func.func @transform_0(%arg0: i32) -> (i32, i32, i32) {
    %c0_i32 = arith.constant 0 : i32
    %c0_i32_0 = arith.constant 0 : i32
    %c0_i32_1 = arith.constant 0 : i32
    return %c0_i32, %arg0, %c0_i32_0 : i32, i32, i32
  }
  func.func @transform_1(%arg0: i32) -> (i32, i32) {
    %c0_i32 = arith.constant 0 : i32
    %c0_i32_0 = arith.constant 0 : i32
    %c0_i32_1 = arith.constant 0 : i32
    return %c0_i32, %c0_i32_0 : i32, i32
  }
  func.func @transform_2(%arg0: i32) -> (i32, i32) {
    %c0_i32 = arith.constant 0 : i32
    %c0_i32_0 = arith.constant 0 : i32
    %c0_i32_1 = arith.constant 0 : i32
    return %c0_i32, %c0_i32_0 : i32, i32
  }
  func.func @transform_3(%arg0: i32) -> (i32, i32) {
    %c0_i32 = arith.constant 0 : i32
    %c0_i32_0 = arith.constant 0 : i32
    return %arg0, %c0_i32 : i32, i32
  }
}

module attributes {stable_mosaic.version = 11 : i64} {
  func.func @_fc_chain_kernel(%arg0: i32, %arg1: memref<2x3200xbf16, #tpu.memory_space<vmem>>, %arg2: memref<3200x128xbf16, #tpu.memory_space<vmem>>, %arg3: memref<1x128xf32, #tpu.memory_space<vmem>>, %arg4: memref<128x128xbf16, #tpu.memory_space<vmem>>, %arg5: memref<1x128xf32, #tpu.memory_space<vmem>>, %arg6: memref<128x128xbf16, #tpu.memory_space<vmem>>, %arg7: memref<1x128xf32, #tpu.memory_space<vmem>>, %arg8: memref<2x128xf32, #tpu.memory_space<vmem>>) attributes {dimension_semantics = [#tpu.dimension_semantics<parallel>], iteration_bounds = array<i64: 1>, scalar_prefetch = 0 : i64, scratch_operands = 0 : i64, tpu.core_type = #tpu.core_type<tc>, window_params = [{transform_indices = @transform_0, window_bounds = array<i64: 2, 3200>}, {pipeline_mode = #tpu.pipeline_mode<synchronous>, transform_indices = @transform_1, window_bounds = array<i64: 3200, 128>}, {pipeline_mode = #tpu.pipeline_mode<synchronous>, transform_indices = @transform_2, window_bounds = array<i64: 1, 128>}, {pipeline_mode = #tpu.pipeline_mode<synchronous>, transform_indices = @transform_3, window_bounds = array<i64: 128, 128>}, {pipeline_mode = #tpu.pipeline_mode<synchronous>, transform_indices = @transform_4, window_bounds = array<i64: 1, 128>}, {pipeline_mode = #tpu.pipeline_mode<synchronous>, transform_indices = @transform_5, window_bounds = array<i64: 128, 128>}, {pipeline_mode = #tpu.pipeline_mode<synchronous>, transform_indices = @transform_6, window_bounds = array<i64: 1, 128>}, {transform_indices = @transform_7, window_bounds = array<i64: 2, 128>}]} {
    %c0 = arith.constant 0 : index
    %c0_0 = arith.constant 0 : index
    %0 = vector.load %arg1[%c0, %c0_0] : memref<2x3200xbf16, #tpu.memory_space<vmem>>, vector<2x3200xbf16>
    %c0_1 = arith.constant 0 : index
    %c0_2 = arith.constant 0 : index
    %1 = vector.load %arg2[%c0_1, %c0_2] : memref<3200x128xbf16, #tpu.memory_space<vmem>>, vector<3200x128xbf16>
    %cst = arith.constant dense<0.000000e+00> : vector<2x128xf32>
    %2 = tpu.matmul %0, %1, %cst {dimension_numbers = #tpu.dot_dimension_numbers<[1], [0], [0], [1], [0, 0, 1, 1], [], []>} : vector<2x3200xbf16>, vector<3200x128xbf16>, vector<2x128xf32> -> vector<2x128xf32>
    %c0_3 = arith.constant 0 : index
    %c0_4 = arith.constant 0 : index
    %3 = vector.load %arg3[%c0_3, %c0_4] : memref<1x128xf32, #tpu.memory_space<vmem>>, vector<1x128xf32>
    %4 = vector.broadcast %3 : vector<1x128xf32> to vector<2x128xf32>
    %5 = arith.addf %2, %4 : vector<2x128xf32>
    %cst_5 = arith.constant 0.000000e+00 : f32
    %6 = vector.broadcast %cst_5 : f32 to vector<2x128xf32>
    %7 = arith.maximumf %5, %6 : vector<2x128xf32>
    %8 = arith.truncf %7 : vector<2x128xf32> to vector<2x128xbf16>
    %c0_6 = arith.constant 0 : index
    %c0_7 = arith.constant 0 : index
    %9 = vector.load %arg4[%c0_6, %c0_7] : memref<128x128xbf16, #tpu.memory_space<vmem>>, vector<128x128xbf16>
    %cst_8 = arith.constant dense<0.000000e+00> : vector<2x128xf32>
    %10 = tpu.matmul %8, %9, %cst_8 {dimension_numbers = #tpu.dot_dimension_numbers<[1], [0], [0], [1], [0, 0, 1, 1], [], []>} : vector<2x128xbf16>, vector<128x128xbf16>, vector<2x128xf32> -> vector<2x128xf32>
    %c0_9 = arith.constant 0 : index
    %c0_10 = arith.constant 0 : index
    %11 = vector.load %arg5[%c0_9, %c0_10] : memref<1x128xf32, #tpu.memory_space<vmem>>, vector<1x128xf32>
    %12 = vector.broadcast %11 : vector<1x128xf32> to vector<2x128xf32>
    %13 = arith.addf %10, %12 : vector<2x128xf32>
    %cst_11 = arith.constant 0.000000e+00 : f32
    %14 = vector.broadcast %cst_11 : f32 to vector<2x128xf32>
    %15 = arith.maximumf %13, %14 : vector<2x128xf32>
    %16 = arith.truncf %15 : vector<2x128xf32> to vector<2x128xbf16>
    %c0_12 = arith.constant 0 : index
    %c0_13 = arith.constant 0 : index
    %17 = vector.load %arg6[%c0_12, %c0_13] : memref<128x128xbf16, #tpu.memory_space<vmem>>, vector<128x128xbf16>
    %cst_14 = arith.constant dense<0.000000e+00> : vector<2x128xf32>
    %18 = tpu.matmul %16, %17, %cst_14 {dimension_numbers = #tpu.dot_dimension_numbers<[1], [0], [0], [1], [0, 0, 1, 1], [], []>} : vector<2x128xbf16>, vector<128x128xbf16>, vector<2x128xf32> -> vector<2x128xf32>
    %c0_15 = arith.constant 0 : index
    %c0_16 = arith.constant 0 : index
    %19 = vector.load %arg7[%c0_15, %c0_16] : memref<1x128xf32, #tpu.memory_space<vmem>>, vector<1x128xf32>
    %20 = vector.broadcast %19 : vector<1x128xf32> to vector<2x128xf32>
    %21 = arith.addf %18, %20 : vector<2x128xf32>
    %c0_17 = arith.constant 0 : index
    %c0_18 = arith.constant 0 : index
    %22 = vector.load %arg8[%c0_17, %c0_18] : memref<2x128xf32, #tpu.memory_space<vmem>>, vector<2x128xf32>
    tpu.vector_store %arg8[%c0_17, %c0_18], %21 {strides = array<i32>} : memref<2x128xf32, #tpu.memory_space<vmem>>, vector<2x128xf32>,
    return
  }
  func.func @transform_0(%arg0: i32) -> (i32, i32) {
    %c0_i32 = arith.constant 0 : i32
    %c0_i32_0 = arith.constant 0 : i32
    return %arg0, %c0_i32 : i32, i32
  }
  func.func @transform_1(%arg0: i32) -> (i32, i32) {
    %c0_i32 = arith.constant 0 : i32
    %c0_i32_0 = arith.constant 0 : i32
    %c0_i32_1 = arith.constant 0 : i32
    return %c0_i32, %c0_i32_0 : i32, i32
  }
  func.func @transform_2(%arg0: i32) -> (i32, i32) {
    %c0_i32 = arith.constant 0 : i32
    %c0_i32_0 = arith.constant 0 : i32
    %c0_i32_1 = arith.constant 0 : i32
    return %c0_i32, %c0_i32_0 : i32, i32
  }
  func.func @transform_3(%arg0: i32) -> (i32, i32) {
    %c0_i32 = arith.constant 0 : i32
    %c0_i32_0 = arith.constant 0 : i32
    %c0_i32_1 = arith.constant 0 : i32
    return %c0_i32, %c0_i32_0 : i32, i32
  }
  func.func @transform_4(%arg0: i32) -> (i32, i32) {
    %c0_i32 = arith.constant 0 : i32
    %c0_i32_0 = arith.constant 0 : i32
    %c0_i32_1 = arith.constant 0 : i32
    return %c0_i32, %c0_i32_0 : i32, i32
  }
  func.func @transform_5(%arg0: i32) -> (i32, i32) {
    %c0_i32 = arith.constant 0 : i32
    %c0_i32_0 = arith.constant 0 : i32
    %c0_i32_1 = arith.constant 0 : i32
    return %c0_i32, %c0_i32_0 : i32, i32
  }
  func.func @transform_6(%arg0: i32) -> (i32, i32) {
    %c0_i32 = arith.constant 0 : i32
    %c0_i32_0 = arith.constant 0 : i32
    %c0_i32_1 = arith.constant 0 : i32
    return %c0_i32, %c0_i32_0 : i32, i32
  }
  func.func @transform_7(%arg0: i32) -> (i32, i32) {
    %c0_i32 = arith.constant 0 : i32
    %c0_i32_0 = arith.constant 0 : i32
    return %arg0, %c0_i32 : i32, i32
  }
}

</mosaic_0001>

<llo_original>
// kernel: _lambda_.3
$region0: #{_lambda_.3}
  #allocation0 [shape = 'u32[]', space=smem, size = 0x4, offset = 0x4, fixed_abs, tag = 'smem constant byte address 0x4 - core index']
  #allocation1 [shape = 'u32[144,128]{1,0:T(1,128)}', space=vmem, size = 0x12000, scoped, tag = 'internal scratch']
  %s0 = inlined_call_operand.vmem [shape: bf16[4,392,128], index: 0, kind: input, shape index: {}]
  %s1 = inlined_call_operand.vmem [shape: bf16[128,128], index: 1, kind: input, shape index: {}]
  %s2 = inlined_call_operand.vmem [shape: f32[1,128], index: 2, kind: input, shape index: {}]
  %s3 = inlined_call_operand.vmem [shape: bf16[392,128], index: 3, kind: output, shape index: {}]
  %s4 = sld [smem:[#allocation0]]
  $region22: #{_lambda_.3} parent=0
    _
  %s6 = ssub.s32 1, %s4
  %s7 = scalar_select 0, %s6, %s4
  // Predicated region
  $region2: #{_lambda_.3} parent=0 // pred_check
    _
  $region3: #{_lambda_.3} parent=0 // pred_check_branch
    %9 = sbr.rel (0) target = $region5
  $region4: #{_lambda_.3} parent=0 // pred_region
    _
  $region5: #{_lambda_.3} parent=0 // pred_fallthru
    _
  // Predicated region
  $region6: #{_lambda_.3} parent=0 // pred_check
    _
  $region7: #{_lambda_.3} parent=0 // pred_check_branch
    %11 = sbr.rel (0) target = $region9
  $region8: #{_lambda_.3} parent=0 // pred_region
    _
  $region9: #{_lambda_.3} parent=0 // pred_fallthru
    _
  // Predicated region
  $region10: #{_lambda_.3} parent=0 // pred_check
    _
  $region11: #{_lambda_.3} parent=0 // pred_check_branch
    %13 = sbr.rel (0) target = $region13
  $region12: #{_lambda_.3} parent=0 // pred_region
    _
  $region13: #{_lambda_.3} parent=0 // pred_fallthru
    _
  %v15 = vld [vmem:[%s1] sm:$0xf]
  %v16 = vld [vmem:[%s1 + $0x4] sm:$0xf]
  %v17 = vld [vmem:[%s1 + $0x8] sm:$0xf]
  %v18 = vld [vmem:[%s1 + $0xc] sm:$0xf]
  %v19 = vld [vmem:[%s1 + $0x10] sm:$0xf]
  %v20 = vld [vmem:[%s1 + $0x14] sm:$0xf]
  %v21 = vld [vmem:[%s1 + $0x18] sm:$0xf]
  %v22 = vld [vmem:[%s1 + $0x1c] sm:$0xf]
  %v23 = vld [vmem:[%s1 + $0x20] sm:$0xf]
  %v24 = vld [vmem:[%s1 + $0x24] sm:$0xf]
  %v25 = vld [vmem:[%s1 + $0x28] sm:$0xf]
  %v26 = vld [vmem:[%s1 + $0x2c] sm:$0xf]
  %v27 = vld [vmem:[%s1 + $0x30] sm:$0xf]
  %v28 = vld [vmem:[%s1 + $0x34] sm:$0xf]
  %v29 = vld [vmem:[%s1 + $0x38] sm:$0xf]
  %v30 = vld [vmem:[%s1 + $0x3c] sm:$0xf]
  %v31 = vld [vmem:[%s0] sm:$0xf]
  %v32 = vld [vmem:[%s0 + $0x4] sm:$0xf]
  %v33 = vld [vmem:[%s0 + $0x8] sm:$0xf]
  %v34 = vld [vmem:[%s0 + $0xc] sm:$0xf]
  %v35 = vld [vmem:[%s0 + $0x10] sm:$0xf]
  %v36 = vld [vmem:[%s0 + $0x14] sm:$0xf]
  %v37 = vld [vmem:[%s0 + $0x18] sm:$0xf]
  %v38 = vld [vmem:[%s0 + $0x1c] sm:$0xf]
  %v39 = vld [vmem:[%s0 + $0x20] sm:$0xf]
  %v40 = vld [vmem:[%s0 + $0x24] sm:$0xf]
  %v41 = vld [vmem:[%s0 + $0x28] sm:$0xf]
  %v42 = vld [vmem:[%s0 + $0x2c] sm:$0xf]
  %v43 = vld [vmem:[%s0 + $0x30] sm:$0xf]
  %v44 = vld [vmem:[%s0 + $0x34] sm:$0xf]
  %v45 = vld [vmem:[%s0 + $0x38] sm:$0xf]
  %v46 = vld [vmem:[%s0 + $0x3c] sm:$0xf]
  %v47 = vld [vmem:[%s0 + $0x40] sm:$0xf]
  %v48 = vld [vmem:[%s0 + $0x44] sm:$0xf]
  %v49 = vld [vmem:[%s0 + $0x48] sm:$0xf]
  %v50 = vld [vmem:[%s0 + $0x4c] sm:$0xf]
  %v51 = vld [vmem:[%s0 + $0x50] sm:$0xf]
  %v52 = vld [vmem:[%s0 + $0x54] sm:$0xf]
  %v53 = vld [vmem:[%s0 + $0x58] sm:$0xf]
  %v54 = vld [vmem:[%s0 + $0x5c] sm:$0xf]
  %v55 = vld [vmem:[%s0 + $0x60] sm:$0xf]
  %v56 = vld [vmem:[%s0 + $0x64] sm:$0xf]
  %v57 = vld [vmem:[%s0 + $0x68] sm:$0xf]
  %v58 = vld [vmem:[%s0 + $0x6c] sm:$0xf]
  %v59 = vld [vmem:[%s0 + $0x70] sm:$0xf]
  %v60 = vld [vmem:[%s0 + $0x74] sm:$0xf]
  %v61 = vld [vmem:[%s0 + $0x78] sm:$0xf]
  %v62 = vld [vmem:[%s0 + $0x7c] sm:$0xf]
  %v63 = vld [vmem:[%s0 + $0x80] sm:$0xf]
  %v64 = vld [vmem:[%s0 + $0x84] sm:$0xf]
  %v65 = vld [vmem:[%s0 + $0x88] sm:$0xf]
  %v66 = vld [vmem:[%s0 + $0x8c] sm:$0xf]
  %v67 = vld [vmem:[%s0 + $0x90] sm:$0xf]
  %v68 = vld [vmem:[%s0 + $0x94] sm:$0xf]
  %v69 = vld [vmem:[%s0 + $0x98] sm:$0xf]
  %v70 = vld [vmem:[%s0 + $0x9c] sm:$0xf]
  %v71 = vld [vmem:[%s0 + $0xa0] sm:$0xf]
  %v72 = vld [vmem:[%s0 + $0xa4] sm:$0xf]
  %v73 = vld [vmem:[%s0 + $0xa8] sm:$0xf]
  %v74 = vld [vmem:[%s0 + $0xac] sm:$0xf]
  %v75 = vld [vmem:[%s0 + $0xb0] sm:$0xf]
  %v76 = vld [vmem:[%s0 + $0xb4] sm:$0xf]
  %v77 = vld [vmem:[%s0 + $0xb8] sm:$0xf]
  %v78 = vld [vmem:[%s0 + $0xbc] sm:$0xf]
  %v79 = vld [vmem:[%s0 + $0xc0] sm:$0xf]
  %v129 = vunpack.c.l.b16 %v31
  %v130 = vunpack.c.l.b16 %v32
  %v131 = vunpack.c.l.b16 %v33
  %v132 = vunpack.c.l.b16 %v34
  %v133 = vunpack.c.l.b16 %v35
  %v134 = vunpack.c.l.b16 %v36
  %v135 = vunpack.c.l.b16 %v37
  %v136 = vunpack.c.l.b16 %v38
  %v137 = vunpack.c.l.b16 %v39
  %v138 = vunpack.c.l.b16 %v40
  %v139 = vunpack.c.l.b16 %v41
  %v140 = vunpack.c.l.b16 %v42
  %v141 = vunpack.c.l.b16 %v43
  %v142 = vunpack.c.l.b16 %v44
  %v143 = vunpack.c.l.b16 %v45
  %v144 = vunpack.c.l.b16 %v46
  %v145 = vunpack.c.l.b16 %v47
  %v146 = vunpack.c.l.b16 %v48
  %v147 = vunpack.c.l.b16 %v49
  %v148 = vunpack.c.l.b16 %v50
  %v149 = vunpack.c.l.b16 %v51
  %v150 = vunpack.c.l.b16 %v52
  %v151 = vunpack.c.l.b16 %v53
  %v152 = vunpack.c.l.b16 %v54
  %v153 = vunpack.c.l.b16 %v55
  %v154 = vunpack.c.l.b16 %v56
  %v155 = vunpack.c.l.b16 %v57
  %v156 = vunpack.c.l.b16 %v58
  %v157 = vunpack.c.l.b16 %v59
  %v158 = vunpack.c.l.b16 %v60
  %v159 = vunpack.c.l.b16 %v61
  %v160 = vunpack.c.l.b16 %v62
  %v161 = vunpack.c.l.b16 %v63
  %v162 = vunpack.c.l.b16 %v64
  %v163 = vunpack.c.l.b16 %v65
  %v164 = vunpack.c.l.b16 %v66
  %v165 = vunpack.c.l.b16 %v67
  %v166 = vunpack.c.l.b16 %v68
  %v167 = vunpack.c.l.b16 %v69
  %v168 = vunpack.c.l.b16 %v70
  %v169 = vunpack.c.l.b16 %v71
  %v170 = vunpack.c.l.b16 %v72
  %v171 = vunpack.c.l.b16 %v73
  %v172 = vunpack.c.l.b16 %v74
  %v173 = vunpack.c.l.b16 %v75
  %v174 = vunpack.c.l.b16 %v76
  %v175 = vunpack.c.l.b16 %v77
  %v176 = vunpack.c.l.b16 %v78
  %v177 = vunpack.c.l.b16 %v79
  %v178 = vpack.c.b16 %v130, %v129
  %v179 = vpack.c.b16 %v132, %v131
  %v180 = vpack.c.b16 %v134, %v133
  %v181 = vpack.c.b16 %v136, %v135
  %v182 = vpack.c.b16 %v138, %v137
  %v183 = vpack.c.b16 %v140, %v139
  %v184 = vpack.c.b16 %v142, %v141
  %v185 = vpack.c.b16 %v144, %v143
  %v186 = vpack.c.b16 %v146, %v145
  %v187 = vpack.c.b16 %v148, %v147
  %v188 = vpack.c.b16 %v150, %v149
  %v189 = vpack.c.b16 %v152, %v151
  %v190 = vpack.c.b16 %v154, %v153
  %v191 = vpack.c.b16 %v156, %v155
  %v192 = vpack.c.b16 %v158, %v157
  %v193 = vpack.c.b16 %v160, %v159
  %v194 = vpack.c.b16 %v162, %v161
  %v195 = vpack.c.b16 %v164, %v163
  %v196 = vpack.c.b16 %v166, %v165
  %v197 = vpack.c.b16 %v168, %v167
  %v198 = vpack.c.b16 %v170, %v169
  %v199 = vpack.c.b16 %v172, %v171
  %v200 = vpack.c.b16 %v174, %v173
  %v201 = vpack.c.b16 %v176, %v175
  %v202 = vpack.c.b16 %v177, %v177
  %v244 = vunpack.c.l.b16 %v15
  %v245 = vunpack.c.l.b16 %v16
  %v246 = vunpack.c.l.b16 %v17
  %v247 = vunpack.c.l.b16 %v18
  %v248 = vunpack.c.l.b16 %v19
  %v249 = vunpack.c.l.b16 %v20
  %v250 = vunpack.c.l.b16 %v21
  %v251 = vunpack.c.l.b16 %v22
  %v252 = vunpack.c.l.b16 %v23
  %v253 = vunpack.c.l.b16 %v24
  %v254 = vunpack.c.l.b16 %v25
  %v255 = vunpack.c.l.b16 %v26
  %v256 = vunpack.c.l.b16 %v27
  %v257 = vunpack.c.l.b16 %v28
  %v258 = vunpack.c.l.b16 %v29
  %v259 = vunpack.c.l.b16 %v30
  %v260 = vpack.c.b16 %v245, %v244
  %v261 = vpack.c.b16 %v247, %v246
  %v262 = vpack.c.b16 %v249, %v248
  %v263 = vpack.c.b16 %v251, %v250
  %v264 = vpack.c.b16 %v253, %v252
  %v265 = vpack.c.b16 %v255, %v254
  %v266 = vpack.c.b16 %v257, %v256
  %v267 = vpack.c.b16 %v259, %v258
  %276 = vmatprep.subr.bf16.mxu0 0
  %277 = vmatpush1.bf16.msra.mxu0 %v260
  %278 = vmatprep.subr.bf16.mxu0 0
  %279 = vmatpush1.bf16.msra.mxu0 %v261
  %280 = vmatprep.subr.bf16.mxu0 0
  %281 = vmatpush1.bf16.msra.mxu0 %v262
  %282 = vmatprep.subr.bf16.mxu0 0
  %283 = vmatpush1.bf16.msra.mxu0 %v263
  %284 = vmatprep.subr.bf16.mxu0 0
  %285 = vmatpush1.bf16.msra.mxu0 %v264
  %286 = vmatprep.subr.bf16.mxu0 0
  %287 = vmatpush1.bf16.msra.mxu0 %v265
  %288 = vmatprep.subr.bf16.mxu0 0
  %289 = vmatpush1.bf16.msra.mxu0 %v266
  %290 = vmatprep.subr.bf16.mxu0 0
  %291 = vmatpush1.bf16.msra.mxu0 %v267
  %292 = vmatprep.subr.bf16.mxu0 0
  %293 = vmatpush1.bf16.msra.mxu0 0
  %294 = vmatprep.subr.bf16.mxu0 0
  %295 = vmatpush1.bf16.msra.mxu0 0
  %296 = vmatprep.subr.bf16.mxu0 0
  %297 = vmatpush1.bf16.msra.mxu0 0
  %298 = vmatprep.subr.bf16.mxu0 0
  %299 = vmatpush1.bf16.msra.mxu0 0
  %300 = vmatprep.subr.bf16.mxu0 0
  %301 = vmatpush1.bf16.msra.mxu0 0
  %302 = vmatprep.subr.bf16.mxu0 0
  %303 = vmatpush1.bf16.msra.mxu0 0
  %304 = vmatprep.subr.bf16.mxu0 0
  %305 = vmatpush1.bf16.msra.mxu0 0
  %306 = vmatprep.subr.bf16.mxu0 0
  %307 = vmatpush1.bf16.msra.mxu0 0
  %308 = vmatprep.mubr.bf16.mxu0 0
  %309 = vmatmul.mubr.bf16.gmra.mrb[0].mxu0 %v178
  %v310 = vpop.f32.mrb[0].mxu0
  %v311 = vadd.f32 0.0, %v310
  %v312 = vpop.f32.mrb[0].mxu0
  %v313 = vpop.f32.mrb[0].mxu0
  %v314 = vadd.f32 0.0, %v313
  %v315 = vpop.f32.mrb[0].mxu0
  %316 = vmatprep.mubr.bf16.mxu0 0
  %317 = vmatmul.mubr.bf16.gmra.mrb[0].mxu0 %v179
  %v318 = vpop.f32.mrb[0].mxu0
  %v319 = vadd.f32 0.0, %v318
  %v320 = vpop.f32.mrb[0].mxu0
  %v321 = vpop.f32.mrb[0].mxu0
  %v322 = vadd.f32 0.0, %v321
  %v323 = vpop.f32.mrb[0].mxu0
  %324 = vmatprep.mubr.bf16.mxu0 0
  %325 = vmatmul.mubr.bf16.gmra.mrb[0].mxu0 %v180
  %v326 = vpop.f32.mrb[0].mxu0
  %v327 = vadd.f32 0.0, %v326
  %v328 = vpop.f32.mrb[0].mxu0
  %v329 = vpop.f32.mrb[0].mxu0
  %v330 = vadd.f32 0.0, %v329
  %v331 = vpop.f32.mrb[0].mxu0
  %332 = vmatprep.mubr.bf16.mxu0 0
  %333 = vmatmul.mubr.bf16.gmra.mrb[0].mxu0 %v181
  %v334 = vpop.f32.mrb[0].mxu0
  %v335 = vadd.f32 0.0, %v334
  %v336 = vpop.f32.mrb[0].mxu0
  %v337 = vpop.f32.mrb[0].mxu0
  %v338 = vadd.f32 0.0, %v337
  %v339 = vpop.f32.mrb[0].mxu0
  %340 = vmatprep.mubr.bf16.mxu0 0
  %341 = vmatmul.mubr.bf16.gmra.mrb[0].mxu0 %v182
  %v342 = vpop.f32.mrb[0].mxu0
  %v343 = vadd.f32 0.0, %v342
  %v344 = vpop.f32.mrb[0].mxu0
  %v345 = vpop.f32.mrb[0].mxu0
  %v346 = vadd.f32 0.0, %v345
  %v347 = vpop.f32.mrb[0].mxu0
  %348 = vmatprep.mubr.bf16.mxu0 0
  %349 = vmatmul.mubr.bf16.gmra.mrb[0].mxu0 %v183
  %v350 = vpop.f32.mrb[0].mxu0
  %v351 = vadd.f32 0.0, %v350
  %v352 = vpop.f32.mrb[0].mxu0
  %v353 = vpop.f32.mrb[0].mxu0
  %v354 = vadd.f32 0.0, %v353
  %v355 = vpop.f32.mrb[0].mxu0
  %356 = vmatprep.mubr.bf16.mxu0 0
  %357 = vmatmul.mubr.bf16.gmra.mrb[0].mxu0 %v184
  %v358 = vpop.f32.mrb[0].mxu0
  %v359 = vadd.f32 0.0, %v358
  %v360 = vpop.f32.mrb[0].mxu0
  %v361 = vpop.f32.mrb[0].mxu0
  %v362 = vadd.f32 0.0, %v361
  %v363 = vpop.f32.mrb[0].mxu0
  %364 = vmatprep.mubr.bf16.mxu0 0
  %365 = vmatmul.mubr.bf16.gmra.mrb[0].mxu0 %v185
  %v366 = vpop.f32.mrb[0].mxu0
  %v367 = vadd.f32 0.0, %v366
  %v368 = vpop.f32.mrb[0].mxu0
  %v369 = vpop.f32.mrb[0].mxu0
  %v370 = vadd.f32 0.0, %v369
  %v371 = vpop.f32.mrb[0].mxu0
  %372 = vmatprep.mubr.bf16.mxu0 0
  %373 = vmatmul.mubr.bf16.gmra.mrb[0].mxu0 %v186
  %v374 = vpop.f32.mrb[0].mxu0
  %v375 = vadd.f32 0.0, %v374
  %v376 = vpop.f32.mrb[0].mxu0
  %v377 = vpop.f32.mrb[0].mxu0
  %v378 = vadd.f32 0.0, %v377
  %v379 = vpop.f32.mrb[0].mxu0
  %380 = vmatprep.mubr.bf16.mxu0 0
  %381 = vmatmul.mubr.bf16.gmra.mrb[0].mxu0 %v187
  %v382 = vpop.f32.mrb[0].mxu0
  %v383 = vadd.f32 0.0, %v382
  %v384 = vpop.f32.mrb[0].mxu0
  %v385 = vpop.f32.mrb[0].mxu0
  %v386 = vadd.f32 0.0, %v385
  %v387 = vpop.f32.mrb[0].mxu0
  %388 = vmatprep.mubr.bf16.mxu0 0
  %389 = vmatmul.mubr.bf16.gmra.mrb[0].mxu0 %v188
  %v390 = vpop.f32.mrb[0].mxu0
  %v391 = vadd.f32 0.0, %v390
  %v392 = vpop.f32.mrb[0].mxu0
  %v393 = vpop.f32.mrb[0].mxu0
  %v394 = vadd.f32 0.0, %v393
  %v395 = vpop.f32.mrb[0].mxu0
  %396 = vmatprep.mubr.bf16.mxu0 0
  %397 = vmatmul.mubr.bf16.gmra.mrb[0].mxu0 %v189
  %v398 = vpop.f32.mrb[0].mxu0
  %v399 = vadd.f32 0.0, %v398
  %v400 = vpop.f32.mrb[0].mxu0
  %v401 = vpop.f32.mrb[0].mxu0
  %v402 = vadd.f32 0.0, %v401
  %v403 = vpop.f32.mrb[0].mxu0
  %404 = vmatprep.mubr.bf16.mxu0 0
  %405 = vmatmul.mubr.bf16.gmra.mrb[0].mxu0 %v190
  %v406 = vpop.f32.mrb[0].mxu0
  %v407 = vadd.f32 0.0, %v406
  %v408 = vpop.f32.mrb[0].mxu0
  %v409 = vpop.f32.mrb[0].mxu0
  %v410 = vadd.f32 0.0, %v409
  %v411 = vpop.f32.mrb[0].mxu0
  %412 = vmatprep.mubr.bf16.mxu0 0
  %413 = vmatmul.mubr.bf16.gmra.mrb[0].mxu0 %v191
  %v414 = vpop.f32.mrb[0].mxu0
  %v415 = vadd.f32 0.0, %v414
  %v416 = vpop.f32.mrb[0].mxu0
  %v417 = vpop.f32.mrb[0].mxu0
  %v418 = vadd.f32 0.0, %v417
  %v419 = vpop.f32.mrb[0].mxu0
  %420 = vmatprep.mubr.bf16.mxu0 0
  %421 = vmatmul.mubr.bf16.gmra.mrb[0].mxu0 %v192
  %v422 = vpop.f32.mrb[0].mxu0
  %v423 = vadd.f32 0.0, %v422
  %v424 = vpop.f32.mrb[0].mxu0
  %v425 = vpop.f32.mrb[0].mxu0
  %v426 = vadd.f32 0.0, %v425
  %v427 = vpop.f32.mrb[0].mxu0
  %428 = vmatprep.mubr.bf16.mxu0 0
  %429 = vmatmul.mubr.bf16.gmra.mrb[0].mxu0 %v193
  %v430 = vpop.f32.mrb[0].mxu0
  %v431 = vadd.f32 0.0, %v430
  %v432 = vpop.f32.mrb[0].mxu0
  %v433 = vpop.f32.mrb[0].mxu0
  %v434 = vadd.f32 0.0, %v433
  %v435 = vpop.f32.mrb[0].mxu0
  %436 = vmatprep.mubr.bf16.mxu0 0
  %437 = vmatmul.mubr.bf16.gmra.mrb[0].mxu0 %v194
  %v438 = vpop.f32.mrb[0].mxu0
  %v439 = vadd.f32 0.0, %v438
  %v440 = vpop.f32.mrb[0].mxu0
  %v441 = vpop.f32.mrb[0].mxu0
  %v442 = vadd.f32 0.0, %v441
  %v443 = vpop.f32.mrb[0].mxu0
  %444 = vmatprep.mubr.bf16.mxu0 0
  %445 = vmatmul.mubr.bf16.gmra.mrb[0].mxu0 %v195
  %v446 = vpop.f32.mrb[0].mxu0
  %v447 = vadd.f32 0.0, %v446
  %v448 = vpop.f32.mrb[0].mxu0
  %v449 = vpop.f32.mrb[0].mxu0
  %v450 = vadd.f32 0.0, %v449
  %v451 = vpop.f32.mrb[0].mxu0
  %452 = vmatprep.mubr.bf16.mxu0 0
  %453 = vmatmul.mubr.bf16.gmra.mrb[0].mxu0 %v196
  %v454 = vpop.f32.mrb[0].mxu0
  %v455 = vadd.f32 0.0, %v454
  %v456 = vpop.f32.mrb[0].mxu0
  %v457 = vpop.f32.mrb[0].mxu0
  %v458 = vadd.f32 0.0, %v457
  %v459 = vpop.f32.mrb[0].mxu0
  %460 = vmatprep.mubr.bf16.mxu0 0
  %461 = vmatmul.mubr.bf16.gmra.mrb[0].mxu0 %v197
  %v462 = vpop.f32.mrb[0].mxu0
  %v463 = vadd.f32 0.0, %v462
  %v464 = vpop.f32.mrb[0].mxu0
  %v465 = vpop.f32.mrb[0].mxu0
  %v466 = vadd.f32 0.0, %v465
  %v467 = vpop.f32.mrb[0].mxu0
  %468 = vmatprep.mubr.bf16.mxu0 0
  %469 = vmatmul.mubr.bf16.gmra.mrb[0].mxu0 %v198
  %v470 = vpop.f32.mrb[0].mxu0
  %v471 = vadd.f32 0.0, %v470
  %v472 = vpop.f32.mrb[0].mxu0
  %v473 = vpop.f32.mrb[0].mxu0
  %v474 = vadd.f32 0.0, %v473
  %v475 = vpop.f32.mrb[0].mxu0
  %476 = vmatprep.mubr.bf16.mxu0 0
  %477 = vmatmul.mubr.bf16.gmra.mrb[0].mxu0 %v199
  %v478 = vpop.f32.mrb[0].mxu0
  %v479 = vadd.f32 0.0, %v478
  %v480 = vpop.f32.mrb[0].mxu0
  %v481 = vpop.f32.mrb[0].mxu0
  %v482 = vadd.f32 0.0, %v481
  %v483 = vpop.f32.mrb[0].mxu0
  %484 = vmatprep.mubr.bf16.mxu0 0
  %485 = vmatmul.mubr.bf16.gmra.mrb[0].mxu0 %v200
  %v486 = vpop.f32.mrb[0].mxu0
  %v487 = vadd.f32 0.0, %v486
  %v488 = vpop.f32.mrb[0].mxu0
  %v489 = vpop.f32.mrb[0].mxu0
  %v490 = vadd.f32 0.0, %v489
  %v491 = vpop.f32.mrb[0].mxu0
  %492 = vmatprep.mubr.bf16.mxu0 0
  %493 = vmatmul.mubr.bf16.gmra.mrb[0].mxu0 %v201
  %v494 = vpop.f32.mrb[0].mxu0
  %v495 = vadd.f32 0.0, %v494
  %v496 = vpop.f32.mrb[0].mxu0
  %v497 = vpop.f32.mrb[0].mxu0
  %v498 = vadd.f32 0.0, %v497
  %v499 = vpop.f32.mrb[0].mxu0
  %500 = vmatprep.mubr.bf16.mxu0 0
  %501 = vmatmul.mubr.bf16.gmra.mrb[0].mxu0 %v202
  %v502 = vpop.f32.mrb[0].mxu0
  %v503 = vadd.f32 0.0, %v502
  %v504 = vpop.f32.mrb[0].mxu0
  %v505 = vpop.f32.mrb[0].mxu0
  %v506 = vpop.f32.mrb[0].mxu0
  %507 = vdwg.mxu0
  %s508 = scalar_lea.vmem %s0, 196
  %v509 = vld [vmem:[%s508] sm:$0xf]
  %v510 = vld [vmem:[%s508 + $0x4] sm:$0xf]
  %v511 = vld [vmem:[%s508 + $0x8] sm:$0xf]
  %v512 = vld [vmem:[%s508 + $0xc] sm:$0xf]
  %v513 = vld [vmem:[%s508 + $0x10] sm:$0xf]
  %v514 = vld [vmem:[%s508 + $0x14] sm:$0xf]
  %v515 = vld [vmem:[%s508 + $0x18] sm:$0xf]
  %v516 = vld [vmem:[%s508 + $0x1c] sm:$0xf]
  %v517 = vld [vmem:[%s508 + $0x20] sm:$0xf]
  %v518 = vld [vmem:[%s508 + $0x24] sm:$0xf]
  %v519 = vld [vmem:[%s508 + $0x28] sm:$0xf]
  %v520 = vld [vmem:[%s508 + $0x2c] sm:$0xf]
  %v521 = vld [vmem:[%s508 + $0x30] sm:$0xf]
  %v522 = vld [vmem:[%s508 + $0x34] sm:$0xf]
  %v523 = vld [vmem:[%s508 + $0x38] sm:$0xf]
  %v524 = vld [vmem:[%s508 + $0x3c] sm:$0xf]
  %v525 = vld [vmem:[%s508 + $0x40] sm:$0xf]
  %v526 = vld [vmem:[%s508 + $0x44] sm:$0xf]
  %v527 = vld [vmem:[%s508 + $0x48] sm:$0xf]
  %v528 = vld [vmem:[%s508 + $0x4c] sm:$0xf]
  %v529 = vld [vmem:[%s508 + $0x50] sm:$0xf]
  %v530 = vld [vmem:[%s508 + $0x54] sm:$0xf]
  %v531 = vld [vmem:[%s508 + $0x58] sm:$0xf]
  %v532 = vld [vmem:[%s508 + $0x5c] sm:$0xf]
  %v533 = vld [vmem:[%s508 + $0x60] sm:$0xf]
  %v534 = vld [vmem:[%s508 + $0x64] sm:$0xf]
  %v535 = vld [vmem:[%s508 + $0x68] sm:$0xf]
  %v536 = vld [vmem:[%s508 + $0x6c] sm:$0xf]
  %v537 = vld [vmem:[%s508 + $0x70] sm:$0xf]
  %v538 = vld [vmem:[%s508 + $0x74] sm:$0xf]
  %v539 = vld [vmem:[%s508 + $0x78] sm:$0xf]
  %v540 = vld [vmem:[%s508 + $0x7c] sm:$0xf]
  %v541 = vld [vmem:[%s508 + $0x80] sm:$0xf]
  %v542 = vld [vmem:[%s508 + $0x84] sm:$0xf]
  %v543 = vld [vmem:[%s508 + $0x88] sm:$0xf]
  %v544 = vld [vmem:[%s508 + $0x8c] sm:$0xf]
  %v545 = vld [vmem:[%s508 + $0x90] sm:$0xf]
  %v546 = vld [vmem:[%s508 + $0x94] sm:$0xf]
  %v547 = vld [vmem:[%s508 + $0x98] sm:$0xf]
  %v548 = vld [vmem:[%s508 + $0x9c] sm:$0xf]
  %v549 = vld [vmem:[%s508 + $0xa0] sm:$0xf]
  %v550 = vld [vmem:[%s508 + $0xa4] sm:$0xf]
  %v551 = vld [vmem:[%s508 + $0xa8] sm:$0xf]
  %v552 = vld [vmem:[%s508 + $0xac] sm:$0xf]
  %v553 = vld [vmem:[%s508 + $0xb0] sm:$0xf]
  %v554 = vld [vmem:[%s508 + $0xb4] sm:$0xf]
  %v555 = vld [vmem:[%s508 + $0xb8] sm:$0xf]
  %v556 = vld [vmem:[%s508 + $0xbc] sm:$0xf]
  %v557 = vld [vmem:[%s508 + $0xc0] sm:$0xf]
  %v607 = vunpack.c.l.b16 %v509
  %v608 = vunpack.c.l.b16 %v510
  %v609 = vunpack.c.l.b16 %v511
  %v610 = vunpack.c.l.b16 %v512
  %v611 = vunpack.c.l.b16 %v513
  %v612 = vunpack.c.l.b16 %v514
  %v613 = vunpack.c.l.b16 %v515
  %v614 = vunpack.c.l.b16 %v516
  %v615 = vunpack.c.l.b16 %v517
  %v616 = vunpack.c.l.b16 %v518
  %v617 = vunpack.c.l.b16 %v519
  %v618 = vunpack.c.l.b16 %v520
  %v619 = vunpack.c.l.b16 %v521
  %v620 = vunpack.c.l.b16 %v522
  %v621 = vunpack.c.l.b16 %v523
  %v622 = vunpack.c.l.b16 %v524
  %v623 = vunpack.c.l.b16 %v525
  %v624 = vunpack.c.l.b16 %v526
  %v625 = vunpack.c.l.b16 %v527
  %v626 = vunpack.c.l.b16 %v528
  %v627 = vunpack.c.l.b16 %v529
  %v628 = vunpack.c.l.b16 %v530
  %v629 = vunpack.c.l.b16 %v531
  %v630 = vunpack.c.l.b16 %v532
  %v631 = vunpack.c.l.b16 %v533
  %v632 = vunpack.c.l.b16 %v534
  %v633 = vunpack.c.l.b16 %v535
  %v634 = vunpack.c.l.b16 %v536
  %v635 = vunpack.c.l.b16 %v537
  %v636 = vunpack.c.l.b16 %v538
  %v637 = vunpack.c.l.b16 %v539
  %v638 = vunpack.c.l.b16 %v540
  %v639 = vunpack.c.l.b16 %v541
  %v640 = vunpack.c.l.b16 %v542
  %v641 = vunpack.c.l.b16 %v543
  %v642 = vunpack.c.l.b16 %v544
  %v643 = vunpack.c.l.b16 %v545
  %v644 = vunpack.c.l.b16 %v546
  %v645 = vunpack.c.l.b16 %v547
  %v646 = vunpack.c.l.b16 %v548
  %v647 = vunpack.c.l.b16 %v549
  %v648 = vunpack.c.l.b16 %v550
  %v649 = vunpack.c.l.b16 %v551
  %v650 = vunpack.c.l.b16 %v552
  %v651 = vunpack.c.l.b16 %v553
  %v652 = vunpack.c.l.b16 %v554
  %v653 = vunpack.c.l.b16 %v555
  %v654 = vunpack.c.l.b16 %v556
  %v655 = vunpack.c.l.b16 %v557
  %v656 = vpack.c.b16 %v608, %v607
  %v657 = vpack.c.b16 %v610, %v609
  %v658 = vpack.c.b16 %v612, %v611
  %v659 = vpack.c.b16 %v614, %v613
  %v660 = vpack.c.b16 %v616, %v615
  %v661 = vpack.c.b16 %v618, %v617
  %v662 = vpack.c.b16 %v620, %v619
  %v663 = vpack.c.b16 %v622, %v621
  %v664 = vpack.c.b16 %v624, %v623
  %v665 = vpack.c.b16 %v626, %v625
  %v666 = vpack.c.b16 %v628, %v627
  %v667 = vpack.c.b16 %v630, %v629
  %v668 = vpack.c.b16 %v632, %v631
  %v669 = vpack.c.b16 %v634, %v633
  %v670 = vpack.c.b16 %v636, %v635
  %v671 = vpack.c.b16 %v638, %v637
  %v672 = vpack.c.b16 %v640, %v639
  %v673 = vpack.c.b16 %v642, %v641
  %v674 = vpack.c.b16 %v644, %v643
  %v675 = vpack.c.b16 %v646, %v645
  %v676 = vpack.c.b16 %v648, %v647
  %v677 = vpack.c.b16 %v650, %v649
  %v678 = vpack.c.b16 %v652, %v651
  %v679 = vpack.c.b16 %v654, %v653
  %v680 = vpack.c.b16 %v655, %v655
  %706 = vmatprep.subr.bf16.mxu0 0
  %707 = vmatpush1.bf16.msra.mxu0 %v260
  %708 = vmatprep.subr.bf16.mxu0 0
  %709 = vmatpush1.bf16.msra.mxu0 %v261
  %710 = vmatprep.subr.bf16.mxu0 0
  %711 = vmatpush1.bf16.msra.mxu0 %v262
  %712 = vmatprep.subr.bf16.mxu0 0
  %713 = vmatpush1.bf16.msra.mxu0 %v263
  %714 = vmatprep.subr.bf16.mxu0 0
  %715 = vmatpush1.bf16.msra.mxu0 %v264
  %716 = vmatprep.subr.bf16.mxu0 0
  %717 = vmatpush1.bf16.msra.mxu0 %v265
  %718 = vmatprep.subr.bf16.mxu0 0
  %719 = vmatpush1.bf16.msra.mxu0 %v266
  %720 = vmatprep.subr.bf16.mxu0 0
  %721 = vmatpush1.bf16.msra.mxu0 %v267
  %722 = vmatprep.subr.bf16.mxu0 0
  %723 = vmatpush1.bf16.msra.mxu0 0
  %724 = vmatprep.subr.bf16.mxu0 0
  %725 = vmatpush1.bf16.msra.mxu0 0
  %726 = vmatprep.subr.bf16.mxu0 0
  %727 = vmatpush1.bf16.msra.mxu0 0
  %728 = vmatprep.subr.bf16.mxu0 0
  %729 = vmatpush1.bf16.msra.mxu0 0
  %730 = vmatprep.subr.bf16.mxu0 0
  %731 = vmatpush1.bf16.msra.mxu0 0
  %732 = vmatprep.subr.bf16.mxu0 0
  %733 = vmatpush1.bf16.msra.mxu0 0
  %734 = vmatprep.subr.bf16.mxu0 0
  %735 = vmatpush1.bf16.msra.mxu0 0
  %736 = vmatprep.subr.bf16.mxu0 0
  %737 = vmatpush1.bf16.msra.mxu0 0
  %738 = vmatprep.mubr.bf16.mxu0 0
  %739 = vmatmul.mubr.bf16.gmra.mrb[0].mxu0 %v656
  %v740 = vpop.f32.mrb[0].mxu0
  %v741 = vadd.f32 0.0, %v740
  %v742 = vpop.f32.mrb[0].mxu0
  %v743 = vpop.f32.mrb[0].mxu0
  %v744 = vadd.f32 0.0, %v743
  %v745 = vpop.f32.mrb[0].mxu0
  %746 = vmatprep.mubr.bf16.mxu0 0
  %747 = vmatmul.mubr.bf16.gmra.mrb[0].mxu0 %v657
  %v748 = vpop.f32.mrb[0].mxu0
  %v749 = vadd.f32 0.0, %v748
  %v750 = vpop.f32.mrb[0].mxu0
  %v751 = vpop.f32.mrb[0].mxu0
  %v752 = vadd.f32 0.0, %v751
  %v753 = vpop.f32.mrb[0].mxu0
  %754 = vmatprep.mubr.bf16.mxu0 0
  %755 = vmatmul.mubr.bf16.gmra.mrb[0].mxu0 %v658
  %v756 = vpop.f32.mrb[0].mxu0
  %v757 = vadd.f32 0.0, %v756
  %v758 = vpop.f32.mrb[0].mxu0
  %v759 = vpop.f32.mrb[0].mxu0
  %v760 = vadd.f32 0.0, %v759
  %v761 = vpop.f32.mrb[0].mxu0
  %762 = vmatprep.mubr.bf16.mxu0 0
  %763 = vmatmul.mubr.bf16.gmra.mrb[0].mxu0 %v659
  %v764 = vpop.f32.mrb[0].mxu0
  %v765 = vadd.f32 0.0, %v764
  %v766 = vpop.f32.mrb[0].mxu0
  %v767 = vpop.f32.mrb[0].mxu0
  %v768 = vadd.f32 0.0, %v767
  %v769 = vpop.f32.mrb[0].mxu0
  %770 = vmatprep.mubr.bf16.mxu0 0
  %771 = vmatmul.mubr.bf16.gmra.mrb[0].mxu0 %v660
  %v772 = vpop.f32.mrb[0].mxu0
  %v773 = vadd.f32 0.0, %v772
  %v774 = vpop.f32.mrb[0].mxu0
  %v775 = vpop.f32.mrb[0].mxu0
  %v776 = vadd.f32 0.0, %v775
  %v777 = vpop.f32.mrb[0].mxu0
  %778 = vmatprep.mubr.bf16.mxu0 0
  %779 = vmatmul.mubr.bf16.gmra.mrb[0].mxu0 %v661
  %v780 = vpop.f32.mrb[0].mxu0
  %v781 = vadd.f32 0.0, %v780
  %v782 = vpop.f32.mrb[0].mxu0
  %v783 = vpop.f32.mrb[0].mxu0
  %v784 = vadd.f32 0.0, %v783
  %v785 = vpop.f32.mrb[0].mxu0
  %786 = vmatprep.mubr.bf16.mxu0 0
  %787 = vmatmul.mubr.bf16.gmra.mrb[0].mxu0 %v662
  %v788 = vpop.f32.mrb[0].mxu0
  %v789 = vadd.f32 0.0, %v788
  %v790 = vpop.f32.mrb[0].mxu0
  %v791 = vpop.f32.mrb[0].mxu0
  %v792 = vadd.f32 0.0, %v791
  %v793 = vpop.f32.mrb[0].mxu0
  %794 = vmatprep.mubr.bf16.mxu0 0
  %795 = vmatmul.mubr.bf16.gmra.mrb[0].mxu0 %v663
  %v796 = vpop.f32.mrb[0].mxu0
  %v797 = vadd.f32 0.0, %v796
  %v798 = vpop.f32.mrb[0].mxu0
  %v799 = vpop.f32.mrb[0].mxu0
  %v800 = vadd.f32 0.0, %v799
  %v801 = vpop.f32.mrb[0].mxu0
  %802 = vmatprep.mubr.bf16.mxu0 0
  %803 = vmatmul.mubr.bf16.gmra.mrb[0].mxu0 %v664
  %v804 = vpop.f32.mrb[0].mxu0
  %v805 = vadd.f32 0.0, %v804
  %v806 = vpop.f32.mrb[0].mxu0
  %v807 = vpop.f32.mrb[0].mxu0
  %v808 = vadd.f32 0.0, %v807
  %v809 = vpop.f32.mrb[0].mxu0
  %810 = vmatprep.mubr.bf16.mxu0 0
  %811 = vmatmul.mubr.bf16.gmra.mrb[0].mxu0 %v665
  %v812 = vpop.f32.mrb[0].mxu0
  %v813 = vadd.f32 0.0, %v812
  %v814 = vpop.f32.mrb[0].mxu0
  %v815 = vpop.f32.mrb[0].mxu0
  %v816 = vadd.f32 0.0, %v815
  %v817 = vpop.f32.mrb[0].mxu0
  %818 = vmatprep.mubr.bf16.mxu0 0
  %819 = vmatmul.mubr.bf16.gmra.mrb[0].mxu0 %v666
  %v820 = vpop.f32.mrb[0].mxu0
  %v821 = vadd.f32 0.0, %v820
  %v822 = vpop.f32.mrb[0].mxu0
  %v823 = vpop.f32.mrb[0].mxu0
  %v824 = vadd.f32 0.0, %v823
  %v825 = vpop.f32.mrb[0].mxu0
  %826 = vmatprep.mubr.bf16.mxu0 0
  %827 = vmatmul.mubr.bf16.gmra.mrb[0].mxu0 %v667
  %v828 = vpop.f32.mrb[0].mxu0
  %v829 = vadd.f32 0.0, %v828
  %v830 = vpop.f32.mrb[0].mxu0
  %v831 = vpop.f32.mrb[0].mxu0
  %v832 = vadd.f32 0.0, %v831
  %v833 = vpop.f32.mrb[0].mxu0
  %834 = vmatprep.mubr.bf16.mxu0 0
  %835 = vmatmul.mubr.bf16.gmra.mrb[0].mxu0 %v668
  %v836 = vpop.f32.mrb[0].mxu0
  %v837 = vadd.f32 0.0, %v836
  %v838 = vpop.f32.mrb[0].mxu0
  %v839 = vpop.f32.mrb[0].mxu0
  %v840 = vadd.f32 0.0, %v839
  %v841 = vpop.f32.mrb[0].mxu0
  %842 = vmatprep.mubr.bf16.mxu0 0
  %843 = vmatmul.mubr.bf16.gmra.mrb[0].mxu0 %v669
  %v844 = vpop.f32.mrb[0].mxu0
  %v845 = vadd.f32 0.0, %v844
  %v846 = vpop.f32.mrb[0].mxu0
  %v847 = vpop.f32.mrb[0].mxu0
  %v848 = vadd.f32 0.0, %v847
  %v849 = vpop.f32.mrb[0].mxu0
  %850 = vmatprep.mubr.bf16.mxu0 0
  %851 = vmatmul.mubr.bf16.gmra.mrb[0].mxu0 %v670
  %v852 = vpop.f32.mrb[0].mxu0
  %v853 = vadd.f32 0.0, %v852
  %v854 = vpop.f32.mrb[0].mxu0
  %v855 = vpop.f32.mrb[0].mxu0
  %v856 = vadd.f32 0.0, %v855
  %v857 = vpop.f32.mrb[0].mxu0
  %858 = vmatprep.mubr.bf16.mxu0 0
  %859 = vmatmul.mubr.bf16.gmra.mrb[0].mxu0 %v671
  %v860 = vpop.f32.mrb[0].mxu0
  %v861 = vadd.f32 0.0, %v860
  %v862 = vpop.f32.mrb[0].mxu0
  %v863 = vpop.f32.mrb[0].mxu0
  %v864 = vadd.f32 0.0, %v863
  %v865 = vpop.f32.mrb[0].mxu0
  %866 = vmatprep.mubr.bf16.mxu0 0
  %867 = vmatmul.mubr.bf16.gmra.mrb[0].mxu0 %v672
  %v868 = vpop.f32.mrb[0].mxu0
  %v869 = vadd.f32 0.0, %v868
  %v870 = vpop.f32.mrb[0].mxu0
  %v871 = vpop.f32.mrb[0].mxu0
  %v872 = vadd.f32 0.0, %v871
  %v873 = vpop.f32.mrb[0].mxu0
  %874 = vmatprep.mubr.bf16.mxu0 0
  %875 = vmatmul.mubr.bf16.gmra.mrb[0].mxu0 %v673
  %v876 = vpop.f32.mrb[0].mxu0
  %v877 = vadd.f32 0.0, %v876
  %v878 = vpop.f32.mrb[0].mxu0
  %v879 = vpop.f32.mrb[0].mxu0
  %v880 = vadd.f32 0.0, %v879
  %v881 = vpop.f32.mrb[0].mxu0
  %882 = vmatprep.mubr.bf16.mxu0 0
  %883 = vmatmul.mubr.bf16.gmra.mrb[0].mxu0 %v674
  %v884 = vpop.f32.mrb[0].mxu0
  %v885 = vadd.f32 0.0, %v884
  %v886 = vpop.f32.mrb[0].mxu0
  %v887 = vpop.f32.mrb[0].mxu0
  %v888 = vadd.f32 0.0, %v887
  %v889 = vpop.f32.mrb[0].mxu0
  %890 = vmatprep.mubr.bf16.mxu0 0
  %891 = vmatmul.mubr.bf16.gmra.mrb[0].mxu0 %v675
  %v892 = vpop.f32.mrb[0].mxu0
  %v893 = vadd.f32 0.0, %v892
  %v894 = vpop.f32.mrb[0].mxu0
  %v895 = vpop.f32.mrb[0].mxu0
  %v896 = vadd.f32 0.0, %v895
  %v897 = vpop.f32.mrb[0].mxu0
  %898 = vmatprep.mubr.bf16.mxu0 0
  %899 = vmatmul.mubr.bf16.gmra.mrb[0].mxu0 %v676
  %v900 = vpop.f32.mrb[0].mxu0
  %v901 = vadd.f32 0.0, %v900
  %v902 = vpop.f32.mrb[0].mxu0
  %v903 = vpop.f32.mrb[0].mxu0
  %v904 = vadd.f32 0.0, %v903
  %v905 = vpop.f32.mrb[0].mxu0
  %906 = vmatprep.mubr.bf16.mxu0 0
  %907 = vmatmul.mubr.bf16.gmra.mrb[0].mxu0 %v677
  %v908 = vpop.f32.mrb[0].mxu0
  %v909 = vadd.f32 0.0, %v908
  %v910 = vpop.f32.mrb[0].mxu0
  %v911 = vpop.f32.mrb[0].mxu0
  %v912 = vadd.f32 0.0, %v911
  %v913 = vpop.f32.mrb[0].mxu0
  %914 = vmatprep.mubr.bf16.mxu0 0
  %915 = vmatmul.mubr.bf16.gmra.mrb[0].mxu0 %v678
  %v916 = vpop.f32.mrb[0].mxu0
  %v917 = vadd.f32 0.0, %v916
  %v918 = vpop.f32.mrb[0].mxu0
  %v919 = vpop.f32.mrb[0].mxu0
  %v920 = vadd.f32 0.0, %v919
  %v921 = vpop.f32.mrb[0].mxu0
  %922 = vmatprep.mubr.bf16.mxu0 0
  %923 = vmatmul.mubr.bf16.gmra.mrb[0].mxu0 %v679
  %v924 = vpop.f32.mrb[0].mxu0
  %v925 = vadd.f32 0.0, %v924
  %v926 = vpop.f32.mrb[0].mxu0
  %v927 = vpop.f32.mrb[0].mxu0
  %v928 = vadd.f32 0.0, %v927
  %v929 = vpop.f32.mrb[0].mxu0
  %930 = vmatprep.mubr.bf16.mxu0 0
  %931 = vmatmul.mubr.bf16.gmra.mrb[0].mxu0 %v680
  %v932 = vpop.f32.mrb[0].mxu0
  %v933 = vadd.f32 0.0, %v932
  %v934 = vpop.f32.mrb[0].mxu0
  %v935 = vpop.f32.mrb[0].mxu0
  %v936 = vpop.f32.mrb[0].mxu0
  %937 = vdwg.mxu0
  %v938 = vmax.f32 %v311, %v741
  %v939 = vmax.f32 %v314, %v744
  %v940 = vmax.f32 %v319, %v749
  %v941 = vmax.f32 %v322, %v752
  %v942 = vmax.f32 %v327, %v757
  %v943 = vmax.f32 %v330, %v760
  %v944 = vmax.f32 %v335, %v765
  %v945 = vmax.f32 %v338, %v768
  %v946 = vmax.f32 %v343, %v773
  %v947 = vmax.f32 %v346, %v776
  %v948 = vmax.f32 %v351, %v781
  %v949 = vmax.f32 %v354, %v784
  %v950 = vmax.f32 %v359, %v789
  %v951 = vmax.f32 %v362, %v792
  %v952 = vmax.f32 %v367, %v797
  %v953 = vmax.f32 %v370, %v800
  %v954 = vmax.f32 %v375, %v805
  %v955 = vmax.f32 %v378, %v808
  %v956 = vmax.f32 %v383, %v813
  %v957 = vmax.f32 %v386, %v816
  %v958 = vmax.f32 %v391, %v821
  %v959 = vmax.f32 %v394, %v824
  %v960 = vmax.f32 %v399, %v829
  %v961 = vmax.f32 %v402, %v832
  %v962 = vmax.f32 %v407, %v837
  %v963 = vmax.f32 %v410, %v840
  %v964 = vmax.f32 %v415, %v845
  %v965 = vmax.f32 %v418, %v848
  %v966 = vmax.f32 %v423, %v853
  %v967 = vmax.f32 %v426, %v856
  %v968 = vmax.f32 %v431, %v861
  %v969 = vmax.f32 %v434, %v864
  %v970 = vmax.f32 %v439, %v869
  %v971 = vmax.f32 %v442, %v872
  %v972 = vmax.f32 %v447, %v877
  %v973 = vmax.f32 %v450, %v880
  %v974 = vmax.f32 %v455, %v885
  %v975 = vmax.f32 %v458, %v888
  %v976 = vmax.f32 %v463, %v893
  %v977 = vmax.f32 %v466, %v896
  %v978 = vmax.f32 %v471, %v901
  %v979 = vmax.f32 %v474, %v904
  %v980 = vmax.f32 %v479, %v909
  %v981 = vmax.f32 %v482, %v912
  %v982 = vmax.f32 %v487, %v917
  %v983 = vmax.f32 %v490, %v920
  %v984 = vmax.f32 %v495, %v925
  %v985 = vmax.f32 %v498, %v928
  %v986 = vmax.f32 %v503, %v933
  %s987 = scalar_lea.vmem %s0, 392
  %v988 = vld [vmem:[%s987] sm:$0xf]
  %v989 = vld [vmem:[%s987 + $0x4] sm:$0xf]
  %v990 = vld [vmem:[%s987 + $0x8] sm:$0xf]
  %v991 = vld [vmem:[%s987 + $0xc] sm:$0xf]
  %v992 = vld [vmem:[%s987 + $0x10] sm:$0xf]
  %v993 = vld [vmem:[%s987 + $0x14] sm:$0xf]
  %v994 = vld [vmem:[%s987 + $0x18] sm:$0xf]
  %v995 = vld [vmem:[%s987 + $0x1c] sm:$0xf]
  %v996 = vld [vmem:[%s987 + $0x20] sm:$0xf]
  %v997 = vld [vmem:[%s987 + $0x24] sm:$0xf]
  %v998 = vld [vmem:[%s987 + $0x28] sm:$0xf]
  %v999 = vld [vmem:[%s987 + $0x2c] sm:$0xf]
  %v1000 = vld [vmem:[%s987 + $0x30] sm:$0xf]
  %v1001 = vld [vmem:[%s987 + $0x34] sm:$0xf]
  %v1002 = vld [vmem:[%s987 + $0x38] sm:$0xf]
  %v1003 = vld [vmem:[%s987 + $0x3c] sm:$0xf]
  %v1004 = vld [vmem:[%s987 + $0x40] sm:$0xf]
  %v1005 = vld [vmem:[%s987 + $0x44] sm:$0xf]
  %v1006 = vld [vmem:[%s987 + $0x48] sm:$0xf]
  %v1007 = vld [vmem:[%s987 + $0x4c] sm:$0xf]
  %v1008 = vld [vmem:[%s987 + $0x50] sm:$0xf]
  %v1009 = vld [vmem:[%s987 + $0x54] sm:$0xf]
  %v1010 = vld [vmem:[%s987 + $0x58] sm:$0xf]
  %v1011 = vld [vmem:[%s987 + $0x5c] sm:$0xf]
  %v1012 = vld [vmem:[%s987 + $0x60] sm:$0xf]
  %v1013 = vld [vmem:[%s987 + $0x64] sm:$0xf]
  %v1014 = vld [vmem:[%s987 + $0x68] sm:$0xf]
  %v1015 = vld [vmem:[%s987 + $0x6c] sm:$0xf]
  %v1016 = vld [vmem:[%s987 + $0x70] sm:$0xf]
  %v1017 = vld [vmem:[%s987 + $0x74] sm:$0xf]
  %v1018 = vld [vmem:[%s987 + $0x78] sm:$0xf]
  %v1019 = vld [vmem:[%s987 + $0x7c] sm:$0xf]
  %v1020 = vld [vmem:[%s987 + $0x80] sm:$0xf]
  %v1021 = vld [vmem:[%s987 + $0x84] sm:$0xf]
  %v1022 = vld [vmem:[%s987 + $0x88] sm:$0xf]
  %v1023 = vld [vmem:[%s987 + $0x8c] sm:$0xf]
  %v1024 = vld [vmem:[%s987 + $0x90] sm:$0xf]
  %v1025 = vld [vmem:[%s987 + $0x94] sm:$0xf]
  %v1026 = vld [vmem:[%s987 + $0x98] sm:$0xf]
  %v1027 = vld [vmem:[%s987 + $0x9c] sm:$0xf]
  %v1028 = vld [vmem:[%s987 + $0xa0] sm:$0xf]
  %v1029 = vld [vmem:[%s987 + $0xa4] sm:$0xf]
  %v1030 = vld [vmem:[%s987 + $0xa8] sm:$0xf]
  %v1031 = vld [vmem:[%s987 + $0xac] sm:$0xf]
  %v1032 = vld [vmem:[%s987 + $0xb0] sm:$0xf]
  %v1033 = vld [vmem:[%s987 + $0xb4] sm:$0xf]
  %v1034 = vld [vmem:[%s987 + $0xb8] sm:$0xf]
  %v1035 = vld [vmem:[%s987 + $0xbc] sm:$0xf]
  %v1036 = vld [vmem:[%s987 + $0xc0] sm:$0xf]
  %v1086 = vunpack.c.l.b16 %v988
  %v1087 = vunpack.c.l.b16 %v989
  %v1088 = vunpack.c.l.b16 %v990
  %v1089 = vunpack.c.l.b16 %v991
  %v1090 = vunpack.c.l.b16 %v992
  %v1091 = vunpack.c.l.b16 %v993
  %v1092 = vunpack.c.l.b16 %v994
  %v1093 = vunpack.c.l.b16 %v995
  %v1094 = vunpack.c.l.b16 %v996
  %v1095 = vunpack.c.l.b16 %v997
  %v1096 = vunpack.c.l.b16 %v998
  %v1097 = vunpack.c.l.b16 %v999
  %v1098 = vunpack.c.l.b16 %v1000
  %v1099 = vunpack.c.l.b16 %v1001
  %v1100 = vunpack.c.l.b16 %v1002
  %v1101 = vunpack.c.l.b16 %v1003
  %v1102 = vunpack.c.l.b16 %v1004
  %v1103 = vunpack.c.l.b16 %v1005
  %v1104 = vunpack.c.l.b16 %v1006
  %v1105 = vunpack.c.l.b16 %v1007
  %v1106 = vunpack.c.l.b16 %v1008
  %v1107 = vunpack.c.l.b16 %v1009
  %v1108 = vunpack.c.l.b16 %v1010
  %v1109 = vunpack.c.l.b16 %v1011
  %v1110 = vunpack.c.l.b16 %v1012
  %v1111 = vunpack.c.l.b16 %v1013
  %v1112 = vunpack.c.l.b16 %v1014
  %v1113 = vunpack.c.l.b16 %v1015
  %v1114 = vunpack.c.l.b16 %v1016
  %v1115 = vunpack.c.l.b16 %v1017
  %v1116 = vunpack.c.l.b16 %v1018
  %v1117 = vunpack.c.l.b16 %v1019
  %v1118 = vunpack.c.l.b16 %v1020
  %v1119 = vunpack.c.l.b16 %v1021
  %v1120 = vunpack.c.l.b16 %v1022
  %v1121 = vunpack.c.l.b16 %v1023
  %v1122 = vunpack.c.l.b16 %v1024
  %v1123 = vunpack.c.l.b16 %v1025
  %v1124 = vunpack.c.l.b16 %v1026
  %v1125 = vunpack.c.l.b16 %v1027
  %v1126 = vunpack.c.l.b16 %v1028
  %v1127 = vunpack.c.l.b16 %v1029
  %v1128 = vunpack.c.l.b16 %v1030
  %v1129 = vunpack.c.l.b16 %v1031
  %v1130 = vunpack.c.l.b16 %v1032
  %v1131 = vunpack.c.l.b16 %v1033
  %v1132 = vunpack.c.l.b16 %v1034
  %v1133 = vunpack.c.l.b16 %v1035
  %v1134 = vunpack.c.l.b16 %v1036
  %v1135 = vpack.c.b16 %v1087, %v1086
  %v1136 = vpack.c.b16 %v1089, %v1088
  %v1137 = vpack.c.b16 %v1091, %v1090
  %v1138 = vpack.c.b16 %v1093, %v1092
  %v1139 = vpack.c.b16 %v1095, %v1094
  %v1140 = vpack.c.b16 %v1097, %v1096
  %v1141 = vpack.c.b16 %v1099, %v1098
  %v1142 = vpack.c.b16 %v1101, %v1100
  %v1143 = vpack.c.b16 %v1103, %v1102
  %v1144 = vpack.c.b16 %v1105, %v1104
  %v1145 = vpack.c.b16 %v1107, %v1106
  %v1146 = vpack.c.b16 %v1109, %v1108
  %v1147 = vpack.c.b16 %v1111, %v1110
  %v1148 = vpack.c.b16 %v1113, %v1112
  %v1149 = vpack.c.b16 %v1115, %v1114
  %v1150 = vpack.c.b16 %v1117, %v1116
  %v1151 = vpack.c.b16 %v1119, %v1118
  %v1152 = vpack.c.b16 %v1121, %v1120
  %v1153 = vpack.c.b16 %v1123, %v1122
  %v1154 = vpack.c.b16 %v1125, %v1124
  %v1155 = vpack.c.b16 %v1127, %v1126
  %v1156 = vpack.c.b16 %v1129, %v1128
  %v1157 = vpack.c.b16 %v1131, %v1130
  %v1158 = vpack.c.b16 %v1133, %v1132
  %v1159 = vpack.c.b16 %v1134, %v1134
  %1185 = vmatprep.subr.bf16.mxu0 0
  %1186 = vmatpush1.bf16.msra.mxu0 %v260
  %1187 = vmatprep.subr.bf16.mxu0 0
  %1188 = vmatpush1.bf16.msra.mxu0 %v261
  %1189 = vmatprep.subr.bf16.mxu0 0
  %1190 = vmatpush1.bf16.msra.mxu0 %v262
  %1191 = vmatprep.subr.bf16.mxu0 0
  %1192 = vmatpush1.bf16.msra.mxu0 %v263
  %1193 = vmatprep.subr.bf16.mxu0 0
  %1194 = vmatpush1.bf16.msra.mxu0 %v264
  %1195 = vmatprep.subr.bf16.mxu0 0
  %1196 = vmatpush1.bf16.msra.mxu0 %v265
  %1197 = vmatprep.subr.bf16.mxu0 0
  %1198 = vmatpush1.bf16.msra.mxu0 %v266
  %1199 = vmatprep.subr.bf16.mxu0 0
  %1200 = vmatpush1.bf16.msra.mxu0 %v267
  %1201 = vmatprep.subr.bf16.mxu0 0
  %1202 = vmatpush1.bf16.msra.mxu0 0
  %1203 = vmatprep.subr.bf16.mxu0 0
  %1204 = vmatpush1.bf16.msra.mxu0 0
  %1205 = vmatprep.subr.bf16.mxu0 0
  %1206 = vmatpush1.bf16.msra.mxu0 0
  %1207 = vmatprep.subr.bf16.mxu0 0
  %1208 = vmatpush1.bf16.msra.mxu0 0
  %1209 = vmatprep.subr.bf16.mxu0 0
  %1210 = vmatpush1.bf16.msra.mxu0 0
  %1211 = vmatprep.subr.bf16.mxu0 0
  %1212 = vmatpush1.bf16.msra.mxu0 0
  %1213 = vmatprep.subr.bf16.mxu0 0
  %1214 = vmatpush1.bf16.msra.mxu0 0
  %1215 = vmatprep.subr.bf16.mxu0 0
  %1216 = vmatpush1.bf16.msra.mxu0 0
  %1217 = vmatprep.mubr.bf16.mxu0 0
  %1218 = vmatmul.mubr.bf16.gmra.mrb[0].mxu0 %v1135
  %v1219 = vpop.f32.mrb[0].mxu0
  %v1220 = vadd.f32 0.0, %v1219
  %v1221 = vpop.f32.mrb[0].mxu0
  %v1222 = vpop.f32.mrb[0].mxu0
  %v1223 = vadd.f32 0.0, %v1222
  %v1224 = vpop.f32.mrb[0].mxu0
  %1225 = vmatprep.mubr.bf16.mxu0 0
  %1226 = vmatmul.mubr.bf16.gmra.mrb[0].mxu0 %v1136
  %v1227 = vpop.f32.mrb[0].mxu0
  %v1228 = vadd.f32 0.0, %v1227
  %v1229 = vpop.f32.mrb[0].mxu0
  %v1230 = vpop.f32.mrb[0].mxu0
  %v1231 = vadd.f32 0.0, %v1230
  %v1232 = vpop.f32.mrb[0].mxu0
  %1233 = vmatprep.mubr.bf16.mxu0 0
  %1234 = vmatmul.mubr.bf16.gmra.mrb[0].mxu0 %v1137
  %v1235 = vpop.f32.mrb[0].mxu0
  %v1236 = vadd.f32 0.0, %v1235
  %v1237 = vpop.f32.mrb[0].mxu0
  %v1238 = vpop.f32.mrb[0].mxu0
  %v1239 = vadd.f32 0.0, %v1238
  %v1240 = vpop.f32.mrb[0].mxu0
  %1241 = vmatprep.mubr.bf16.mxu0 0
  %1242 = vmatmul.mubr.bf16.gmra.mrb[0].mxu0 %v1138
  %v1243 = vpop.f32.mrb[0].mxu0
  %v1244 = vadd.f32 0.0, %v1243
  %v1245 = vpop.f32.mrb[0].mxu0
  %v1246 = vpop.f32.mrb[0].mxu0
  %v1247 = vadd.f32 0.0, %v1246
  %v1248 = vpop.f32.mrb[0].mxu0
  %1249 = vmatprep.mubr.bf16.mxu0 0
  %1250 = vmatmul.mubr.bf16.gmra.mrb[0].mxu0 %v1139
  %v1251 = vpop.f32.mrb[0].mxu0
  %v1252 = vadd.f32 0.0, %v1251
  %v1253 = vpop.f32.mrb[0].mxu0
  %v1254 = vpop.f32.mrb[0].mxu0
  %v1255 = vadd.f32 0.0, %v1254
  %v1256 = vpop.f32.mrb[0].mxu0
  %1257 = vmatprep.mubr.bf16.mxu0 0
  %1258 = vmatmul.mubr.bf16.gmra.mrb[0].mxu0 %v1140
  %v1259 = vpop.f32.mrb[0].mxu0
  %v1260 = vadd.f32 0.0, %v1259
  %v1261 = vpop.f32.mrb[0].mxu0
  %v1262 = vpop.f32.mrb[0].mxu0
  %v1263 = vadd.f32 0.0, %v1262
  %v1264 = vpop.f32.mrb[0].mxu0
  %1265 = vmatprep.mubr.bf16.mxu0 0
  %1266 = vmatmul.mubr.bf16.gmra.mrb[0].mxu0 %v1141
  %v1267 = vpop.f32.mrb[0].mxu0
  %v1268 = vadd.f32 0.0, %v1267
  %v1269 = vpop.f32.mrb[0].mxu0
  %v1270 = vpop.f32.mrb[0].mxu0
  %v1271 = vadd.f32 0.0, %v1270
  %v1272 = vpop.f32.mrb[0].mxu0
  %1273 = vmatprep.mubr.bf16.mxu0 0
  %1274 = vmatmul.mubr.bf16.gmra.mrb[0].mxu0 %v1142
  %v1275 = vpop.f32.mrb[0].mxu0
  %v1276 = vadd.f32 0.0, %v1275
  %v1277 = vpop.f32.mrb[0].mxu0
  %v1278 = vpop.f32.mrb[0].mxu0
  %v1279 = vadd.f32 0.0, %v1278
  %v1280 = vpop.f32.mrb[0].mxu0
  %1281 = vmatprep.mubr.bf16.mxu0 0
  %1282 = vmatmul.mubr.bf16.gmra.mrb[0].mxu0 %v1143
  %v1283 = vpop.f32.mrb[0].mxu0
  %v1284 = vadd.f32 0.0, %v1283
  %v1285 = vpop.f32.mrb[0].mxu0
  %v1286 = vpop.f32.mrb[0].mxu0
  %v1287 = vadd.f32 0.0, %v1286
  %v1288 = vpop.f32.mrb[0].mxu0
  %1289 = vmatprep.mubr.bf16.mxu0 0
  %1290 = vmatmul.mubr.bf16.gmra.mrb[0].mxu0 %v1144
  %v1291 = vpop.f32.mrb[0].mxu0
  %v1292 = vadd.f32 0.0, %v1291
  %v1293 = vpop.f32.mrb[0].mxu0
  %v1294 = vpop.f32.mrb[0].mxu0
  %v1295 = vadd.f32 0.0, %v1294
  %v1296 = vpop.f32.mrb[0].mxu0
  %1297 = vmatprep.mubr.bf16.mxu0 0
  %1298 = vmatmul.mubr.bf16.gmra.mrb[0].mxu0 %v1145
  %v1299 = vpop.f32.mrb[0].mxu0
  %v1300 = vadd.f32 0.0, %v1299
  %v1301 = vpop.f32.mrb[0].mxu0
  %v1302 = vpop.f32.mrb[0].mxu0
  %v1303 = vadd.f32 0.0, %v1302
  %v1304 = vpop.f32.mrb[0].mxu0
  %1305 = vmatprep.mubr.bf16.mxu0 0
  %1306 = vmatmul.mubr.bf16.gmra.mrb[0].mxu0 %v1146
  %v1307 = vpop.f32.mrb[0].mxu0
  %v1308 = vadd.f32 0.0, %v1307
  %v1309 = vpop.f32.mrb[0].mxu0
  %v1310 = vpop.f32.mrb[0].mxu0
  %v1311 = vadd.f32 0.0, %v1310
  %v1312 = vpop.f32.mrb[0].mxu0
  %1313 = vmatprep.mubr.bf16.mxu0 0
  %1314 = vmatmul.mubr.bf16.gmra.mrb[0].mxu0 %v1147
  %v1315 = vpop.f32.mrb[0].mxu0
  %v1316 = vadd.f32 0.0, %v1315
  %v1317 = vpop.f32.mrb[0].mxu0
  %v1318 = vpop.f32.mrb[0].mxu0
  %v1319 = vadd.f32 0.0, %v1318
  %v1320 = vpop.f32.mrb[0].mxu0
  %1321 = vmatprep.mubr.bf16.mxu0 0
  %1322 = vmatmul.mubr.bf16.gmra.mrb[0].mxu0 %v1148
  %v1323 = vpop.f32.mrb[0].mxu0
  %v1324 = vadd.f32 0.0, %v1323
  %v1325 = vpop.f32.mrb[0].mxu0
  %v1326 = vpop.f32.mrb[0].mxu0
  %v1327 = vadd.f32 0.0, %v1326
  %v1328 = vpop.f32.mrb[0].mxu0
  %1329 = vmatprep.mubr.bf16.mxu0 0
  %1330 = vmatmul.mubr.bf16.gmra.mrb[0].mxu0 %v1149
  %v1331 = vpop.f32.mrb[0].mxu0
  %v1332 = vadd.f32 0.0, %v1331
  %v1333 = vpop.f32.mrb[0].mxu0
  %v1334 = vpop.f32.mrb[0].mxu0
  %v1335 = vadd.f32 0.0, %v1334
  %v1336 = vpop.f32.mrb[0].mxu0
  %1337 = vmatprep.mubr.bf16.mxu0 0
  %1338 = vmatmul.mubr.bf16.gmra.mrb[0].mxu0 %v1150
  %v1339 = vpop.f32.mrb[0].mxu0
  %v1340 = vadd.f32 0.0, %v1339
  %v1341 = vpop.f32.mrb[0].mxu0
  %v1342 = vpop.f32.mrb[0].mxu0
  %v1343 = vadd.f32 0.0, %v1342
  %v1344 = vpop.f32.mrb[0].mxu0
  %1345 = vmatprep.mubr.bf16.mxu0 0
  %1346 = vmatmul.mubr.bf16.gmra.mrb[0].mxu0 %v1151
  %v1347 = vpop.f32.mrb[0].mxu0
  %v1348 = vadd.f32 0.0, %v1347
  %v1349 = vpop.f32.mrb[0].mxu0
  %v1350 = vpop.f32.mrb[0].mxu0
  %v1351 = vadd.f32 0.0, %v1350
  %v1352 = vpop.f32.mrb[0].mxu0
  %1353 = vmatprep.mubr.bf16.mxu0 0
  %1354 = vmatmul.mubr.bf16.gmra.mrb[0].mxu0 %v1152
  %v1355 = vpop.f32.mrb[0].mxu0
  %v1356 = vadd.f32 0.0, %v1355
  %v1357 = vpop.f32.mrb[0].mxu0
  %v1358 = vpop.f32.mrb[0].mxu0
  %v1359 = vadd.f32 0.0, %v1358
  %v1360 = vpop.f32.mrb[0].mxu0
  %1361 = vmatprep.mubr.bf16.mxu0 0
  %1362 = vmatmul.mubr.bf16.gmra.mrb[0].mxu0 %v1153
  %v1363 = vpop.f32.mrb[0].mxu0
  %v1364 = vadd.f32 0.0, %v1363
  %v1365 = vpop.f32.mrb[0].mxu0
  %v1366 = vpop.f32.mrb[0].mxu0
  %v1367 = vadd.f32 0.0, %v1366
  %v1368 = vpop.f32.mrb[0].mxu0
  %1369 = vmatprep.mubr.bf16.mxu0 0
  %1370 = vmatmul.mubr.bf16.gmra.mrb[0].mxu0 %v1154
  %v1371 = vpop.f32.mrb[0].mxu0
  %v1372 = vadd.f32 0.0, %v1371
  %v1373 = vpop.f32.mrb[0].mxu0
  %v1374 = vpop.f32.mrb[0].mxu0
  %v1375 = vadd.f32 0.0, %v1374
  %v1376 = vpop.f32.mrb[0].mxu0
  %1377 = vmatprep.mubr.bf16.mxu0 0
  %1378 = vmatmul.mubr.bf16.gmra.mrb[0].mxu0 %v1155
  %v1379 = vpop.f32.mrb[0].mxu0
  %v1380 = vadd.f32 0.0, %v1379
  %v1381 = vpop.f32.mrb[0].mxu0
  %v1382 = vpop.f32.mrb[0].mxu0
  %v1383 = vadd.f32 0.0, %v1382
  %v1384 = vpop.f32.mrb[0].mxu0
  %1385 = vmatprep.mubr.bf16.mxu0 0
  %1386 = vmatmul.mubr.bf16.gmra.mrb[0].mxu0 %v1156
  %v1387 = vpop.f32.mrb[0].mxu0
  %v1388 = vadd.f32 0.0, %v1387
  %v1389 = vpop.f32.mrb[0].mxu0
  %v1390 = vpop.f32.mrb[0].mxu0
  %v1391 = vadd.f32 0.0, %v1390
  %v1392 = vpop.f32.mrb[0].mxu0
  %1393 = vmatprep.mubr.bf16.mxu0 0
  %1394 = vmatmul.mubr.bf16.gmra.mrb[0].mxu0 %v1157
  %v1395 = vpop.f32.mrb[0].mxu0
  %v1396 = vadd.f32 0.0, %v1395
  %v1397 = vpop.f32.mrb[0].mxu0
  %v1398 = vpop.f32.mrb[0].mxu0
  %v1399 = vadd.f32 0.0, %v1398
  %v1400 = vpop.f32.mrb[0].mxu0
  %1401 = vmatprep.mubr.bf16.mxu0 0
  %1402 = vmatmul.mubr.bf16.gmra.mrb[0].mxu0 %v1158
  %v1403 = vpop.f32.mrb[0].mxu0
  %v1404 = vadd.f32 0.0, %v1403
  %v1405 = vpop.f32.mrb[0].mxu0
  %v1406 = vpop.f32.mrb[0].mxu0
  %v1407 = vadd.f32 0.0, %v1406
  %v1408 = vpop.f32.mrb[0].mxu0
  %1409 = vmatprep.mubr.bf16.mxu0 0
  %1410 = vmatmul.mubr.bf16.gmra.mrb[0].mxu0 %v1159
  %v1411 = vpop.f32.mrb[0].mxu0
  %v1412 = vadd.f32 0.0, %v1411
  %v1413 = vpop.f32.mrb[0].mxu0
  %v1414 = vpop.f32.mrb[0].mxu0
  %v1415 = vpop.f32.mrb[0].mxu0
  %1416 = vdwg.mxu0
  %v1417 = vmax.f32 %v938, %v1220
  %v1418 = vmax.f32 %v939, %v1223
  %v1419 = vmax.f32 %v940, %v1228
  %v1420 = vmax.f32 %v941, %v1231
  %v1421 = vmax.f32 %v942, %v1236
  %v1422 = vmax.f32 %v943, %v1239
  %v1423 = vmax.f32 %v944, %v1244
  %v1424 = vmax.f32 %v945, %v1247
  %v1425 = vmax.f32 %v946, %v1252
  %v1426 = vmax.f32 %v947, %v1255
  %v1427 = vmax.f32 %v948, %v1260
  %v1428 = vmax.f32 %v949, %v1263
  %v1429 = vmax.f32 %v950, %v1268
  %v1430 = vmax.f32 %v951, %v1271
  %v1431 = vmax.f32 %v952, %v1276
  %v1432 = vmax.f32 %v953, %v1279
  %v1433 = vmax.f32 %v954, %v1284
  %v1434 = vmax.f32 %v955, %v1287
  %v1435 = vmax.f32 %v956, %v1292
  %v1436 = vmax.f32 %v957, %v1295
  %v1437 = vmax.f32 %v958, %v1300
  %v1438 = vmax.f32 %v959, %v1303
  %v1439 = vmax.f32 %v960, %v1308
  %v1440 = vmax.f32 %v961, %v1311
  %v1441 = vmax.f32 %v962, %v1316
  %v1442 = vmax.f32 %v963, %v1319
  %v1443 = vmax.f32 %v964, %v1324
  %v1444 = vmax.f32 %v965, %v1327
  %v1445 = vmax.f32 %v966, %v1332
  %v1446 = vmax.f32 %v967, %v1335
  %v1447 = vmax.f32 %v968, %v1340
  %v1448 = vmax.f32 %v969, %v1343
  %v1449 = vmax.f32 %v970, %v1348
  %v1450 = vmax.f32 %v971, %v1351
  %v1451 = vmax.f32 %v972, %v1356
  %v1452 = vmax.f32 %v973, %v1359
  %v1453 = vmax.f32 %v974, %v1364
  %v1454 = vmax.f32 %v975, %v1367
  %v1455 = vmax.f32 %v976, %v1372
  %v1456 = vmax.f32 %v977, %v1375
  %v1457 = vmax.f32 %v978, %v1380
  %v1458 = vmax.f32 %v979, %v1383
  %v1459 = vmax.f32 %v980, %v1388
  %v1460 = vmax.f32 %v981, %v1391
  %v1461 = vmax.f32 %v982, %v1396
  %v1462 = vmax.f32 %v983, %v1399
  %v1463 = vmax.f32 %v984, %v1404
  %v1464 = vmax.f32 %v985, %v1407
  %v1465 = vmax.f32 %v986, %v1412
  %s1466 = scalar_lea.vmem %s0, 588
  %v1467 = vld [vmem:[%s1466] sm:$0xf]
  %v1468 = vld [vmem:[%s1466 + $0x4] sm:$0xf]
  %v1469 = vld [vmem:[%s1466 + $0x8] sm:$0xf]
  %v1470 = vld [vmem:[%s1466 + $0xc] sm:$0xf]
  %v1471 = vld [vmem:[%s1466 + $0x10] sm:$0xf]
  %v1472 = vld [vmem:[%s1466 + $0x14] sm:$0xf]
  %v1473 = vld [vmem:[%s1466 + $0x18] sm:$0xf]
  %v1474 = vld [vmem:[%s1466 + $0x1c] sm:$0xf]
  %v1475 = vld [vmem:[%s1466 + $0x20] sm:$0xf]
  %v1476 = vld [vmem:[%s1466 + $0x24] sm:$0xf]
  %v1477 = vld [vmem:[%s1466 + $0x28] sm:$0xf]
  %v1478 = vld [vmem:[%s1466 + $0x2c] sm:$0xf]
  %v1479 = vld [vmem:[%s1466 + $0x30] sm:$0xf]
  %v1480 = vld [vmem:[%s1466 + $0x34] sm:$0xf]
  %v1481 = vld [vmem:[%s1466 + $0x38] sm:$0xf]
  %v1482 = vld [vmem:[%s1466 + $0x3c] sm:$0xf]
  %v1483 = vld [vmem:[%s1466 + $0x40] sm:$0xf]
  %v1484 = vld [vmem:[%s1466 + $0x44] sm:$0xf]
  %v1485 = vld [vmem:[%s1466 + $0x48] sm:$0xf]
  %v1486 = vld [vmem:[%s1466 + $0x4c] sm:$0xf]
  %v1487 = vld [vmem:[%s1466 + $0x50] sm:$0xf]
  %v1488 = vld [vmem:[%s1466 + $0x54] sm:$0xf]
  %v1489 = vld [vmem:[%s1466 + $0x58] sm:$0xf]
  %v1490 = vld [vmem:[%s1466 + $0x5c] sm:$0xf]
  %v1491 = vld [vmem:[%s1466 + $0x60] sm:$0xf]
  %v1492 = vld [vmem:[%s1466 + $0x64] sm:$0xf]
  %v1493 = vld [vmem:[%s1466 + $0x68] sm:$0xf]
  %v1494 = vld [vmem:[%s1466 + $0x6c] sm:$0xf]
  %v1495 = vld [vmem:[%s1466 + $0x70] sm:$0xf]
  %v1496 = vld [vmem:[%s1466 + $0x74] sm:$0xf]
  %v1497 = vld [vmem:[%s1466 + $0x78] sm:$0xf]
  %v1498 = vld [vmem:[%s1466 + $0x7c] sm:$0xf]
  %v1499 = vld [vmem:[%s1466 + $0x80] sm:$0xf]
  %v1500 = vld [vmem:[%s1466 + $0x84] sm:$0xf]
  %v1501 = vld [vmem:[%s1466 + $0x88] sm:$0xf]
  %v1502 = vld [vmem:[%s1466 + $0x8c] sm:$0xf]
  %v1503 = vld [vmem:[%s1466 + $0x90] sm:$0xf]
  %v1504 = vld [vmem:[%s1466 + $0x94] sm:$0xf]
  %v1505 = vld [vmem:[%s1466 + $0x98] sm:$0xf]
  %v1506 = vld [vmem:[%s1466 + $0x9c] sm:$0xf]
  %v1507 = vld [vmem:[%s1466 + $0xa0] sm:$0xf]
  %v1508 = vld [vmem:[%s1466 + $0xa4] sm:$0xf]
  %v1509 = vld [vmem:[%s1466 + $0xa8] sm:$0xf]
  %v1510 = vld [vmem:[%s1466 + $0xac] sm:$0xf]
  %v1511 = vld [vmem:[%s1466 + $0xb0] sm:$0xf]
  %v1512 = vld [vmem:[%s1466 + $0xb4] sm:$0xf]
  %v1513 = vld [vmem:[%s1466 + $0xb8] sm:$0xf]
  %v1514 = vld [vmem:[%s1466 + $0xbc] sm:$0xf]
  %v1515 = vld [vmem:[%s1466 + $0xc0] sm:$0xf]
  %v1565 = vunpack.c.l.b16 %v1467
  %v1566 = vunpack.c.l.b16 %v1468
  %v1567 = vunpack.c.l.b16 %v1469
  %v1568 = vunpack.c.l.b16 %v1470
  %v1569 = vunpack.c.l.b16 %v1471
  %v1570 = vunpack.c.l.b16 %v1472
  %v1571 = vunpack.c.l.b16 %v1473
  %v1572 = vunpack.c.l.b16 %v1474
  %v1573 = vunpack.c.l.b16 %v1475
  %v1574 = vunpack.c.l.b16 %v1476
  %v1575 = vunpack.c.l.b16 %v1477
  %v1576 = vunpack.c.l.b16 %v1478
  %v1577 = vunpack.c.l.b16 %v1479
  %v1578 = vunpack.c.l.b16 %v1480
  %v1579 = vunpack.c.l.b16 %v1481
  %v1580 = vunpack.c.l.b16 %v1482
  %v1581 = vunpack.c.l.b16 %v1483
  %v1582 = vunpack.c.l.b16 %v1484
  %v1583 = vunpack.c.l.b16 %v1485
  %v1584 = vunpack.c.l.b16 %v1486
  %v1585 = vunpack.c.l.b16 %v1487
  %v1586 = vunpack.c.l.b16 %v1488
  %v1587 = vunpack.c.l.b16 %v1489
  %v1588 = vunpack.c.l.b16 %v1490
  %v1589 = vunpack.c.l.b16 %v1491
  %v1590 = vunpack.c.l.b16 %v1492
  %v1591 = vunpack.c.l.b16 %v1493
  %v1592 = vunpack.c.l.b16 %v1494
  %v1593 = vunpack.c.l.b16 %v1495
  %v1594 = vunpack.c.l.b16 %v1496
  %v1595 = vunpack.c.l.b16 %v1497
  %v1596 = vunpack.c.l.b16 %v1498
  %v1597 = vunpack.c.l.b16 %v1499
  %v1598 = vunpack.c.l.b16 %v1500
  %v1599 = vunpack.c.l.b16 %v1501
  %v1600 = vunpack.c.l.b16 %v1502
  %v1601 = vunpack.c.l.b16 %v1503
  %v1602 = vunpack.c.l.b16 %v1504
  %v1603 = vunpack.c.l.b16 %v1505
  %v1604 = vunpack.c.l.b16 %v1506
  %v1605 = vunpack.c.l.b16 %v1507
  %v1606 = vunpack.c.l.b16 %v1508
  %v1607 = vunpack.c.l.b16 %v1509
  %v1608 = vunpack.c.l.b16 %v1510
  %v1609 = vunpack.c.l.b16 %v1511
  %v1610 = vunpack.c.l.b16 %v1512
  %v1611 = vunpack.c.l.b16 %v1513
  %v1612 = vunpack.c.l.b16 %v1514
  %v1613 = vunpack.c.l.b16 %v1515
  %v1614 = vpack.c.b16 %v1566, %v1565
  %v1615 = vpack.c.b16 %v1568, %v1567
  %v1616 = vpack.c.b16 %v1570, %v1569
  %v1617 = vpack.c.b16 %v1572, %v1571
  %v1618 = vpack.c.b16 %v1574, %v1573
  %v1619 = vpack.c.b16 %v1576, %v1575
  %v1620 = vpack.c.b16 %v1578, %v1577
  %v1621 = vpack.c.b16 %v1580, %v1579
  %v1622 = vpack.c.b16 %v1582, %v1581
  %v1623 = vpack.c.b16 %v1584, %v1583
  %v1624 = vpack.c.b16 %v1586, %v1585
  %v1625 = vpack.c.b16 %v1588, %v1587
  %v1626 = vpack.c.b16 %v1590, %v1589
  %v1627 = vpack.c.b16 %v1592, %v1591
  %v1628 = vpack.c.b16 %v1594, %v1593
  %v1629 = vpack.c.b16 %v1596, %v1595
  %v1630 = vpack.c.b16 %v1598, %v1597
  %v1631 = vpack.c.b16 %v1600, %v1599
  %v1632 = vpack.c.b16 %v1602, %v1601
  %v1633 = vpack.c.b16 %v1604, %v1603
  %v1634 = vpack.c.b16 %v1606, %v1605
  %v1635 = vpack.c.b16 %v1608, %v1607
  %v1636 = vpack.c.b16 %v1610, %v1609
  %v1637 = vpack.c.b16 %v1612, %v1611
  %v1638 = vpack.c.b16 %v1613, %v1613
  %1664 = vmatprep.subr.bf16.mxu0 0
  %1665 = vmatpush1.bf16.msra.mxu0 %v260
  %1666 = vmatprep.subr.bf16.mxu0 0
  %1667 = vmatpush1.bf16.msra.mxu0 %v261
  %1668 = vmatprep.subr.bf16.mxu0 0
  %1669 = vmatpush1.bf16.msra.mxu0 %v262
  %1670 = vmatprep.subr.bf16.mxu0 0
  %1671 = vmatpush1.bf16.msra.mxu0 %v263
  %1672 = vmatprep.subr.bf16.mxu0 0
  %1673 = vmatpush1.bf16.msra.mxu0 %v264
  %1674 = vmatprep.subr.bf16.mxu0 0
  %1675 = vmatpush1.bf16.msra.mxu0 %v265
  %1676 = vmatprep.subr.bf16.mxu0 0
  %1677 = vmatpush1.bf16.msra.mxu0 %v266
  %1678 = vmatprep.subr.bf16.mxu0 0
  %1679 = vmatpush1.bf16.msra.mxu0 %v267
  %1680 = vmatprep.subr.bf16.mxu0 0
  %1681 = vmatpush1.bf16.msra.mxu0 0
  %1682 = vmatprep.subr.bf16.mxu0 0
  %1683 = vmatpush1.bf16.msra.mxu0 0
  %1684 = vmatprep.subr.bf16.mxu0 0
  %1685 = vmatpush1.bf16.msra.mxu0 0
  %1686 = vmatprep.subr.bf16.mxu0 0
  %1687 = vmatpush1.bf16.msra.mxu0 0
  %1688 = vmatprep.subr.bf16.mxu0 0
  %1689 = vmatpush1.bf16.msra.mxu0 0
  %1690 = vmatprep.subr.bf16.mxu0 0
  %1691 = vmatpush1.bf16.msra.mxu0 0
  %1692 = vmatprep.subr.bf16.mxu0 0
  %1693 = vmatpush1.bf16.msra.mxu0 0
  %1694 = vmatprep.subr.bf16.mxu0 0
  %1695 = vmatpush1.bf16.msra.mxu0 0
  %1696 = vmatprep.mubr.bf16.mxu0 0
  %1697 = vmatmul.mubr.bf16.gmra.mrb[0].mxu0 %v1614
  %v1698 = vpop.f32.mrb[0].mxu0
  %v1699 = vadd.f32 0.0, %v1698
  %v1700 = vpop.f32.mrb[0].mxu0
  %v1701 = vpop.f32.mrb[0].mxu0
  %v1702 = vadd.f32 0.0, %v1701
  %v1703 = vpop.f32.mrb[0].mxu0
  %1704 = vmatprep.mubr.bf16.mxu0 0
  %1705 = vmatmul.mubr.bf16.gmra.mrb[0].mxu0 %v1615
  %v1706 = vpop.f32.mrb[0].mxu0
  %v1707 = vadd.f32 0.0, %v1706
  %v1708 = vpop.f32.mrb[0].mxu0
  %v1709 = vpop.f32.mrb[0].mxu0
  %v1710 = vadd.f32 0.0, %v1709
  %v1711 = vpop.f32.mrb[0].mxu0
  %1712 = vmatprep.mubr.bf16.mxu0 0
  %1713 = vmatmul.mubr.bf16.gmra.mrb[0].mxu0 %v1616
  %v1714 = vpop.f32.mrb[0].mxu0
  %v1715 = vadd.f32 0.0, %v1714
  %v1716 = vpop.f32.mrb[0].mxu0
  %v1717 = vpop.f32.mrb[0].mxu0
  %v1718 = vadd.f32 0.0, %v1717
  %v1719 = vpop.f32.mrb[0].mxu0
  %1720 = vmatprep.mubr.bf16.mxu0 0
  %1721 = vmatmul.mubr.bf16.gmra.mrb[0].mxu0 %v1617
  %v1722 = vpop.f32.mrb[0].mxu0
  %v1723 = vadd.f32 0.0, %v1722
  %v1724 = vpop.f32.mrb[0].mxu0
  %v1725 = vpop.f32.mrb[0].mxu0
  %v1726 = vadd.f32 0.0, %v1725
  %v1727 = vpop.f32.mrb[0].mxu0
  %1728 = vmatprep.mubr.bf16.mxu0 0
  %1729 = vmatmul.mubr.bf16.gmra.mrb[0].mxu0 %v1618
  %v1730 = vpop.f32.mrb[0].mxu0
  %v1731 = vadd.f32 0.0, %v1730
  %v1732 = vpop.f32.mrb[0].mxu0
  %v1733 = vpop.f32.mrb[0].mxu0
  %v1734 = vadd.f32 0.0, %v1733
  %v1735 = vpop.f32.mrb[0].mxu0
  %1736 = vmatprep.mubr.bf16.mxu0 0
  %1737 = vmatmul.mubr.bf16.gmra.mrb[0].mxu0 %v1619
  %v1738 = vpop.f32.mrb[0].mxu0
  %v1739 = vadd.f32 0.0, %v1738
  %v1740 = vpop.f32.mrb[0].mxu0
  %v1741 = vpop.f32.mrb[0].mxu0
  %v1742 = vadd.f32 0.0, %v1741
  %v1743 = vpop.f32.mrb[0].mxu0
  %1744 = vmatprep.mubr.bf16.mxu0 0
  %1745 = vmatmul.mubr.bf16.gmra.mrb[0].mxu0 %v1620
  %v1746 = vpop.f32.mrb[0].mxu0
  %v1747 = vadd.f32 0.0, %v1746
  %v1748 = vpop.f32.mrb[0].mxu0
  %v1749 = vpop.f32.mrb[0].mxu0
  %v1750 = vadd.f32 0.0, %v1749
  %v1751 = vpop.f32.mrb[0].mxu0
  %1752 = vmatprep.mubr.bf16.mxu0 0
  %1753 = vmatmul.mubr.bf16.gmra.mrb[0].mxu0 %v1621
  %v1754 = vpop.f32.mrb[0].mxu0
  %v1755 = vadd.f32 0.0, %v1754
  %v1756 = vpop.f32.mrb[0].mxu0
  %v1757 = vpop.f32.mrb[0].mxu0
  %v1758 = vadd.f32 0.0, %v1757
  %v1759 = vpop.f32.mrb[0].mxu0
  %1760 = vmatprep.mubr.bf16.mxu0 0
  %1761 = vmatmul.mubr.bf16.gmra.mrb[0].mxu0 %v1622
  %v1762 = vpop.f32.mrb[0].mxu0
  %v1763 = vadd.f32 0.0, %v1762
  %v1764 = vpop.f32.mrb[0].mxu0
  %v1765 = vpop.f32.mrb[0].mxu0
  %v1766 = vadd.f32 0.0, %v1765
  %v1767 = vpop.f32.mrb[0].mxu0
  %1768 = vmatprep.mubr.bf16.mxu0 0
  %1769 = vmatmul.mubr.bf16.gmra.mrb[0].mxu0 %v1623
  %v1770 = vpop.f32.mrb[0].mxu0
  %v1771 = vadd.f32 0.0, %v1770
  %v1772 = vpop.f32.mrb[0].mxu0
  %v1773 = vpop.f32.mrb[0].mxu0
  %v1774 = vadd.f32 0.0, %v1773
  %v1775 = vpop.f32.mrb[0].mxu0
  %1776 = vmatprep.mubr.bf16.mxu0 0
  %1777 = vmatmul.mubr.bf16.gmra.mrb[0].mxu0 %v1624
  %v1778 = vpop.f32.mrb[0].mxu0
  %v1779 = vadd.f32 0.0, %v1778
  %v1780 = vpop.f32.mrb[0].mxu0
  %v1781 = vpop.f32.mrb[0].mxu0
  %v1782 = vadd.f32 0.0, %v1781
  %v1783 = vpop.f32.mrb[0].mxu0
  %1784 = vmatprep.mubr.bf16.mxu0 0
  %1785 = vmatmul.mubr.bf16.gmra.mrb[0].mxu0 %v1625
  %v1786 = vpop.f32.mrb[0].mxu0
  %v1787 = vadd.f32 0.0, %v1786
  %v1788 = vpop.f32.mrb[0].mxu0
  %v1789 = vpop.f32.mrb[0].mxu0
  %v1790 = vadd.f32 0.0, %v1789
  %v1791 = vpop.f32.mrb[0].mxu0
  %1792 = vmatprep.mubr.bf16.mxu0 0
  %1793 = vmatmul.mubr.bf16.gmra.mrb[0].mxu0 %v1626
  %v1794 = vpop.f32.mrb[0].mxu0
  %v1795 = vadd.f32 0.0, %v1794
  %v1796 = vpop.f32.mrb[0].mxu0
  %v1797 = vpop.f32.mrb[0].mxu0
  %v1798 = vadd.f32 0.0, %v1797
  %v1799 = vpop.f32.mrb[0].mxu0
  %1800 = vmatprep.mubr.bf16.mxu0 0
  %1801 = vmatmul.mubr.bf16.gmra.mrb[0].mxu0 %v1627
  %v1802 = vpop.f32.mrb[0].mxu0
  %v1803 = vadd.f32 0.0, %v1802
  %v1804 = vpop.f32.mrb[0].mxu0
  %v1805 = vpop.f32.mrb[0].mxu0
  %v1806 = vadd.f32 0.0, %v1805
  %v1807 = vpop.f32.mrb[0].mxu0
  %1808 = vmatprep.mubr.bf16.mxu0 0
  %1809 = vmatmul.mubr.bf16.gmra.mrb[0].mxu0 %v1628
  %v1810 = vpop.f32.mrb[0].mxu0
  %v1811 = vadd.f32 0.0, %v1810
  %v1812 = vpop.f32.mrb[0].mxu0
  %v1813 = vpop.f32.mrb[0].mxu0
  %v1814 = vadd.f32 0.0, %v1813
  %v1815 = vpop.f32.mrb[0].mxu0
  %1816 = vmatprep.mubr.bf16.mxu0 0
  %1817 = vmatmul.mubr.bf16.gmra.mrb[0].mxu0 %v1629
  %v1818 = vpop.f32.mrb[0].mxu0
  %v1819 = vadd.f32 0.0, %v1818
  %v1820 = vpop.f32.mrb[0].mxu0
  %v1821 = vpop.f32.mrb[0].mxu0
  %v1822 = vadd.f32 0.0, %v1821
  %v1823 = vpop.f32.mrb[0].mxu0
  %1824 = vmatprep.mubr.bf16.mxu0 0
  %1825 = vmatmul.mubr.bf16.gmra.mrb[0].mxu0 %v1630
  %v1826 = vpop.f32.mrb[0].mxu0
  %v1827 = vadd.f32 0.0, %v1826
  %v1828 = vpop.f32.mrb[0].mxu0
  %v1829 = vpop.f32.mrb[0].mxu0
  %v1830 = vadd.f32 0.0, %v1829
  %v1831 = vpop.f32.mrb[0].mxu0
  %1832 = vmatprep.mubr.bf16.mxu0 0
  %1833 = vmatmul.mubr.bf16.gmra.mrb[0].mxu0 %v1631
  %v1834 = vpop.f32.mrb[0].mxu0
  %v1835 = vadd.f32 0.0, %v1834
  %v1836 = vpop.f32.mrb[0].mxu0
  %v1837 = vpop.f32.mrb[0].mxu0
  %v1838 = vadd.f32 0.0, %v1837
  %v1839 = vpop.f32.mrb[0].mxu0
  %1840 = vmatprep.mubr.bf16.mxu0 0
  %1841 = vmatmul.mubr.bf16.gmra.mrb[0].mxu0 %v1632
  %v1842 = vpop.f32.mrb[0].mxu0
  %v1843 = vadd.f32 0.0, %v1842
  %v1844 = vpop.f32.mrb[0].mxu0
  %v1845 = vpop.f32.mrb[0].mxu0
  %v1846 = vadd.f32 0.0, %v1845
  %v1847 = vpop.f32.mrb[0].mxu0
  %1848 = vmatprep.mubr.bf16.mxu0 0
  %1849 = vmatmul.mubr.bf16.gmra.mrb[0].mxu0 %v1633
  %v1850 = vpop.f32.mrb[0].mxu0
  %v1851 = vadd.f32 0.0, %v1850
  %v1852 = vpop.f32.mrb[0].mxu0
  %v1853 = vpop.f32.mrb[0].mxu0
  %v1854 = vadd.f32 0.0, %v1853
  %v1855 = vpop.f32.mrb[0].mxu0
  %1856 = vmatprep.mubr.bf16.mxu0 0
  %1857 = vmatmul.mubr.bf16.gmra.mrb[0].mxu0 %v1634
  %v1858 = vpop.f32.mrb[0].mxu0
  %v1859 = vadd.f32 0.0, %v1858
  %v1860 = vpop.f32.mrb[0].mxu0
  %v1861 = vpop.f32.mrb[0].mxu0
  %v1862 = vadd.f32 0.0, %v1861
  %v1863 = vpop.f32.mrb[0].mxu0
  %1864 = vmatprep.mubr.bf16.mxu0 0
  %1865 = vmatmul.mubr.bf16.gmra.mrb[0].mxu0 %v1635
  %v1866 = vpop.f32.mrb[0].mxu0
  %v1867 = vadd.f32 0.0, %v1866
  %v1868 = vpop.f32.mrb[0].mxu0
  %v1869 = vpop.f32.mrb[0].mxu0
  %v1870 = vadd.f32 0.0, %v1869
  %v1871 = vpop.f32.mrb[0].mxu0
  %1872 = vmatprep.mubr.bf16.mxu0 0
  %1873 = vmatmul.mubr.bf16.gmra.mrb[0].mxu0 %v1636
  %v1874 = vpop.f32.mrb[0].mxu0
  %v1875 = vadd.f32 0.0, %v1874
  %v1876 = vpop.f32.mrb[0].mxu0
  %v1877 = vpop.f32.mrb[0].mxu0
  %v1878 = vadd.f32 0.0, %v1877
  %v1879 = vpop.f32.mrb[0].mxu0
  %1880 = vmatprep.mubr.bf16.mxu0 0
  %1881 = vmatmul.mubr.bf16.gmra.mrb[0].mxu0 %v1637
  %v1882 = vpop.f32.mrb[0].mxu0
  %v1883 = vadd.f32 0.0, %v1882
  %v1884 = vpop.f32.mrb[0].mxu0
  %v1885 = vpop.f32.mrb[0].mxu0
  %v1886 = vadd.f32 0.0, %v1885
  %v1887 = vpop.f32.mrb[0].mxu0
  %1888 = vmatprep.mubr.bf16.mxu0 0
  %1889 = vmatmul.mubr.bf16.gmra.mrb[0].mxu0 %v1638
  %v1890 = vpop.f32.mrb[0].mxu0
  %v1891 = vadd.f32 0.0, %v1890
  %v1892 = vpop.f32.mrb[0].mxu0
  %v1893 = vpop.f32.mrb[0].mxu0
  %v1894 = vpop.f32.mrb[0].mxu0
  %1895 = vdwg.mxu0
  %v1896 = vmax.f32 %v1417, %v1699
  %v1897 = vmax.f32 %v1418, %v1702
  %v1898 = vmax.f32 %v1419, %v1707
  %v1899 = vmax.f32 %v1420, %v1710
  %v1900 = vmax.f32 %v1421, %v1715
  %v1901 = vmax.f32 %v1422, %v1718
  %v1902 = vmax.f32 %v1423, %v1723
  %v1903 = vmax.f32 %v1424, %v1726
  %v1904 = vmax.f32 %v1425, %v1731
  %v1905 = vmax.f32 %v1426, %v1734
  %v1906 = vmax.f32 %v1427, %v1739
  %v1907 = vmax.f32 %v1428, %v1742
  %v1908 = vmax.f32 %v1429, %v1747
  %v1909 = vmax.f32 %v1430, %v1750
  %v1910 = vmax.f32 %v1431, %v1755
  %v1911 = vmax.f32 %v1432, %v1758
  %v1912 = vmax.f32 %v1433, %v1763
  %v1913 = vmax.f32 %v1434, %v1766
  %v1914 = vmax.f32 %v1435, %v1771
  %v1915 = vmax.f32 %v1436, %v1774
  %v1916 = vmax.f32 %v1437, %v1779
  %v1917 = vmax.f32 %v1438, %v1782
  %v1918 = vmax.f32 %v1439, %v1787
  %v1919 = vmax.f32 %v1440, %v1790
  %v1920 = vmax.f32 %v1441, %v1795
  %v1921 = vmax.f32 %v1442, %v1798
  %v1922 = vmax.f32 %v1443, %v1803
  %v1923 = vmax.f32 %v1444, %v1806
  %v1924 = vmax.f32 %v1445, %v1811
  %v1925 = vmax.f32 %v1446, %v1814
  %v1926 = vmax.f32 %v1447, %v1819
  %v1927 = vmax.f32 %v1448, %v1822
  %v1928 = vmax.f32 %v1449, %v1827
  %v1929 = vmax.f32 %v1450, %v1830
  %v1930 = vmax.f32 %v1451, %v1835
  %v1931 = vmax.f32 %v1452, %v1838
  %v1932 = vmax.f32 %v1453, %v1843
  %v1933 = vmax.f32 %v1454, %v1846
  %v1934 = vmax.f32 %v1455, %v1851
  %v1935 = vmax.f32 %v1456, %v1854
  %v1936 = vmax.f32 %v1457, %v1859
  %v1937 = vmax.f32 %v1458, %v1862
  %v1938 = vmax.f32 %v1459, %v1867
  %v1939 = vmax.f32 %v1460, %v1870
  %v1940 = vmax.f32 %v1461, %v1875
  %v1941 = vmax.f32 %v1462, %v1878
  %v1942 = vmax.f32 %v1463, %v1883
  %v1943 = vmax.f32 %v1464, %v1886
  %v1944 = vmax.f32 %v1465, %v1891
  %v1945 = vld [vmem:[%s2] sm:$0x1]
  %v1947 = vlaneseq
  %v1948 = vshrl.u32 %v1947, 7
  %v1949 = vsub.s32 0, %v1948
  %v1950 = vrot.slane %v1945, %v1949
  %v1952 = vadd.f32 %v1896, %v1950
  %v1953 = vadd.f32 %v1897, %v1950
  %v1954 = vadd.f32 %v1898, %v1950
  %v1955 = vadd.f32 %v1899, %v1950
  %v1956 = vadd.f32 %v1900, %v1950
  %v1957 = vadd.f32 %v1901, %v1950
  %v1958 = vadd.f32 %v1902, %v1950
  %v1959 = vadd.f32 %v1903, %v1950
  %v1960 = vadd.f32 %v1904, %v1950
  %v1961 = vadd.f32 %v1905, %v1950
  %v1962 = vadd.f32 %v1906, %v1950
  %v1963 = vadd.f32 %v1907, %v1950
  %v1964 = vadd.f32 %v1908, %v1950
  %v1965 = vadd.f32 %v1909, %v1950
  %v1966 = vadd.f32 %v1910, %v1950
  %v1967 = vadd.f32 %v1911, %v1950
  %v1968 = vadd.f32 %v1912, %v1950
  %v1969 = vadd.f32 %v1913, %v1950
  %v1970 = vadd.f32 %v1914, %v1950
  %v1971 = vadd.f32 %v1915, %v1950
  %v1972 = vadd.f32 %v1916, %v1950
  %v1973 = vadd.f32 %v1917, %v1950
  %v1974 = vadd.f32 %v1918, %v1950
  %v1975 = vadd.f32 %v1919, %v1950
  %v1976 = vadd.f32 %v1920, %v1950
  %v1977 = vadd.f32 %v1921, %v1950
  %v1978 = vadd.f32 %v1922, %v1950
  %v1979 = vadd.f32 %v1923, %v1950
  %v1980 = vadd.f32 %v1924, %v1950
  %v1981 = vadd.f32 %v1925, %v1950
  %v1982 = vadd.f32 %v1926, %v1950
  %v1983 = vadd.f32 %v1927, %v1950
  %v1984 = vadd.f32 %v1928, %v1950
  %v1985 = vadd.f32 %v1929, %v1950
  %v1986 = vadd.f32 %v1930, %v1950
  %v1987 = vadd.f32 %v1931, %v1950
  %v1988 = vadd.f32 %v1932, %v1950
  %v1989 = vadd.f32 %v1933, %v1950
  %v1990 = vadd.f32 %v1934, %v1950
  %v1991 = vadd.f32 %v1935, %v1950
  %v1992 = vadd.f32 %v1936, %v1950
  %v1993 = vadd.f32 %v1937, %v1950
  %v1994 = vadd.f32 %v1938, %v1950
  %v1995 = vadd.f32 %v1939, %v1950
  %v1996 = vadd.f32 %v1940, %v1950
  %v1997 = vadd.f32 %v1941, %v1950
  %v1998 = vadd.f32 %v1942, %v1950
  %v1999 = vadd.f32 %v1943, %v1950
  %v2000 = vadd.f32 %v1944, %v1950
  %v2001 = vmax.f32 %v1952, 0.0
  %v2002 = vmax.f32 %v1953, 0.0
  %v2003 = vmax.f32 %v1954, 0.0
  %v2004 = vmax.f32 %v1955, 0.0
  %v2005 = vmax.f32 %v1956, 0.0
  %v2006 = vmax.f32 %v1957, 0.0
  %v2007 = vmax.f32 %v1958, 0.0
  %v2008 = vmax.f32 %v1959, 0.0
  %v2009 = vmax.f32 %v1960, 0.0
  %v2010 = vmax.f32 %v1961, 0.0
  %v2011 = vmax.f32 %v1962, 0.0
  %v2012 = vmax.f32 %v1963, 0.0
  %v2013 = vmax.f32 %v1964, 0.0
  %v2014 = vmax.f32 %v1965, 0.0
  %v2015 = vmax.f32 %v1966, 0.0
  %v2016 = vmax.f32 %v1967, 0.0
  %v2017 = vmax.f32 %v1968, 0.0
  %v2018 = vmax.f32 %v1969, 0.0
  %v2019 = vmax.f32 %v1970, 0.0
  %v2020 = vmax.f32 %v1971, 0.0
  %v2021 = vmax.f32 %v1972, 0.0
  %v2022 = vmax.f32 %v1973, 0.0
  %v2023 = vmax.f32 %v1974, 0.0
  %v2024 = vmax.f32 %v1975, 0.0
  %v2025 = vmax.f32 %v1976, 0.0
  %v2026 = vmax.f32 %v1977, 0.0
  %v2027 = vmax.f32 %v1978, 0.0
  %v2028 = vmax.f32 %v1979, 0.0
  %v2029 = vmax.f32 %v1980, 0.0
  %v2030 = vmax.f32 %v1981, 0.0
  %v2031 = vmax.f32 %v1982, 0.0
  %v2032 = vmax.f32 %v1983, 0.0
  %v2033 = vmax.f32 %v1984, 0.0
  %v2034 = vmax.f32 %v1985, 0.0
  %v2035 = vmax.f32 %v1986, 0.0
  %v2036 = vmax.f32 %v1987, 0.0
  %v2037 = vmax.f32 %v1988, 0.0
  %v2038 = vmax.f32 %v1989, 0.0
  %v2039 = vmax.f32 %v1990, 0.0
  %v2040 = vmax.f32 %v1991, 0.0
  %v2041 = vmax.f32 %v1992, 0.0
  %v2042 = vmax.f32 %v1993, 0.0
  %v2043 = vmax.f32 %v1994, 0.0
  %v2044 = vmax.f32 %v1995, 0.0
  %v2045 = vmax.f32 %v1996, 0.0
  %v2046 = vmax.f32 %v1997, 0.0
  %v2047 = vmax.f32 %v1998, 0.0
  %v2048 = vmax.f32 %v1999, 0.0
  %v2049 = vmax.f32 %v2000, 0.0
  %v2050 = vpack.c.bf16 %v2002, %v2001
  %v2051 = vpack.c.bf16 %v2004, %v2003
  %v2052 = vpack.c.bf16 %v2006, %v2005
  %v2053 = vpack.c.bf16 %v2008, %v2007
  %v2054 = vpack.c.bf16 %v2010, %v2009
  %v2055 = vpack.c.bf16 %v2012, %v2011
  %v2056 = vpack.c.bf16 %v2014, %v2013
  %v2057 = vpack.c.bf16 %v2016, %v2015
  %v2058 = vpack.c.bf16 %v2018, %v2017
  %v2059 = vpack.c.bf16 %v2020, %v2019
  %v2060 = vpack.c.bf16 %v2022, %v2021
  %v2061 = vpack.c.bf16 %v2024, %v2023
  %v2062 = vpack.c.bf16 %v2026, %v2025
  %v2063 = vpack.c.bf16 %v2028, %v2027
  %v2064 = vpack.c.bf16 %v2030, %v2029
  %v2065 = vpack.c.bf16 %v2032, %v2031
  %v2066 = vpack.c.bf16 %v2034, %v2033
  %v2067 = vpack.c.bf16 %v2036, %v2035
  %v2068 = vpack.c.bf16 %v2038, %v2037
  %v2069 = vpack.c.bf16 %v2040, %v2039
  %v2070 = vpack.c.bf16 %v2042, %v2041
  %v2071 = vpack.c.bf16 %v2044, %v2043
  %v2072 = vpack.c.bf16 %v2046, %v2045
  %v2073 = vpack.c.bf16 %v2048, %v2047
  %v2074 = vpack.c.bf16 %v2049, %v2049
  %v2100 = vunpack.c.l.b16 %v2050
  %v2101 = vunpack.c.h.b16 %v2050
  %v2102 = vunpack.c.l.b16 %v2051
  %v2103 = vunpack.c.h.b16 %v2051
  %v2104 = vunpack.c.l.b16 %v2052
  %v2105 = vunpack.c.h.b16 %v2052
  %v2106 = vunpack.c.l.b16 %v2053
  %v2107 = vunpack.c.h.b16 %v2053
  %v2108 = vunpack.c.l.b16 %v2054
  %v2109 = vunpack.c.h.b16 %v2054
  %v2110 = vunpack.c.l.b16 %v2055
  %v2111 = vunpack.c.h.b16 %v2055
  %v2112 = vunpack.c.l.b16 %v2056
  %v2113 = vunpack.c.h.b16 %v2056
  %v2114 = vunpack.c.l.b16 %v2057
  %v2115 = vunpack.c.h.b16 %v2057
  %v2116 = vunpack.c.l.b16 %v2058
  %v2117 = vunpack.c.h.b16 %v2058
  %v2118 = vunpack.c.l.b16 %v2059
  %v2119 = vunpack.c.h.b16 %v2059
  %v2120 = vunpack.c.l.b16 %v2060
  %v2121 = vunpack.c.h.b16 %v2060
  %v2122 = vunpack.c.l.b16 %v2061
  %v2123 = vunpack.c.h.b16 %v2061
  %v2124 = vunpack.c.l.b16 %v2062
  %v2125 = vunpack.c.h.b16 %v2062
  %v2126 = vunpack.c.l.b16 %v2063
  %v2127 = vunpack.c.h.b16 %v2063
  %v2128 = vunpack.c.l.b16 %v2064
  %v2129 = vunpack.c.h.b16 %v2064
  %v2130 = vunpack.c.l.b16 %v2065
  %v2131 = vunpack.c.h.b16 %v2065
  %v2132 = vunpack.c.l.b16 %v2066
  %v2133 = vunpack.c.h.b16 %v2066
  %v2134 = vunpack.c.l.b16 %v2067
  %v2135 = vunpack.c.h.b16 %v2067
  %v2136 = vunpack.c.l.b16 %v2068
  %v2137 = vunpack.c.h.b16 %v2068
  %v2138 = vunpack.c.l.b16 %v2069
  %v2139 = vunpack.c.h.b16 %v2069
  %v2140 = vunpack.c.l.b16 %v2070
  %v2141 = vunpack.c.h.b16 %v2070
  %v2142 = vunpack.c.l.b16 %v2071
  %v2143 = vunpack.c.h.b16 %v2071
  %v2144 = vunpack.c.l.b16 %v2072
  %v2145 = vunpack.c.h.b16 %v2072
  %v2146 = vunpack.c.l.b16 %v2073
  %v2147 = vunpack.c.h.b16 %v2073
  %v2148 = vunpack.c.l.b16 %v2074
  %v2149 = vpack.c.b16 %v2100, %v2100
  %v2150 = vpack.c.b16 %v2101, %v2101
  %v2151 = vpack.c.b16 %v2102, %v2102
  %v2152 = vpack.c.b16 %v2103, %v2103
  %v2153 = vpack.c.b16 %v2104, %v2104
  %v2154 = vpack.c.b16 %v2105, %v2105
  %v2155 = vpack.c.b16 %v2106, %v2106
  %v2156 = vpack.c.b16 %v2107, %v2107
  %v2157 = vpack.c.b16 %v2108, %v2108
  %v2158 = vpack.c.b16 %v2109, %v2109
  %v2159 = vpack.c.b16 %v2110, %v2110
  %v2160 = vpack.c.b16 %v2111, %v2111
  %v2161 = vpack.c.b16 %v2112, %v2112
  %v2162 = vpack.c.b16 %v2113, %v2113
  %v2163 = vpack.c.b16 %v2114, %v2114
  %v2164 = vpack.c.b16 %v2115, %v2115
  %v2165 = vpack.c.b16 %v2116, %v2116
  %v2166 = vpack.c.b16 %v2117, %v2117
  %v2167 = vpack.c.b16 %v2118, %v2118
  %v2168 = vpack.c.b16 %v2119, %v2119
  %v2169 = vpack.c.b16 %v2120, %v2120
  %v2170 = vpack.c.b16 %v2121, %v2121
  %v2171 = vpack.c.b16 %v2122, %v2122
  %v2172 = vpack.c.b16 %v2123, %v2123
  %v2173 = vpack.c.b16 %v2124, %v2124
  %v2174 = vpack.c.b16 %v2125, %v2125
  %v2175 = vpack.c.b16 %v2126, %v2126
  %v2176 = vpack.c.b16 %v2127, %v2127
  %v2177 = vpack.c.b16 %v2128, %v2128
  %v2178 = vpack.c.b16 %v2129, %v2129
  %v2179 = vpack.c.b16 %v2130, %v2130
  %v2180 = vpack.c.b16 %v2131, %v2131
  %v2181 = vpack.c.b16 %v2132, %v2132
  %v2182 = vpack.c.b16 %v2133, %v2133
  %v2183 = vpack.c.b16 %v2134, %v2134
  %v2184 = vpack.c.b16 %v2135, %v2135
  %v2185 = vpack.c.b16 %v2136, %v2136
  %v2186 = vpack.c.b16 %v2137, %v2137
  %v2187 = vpack.c.b16 %v2138, %v2138
  %v2188 = vpack.c.b16 %v2139, %v2139
  %v2189 = vpack.c.b16 %v2140, %v2140
  %v2190 = vpack.c.b16 %v2141, %v2141
  %v2191 = vpack.c.b16 %v2142, %v2142
  %v2192 = vpack.c.b16 %v2143, %v2143
  %v2193 = vpack.c.b16 %v2144, %v2144
  %v2194 = vpack.c.b16 %v2145, %v2145
  %v2195 = vpack.c.b16 %v2146, %v2146
  %v2196 = vpack.c.b16 %v2147, %v2147
  %v2197 = vpack.c.b16 %v2148, %v2148
  %2247 = vst [vmem:[%s3] sm:$0xf] %v2149
  %2248 = vst [vmem:[%s3 + $0x4] sm:$0xf] %v2150
  %2249 = vst [vmem:[%s3 + $0x8] sm:$0xf] %v2151
  %2250 = vst [vmem:[%s3 + $0xc] sm:$0xf] %v2152
  %2251 = vst [vmem:[%s3 + $0x10] sm:$0xf] %v2153
  %2252 = vst [vmem:[%s3 + $0x14] sm:$0xf] %v2154
  %2253 = vst [vmem:[%s3 + $0x18] sm:$0xf] %v2155
  %2254 = vst [vmem:[%s3 + $0x1c] sm:$0xf] %v2156
  %2255 = vst [vmem:[%s3 + $0x20] sm:$0xf] %v2157
  %2256 = vst [vmem:[%s3 + $0x24] sm:$0xf] %v2158
  %2257 = vst [vmem:[%s3 + $0x28] sm:$0xf] %v2159
  %2258 = vst [vmem:[%s3 + $0x2c] sm:$0xf] %v2160
  %2259 = vst [vmem:[%s3 + $0x30] sm:$0xf] %v2161
  %2260 = vst [vmem:[%s3 + $0x34] sm:$0xf] %v2162
  %2261 = vst [vmem:[%s3 + $0x38] sm:$0xf] %v2163
  %2262 = vst [vmem:[%s3 + $0x3c] sm:$0xf] %v2164
  %2263 = vst [vmem:[%s3 + $0x40] sm:$0xf] %v2165
  %2264 = vst [vmem:[%s3 + $0x44] sm:$0xf] %v2166
  %2265 = vst [vmem:[%s3 + $0x48] sm:$0xf] %v2167
  %2266 = vst [vmem:[%s3 + $0x4c] sm:$0xf] %v2168
  %2267 = vst [vmem:[%s3 + $0x50] sm:$0xf] %v2169
  %2268 = vst [vmem:[%s3 + $0x54] sm:$0xf] %v2170
  %2269 = vst [vmem:[%s3 + $0x58] sm:$0xf] %v2171
  %2270 = vst [vmem:[%s3 + $0x5c] sm:$0xf] %v2172
  %2271 = vst [vmem:[%s3 + $0x60] sm:$0xf] %v2173
  %2272 = vst [vmem:[%s3 + $0x64] sm:$0xf] %v2174
  %2273 = vst [vmem:[%s3 + $0x68] sm:$0xf] %v2175
  %2274 = vst [vmem:[%s3 + $0x6c] sm:$0xf] %v2176
  %2275 = vst [vmem:[%s3 + $0x70] sm:$0xf] %v2177
  %2276 = vst [vmem:[%s3 + $0x74] sm:$0xf] %v2178
  %2277 = vst [vmem:[%s3 + $0x78] sm:$0xf] %v2179
  %2278 = vst [vmem:[%s3 + $0x7c] sm:$0xf] %v2180
  %2279 = vst [vmem:[%s3 + $0x80] sm:$0xf] %v2181
  %2280 = vst [vmem:[%s3 + $0x84] sm:$0xf] %v2182
  %2281 = vst [vmem:[%s3 + $0x88] sm:$0xf] %v2183
  %2282 = vst [vmem:[%s3 + $0x8c] sm:$0xf] %v2184
  %2283 = vst [vmem:[%s3 + $0x90] sm:$0xf] %v2185
  %2284 = vst [vmem:[%s3 + $0x94] sm:$0xf] %v2186
  %2285 = vst [vmem:[%s3 + $0x98] sm:$0xf] %v2187
  %2286 = vst [vmem:[%s3 + $0x9c] sm:$0xf] %v2188
  %2287 = vst [vmem:[%s3 + $0xa0] sm:$0xf] %v2189
  %2288 = vst [vmem:[%s3 + $0xa4] sm:$0xf] %v2190
  %2289 = vst [vmem:[%s3 + $0xa8] sm:$0xf] %v2191
  %2290 = vst [vmem:[%s3 + $0xac] sm:$0xf] %v2192
  %2291 = vst [vmem:[%s3 + $0xb0] sm:$0xf] %v2193
  %2292 = vst [vmem:[%s3 + $0xb4] sm:$0xf] %v2194
  %2293 = vst [vmem:[%s3 + $0xb8] sm:$0xf] %v2195
  %2294 = vst [vmem:[%s3 + $0xbc] sm:$0xf] %v2196
  %2295 = vst [vmem:[%s3 + $0xc0] sm:$0xf] %v2197
  // Predicated region
  $region14: #{_lambda_.3} parent=0 // pred_check
    _
  $region15: #{_lambda_.3} parent=0 // pred_check_branch
    %2297 = sbr.rel (0) target = $region17
  $region16: #{_lambda_.3} parent=0 // pred_region
    _
  $region17: #{_lambda_.3} parent=0 // pred_fallthru
    _
  // Predicated region
  $region18: #{_lambda_.3} parent=0 // pred_check
    _
  $region19: #{_lambda_.3} parent=0 // pred_check_branch
    %2299 = sbr.rel (0) target = $region21
  $region20: #{_lambda_.3} parent=0 // pred_region
    _
  $region21: #{_lambda_.3} parent=0 // pred_fallthru
    _

// kernel: _lambda_.4
$region0: #{_lambda_.4}
  #allocation0 [shape = 'u32[]', space=smem, size = 0x4, offset = 0x4, fixed_abs, tag = 'smem constant byte address 0x4 - core index']
  #allocation1 [shape = 'u32[144,128]{1,0:T(1,128)}', space=vmem, size = 0x12000, scoped, tag = 'internal scratch']
  %s0 = inlined_call_operand.vmem [shape: bf16[4,50,256], index: 0, kind: input, shape index: {}]
  %s1 = inlined_call_operand.vmem [shape: bf16[256,128], index: 1, kind: input, shape index: {}]
  %s2 = inlined_call_operand.vmem [shape: f32[1,128], index: 2, kind: input, shape index: {}]
  %s3 = inlined_call_operand.vmem [shape: bf16[50,128], index: 3, kind: output, shape index: {}]
  %s4 = sld [smem:[#allocation0]]
  $region22: #{_lambda_.4} parent=0
    _
  %s6 = ssub.s32 1, %s4
  %s7 = scalar_select 0, %s6, %s4
  // Predicated region
  $region2: #{_lambda_.4} parent=0 // pred_check
    _
  $region3: #{_lambda_.4} parent=0 // pred_check_branch
    %9 = sbr.rel (0) target = $region5
  $region4: #{_lambda_.4} parent=0 // pred_region
    _
  $region5: #{_lambda_.4} parent=0 // pred_fallthru
    _
  // Predicated region
  $region6: #{_lambda_.4} parent=0 // pred_check
    _
  $region7: #{_lambda_.4} parent=0 // pred_check_branch
    %11 = sbr.rel (0) target = $region9
  $region8: #{_lambda_.4} parent=0 // pred_region
    _
  $region9: #{_lambda_.4} parent=0 // pred_fallthru
    _
  // Predicated region
  $region10: #{_lambda_.4} parent=0 // pred_check
    _
  $region11: #{_lambda_.4} parent=0 // pred_check_branch
    %13 = sbr.rel (0) target = $region13
  $region12: #{_lambda_.4} parent=0 // pred_region
    _
  $region13: #{_lambda_.4} parent=0 // pred_fallthru
    _
  %v15 = vld [vmem:[%s1] sm:$0xf]
  %v16 = vld [vmem:[%s1 + $0x4] sm:$0xf]
  %v17 = vld [vmem:[%s1 + $0x8] sm:$0xf]
  %v18 = vld [vmem:[%s1 + $0xc] sm:$0xf]
  %v19 = vld [vmem:[%s1 + $0x10] sm:$0xf]
  %v20 = vld [vmem:[%s1 + $0x14] sm:$0xf]
  %v21 = vld [vmem:[%s1 + $0x18] sm:$0xf]
  %v22 = vld [vmem:[%s1 + $0x1c] sm:$0xf]
  %v23 = vld [vmem:[%s1 + $0x20] sm:$0xf]
  %v24 = vld [vmem:[%s1 + $0x24] sm:$0xf]
  %v25 = vld [vmem:[%s1 + $0x28] sm:$0xf]
  %v26 = vld [vmem:[%s1 + $0x2c] sm:$0xf]
  %v27 = vld [vmem:[%s1 + $0x30] sm:$0xf]
  %v28 = vld [vmem:[%s1 + $0x34] sm:$0xf]
  %v29 = vld [vmem:[%s1 + $0x38] sm:$0xf]
  %v30 = vld [vmem:[%s1 + $0x3c] sm:$0xf]
  %v31 = vld [vmem:[%s1 + $0x40] sm:$0xf]
  %v32 = vld [vmem:[%s1 + $0x44] sm:$0xf]
  %v33 = vld [vmem:[%s1 + $0x48] sm:$0xf]
  %v34 = vld [vmem:[%s1 + $0x4c] sm:$0xf]
  %v35 = vld [vmem:[%s1 + $0x50] sm:$0xf]
  %v36 = vld [vmem:[%s1 + $0x54] sm:$0xf]
  %v37 = vld [vmem:[%s1 + $0x58] sm:$0xf]
  %v38 = vld [vmem:[%s1 + $0x5c] sm:$0xf]
  %v39 = vld [vmem:[%s1 + $0x60] sm:$0xf]
  %v40 = vld [vmem:[%s1 + $0x64] sm:$0xf]
  %v41 = vld [vmem:[%s1 + $0x68] sm:$0xf]
  %v42 = vld [vmem:[%s1 + $0x6c] sm:$0xf]
  %v43 = vld [vmem:[%s1 + $0x70] sm:$0xf]
  %v44 = vld [vmem:[%s1 + $0x74] sm:$0xf]
  %v45 = vld [vmem:[%s1 + $0x78] sm:$0xf]
  %v46 = vld [vmem:[%s1 + $0x7c] sm:$0xf]
  %v47 = vld [vmem:[%s0] sm:$0xff]
  %v48 = vld [vmem:[%s0 + $0x8] sm:$0xff]
  %v49 = vld [vmem:[%s0 + $0x10] sm:$0xff]
  %v50 = vld [vmem:[%s0 + $0x18] sm:$0xff]
  %v51 = vld [vmem:[%s0 + $0x20] sm:$0xff]
  %v52 = vld [vmem:[%s0 + $0x28] sm:$0xff]
  %v53 = vld [vmem:[%s0 + $0x30] sm:$0x11]
  %v61 = vunpack.c.l.b16 %v47
  %v62 = vunpack.c.h.b16 %v47
  %v63 = vunpack.c.l.b16 %v48
  %v64 = vunpack.c.h.b16 %v48
  %v65 = vunpack.c.l.b16 %v49
  %v66 = vunpack.c.h.b16 %v49
  %v67 = vunpack.c.l.b16 %v50
  %v68 = vunpack.c.h.b16 %v50
  %v69 = vunpack.c.l.b16 %v51
  %v70 = vunpack.c.h.b16 %v51
  %v71 = vunpack.c.l.b16 %v52
  %v72 = vunpack.c.h.b16 %v52
  %v73 = vunpack.c.l.b16 %v53
  %v74 = vunpack.c.h.b16 %v53
  %v75 = vpack.c.b16 %v63, %v61
  %v76 = vpack.c.b16 %v64, %v62
  %v77 = vpack.c.b16 %v67, %v65
  %v78 = vpack.c.b16 %v68, %v66
  %v79 = vpack.c.b16 %v71, %v69
  %v80 = vpack.c.b16 %v72, %v70
  %v81 = vpack.c.b16 %v73, %v73
  %v82 = vpack.c.b16 %v74, %v74
  %v123 = vunpack.c.l.b16 %v15
  %v124 = vunpack.c.l.b16 %v16
  %v125 = vunpack.c.l.b16 %v17
  %v126 = vunpack.c.l.b16 %v18
  %v127 = vunpack.c.l.b16 %v19
  %v128 = vunpack.c.l.b16 %v20
  %v129 = vunpack.c.l.b16 %v21
  %v130 = vunpack.c.l.b16 %v22
  %v131 = vunpack.c.l.b16 %v23
  %v132 = vunpack.c.l.b16 %v24
  %v133 = vunpack.c.l.b16 %v25
  %v134 = vunpack.c.l.b16 %v26
  %v135 = vunpack.c.l.b16 %v27
  %v136 = vunpack.c.l.b16 %v28
  %v137 = vunpack.c.l.b16 %v29
  %v138 = vunpack.c.l.b16 %v30
  %v139 = vunpack.c.l.b16 %v31
  %v140 = vunpack.c.l.b16 %v32
  %v141 = vunpack.c.l.b16 %v33
  %v142 = vunpack.c.l.b16 %v34
  %v143 = vunpack.c.l.b16 %v35
  %v144 = vunpack.c.l.b16 %v36
  %v145 = vunpack.c.l.b16 %v37
  %v146 = vunpack.c.l.b16 %v38
  %v147 = vunpack.c.l.b16 %v39
  %v148 = vunpack.c.l.b16 %v40
  %v149 = vunpack.c.l.b16 %v41
  %v150 = vunpack.c.l.b16 %v42
  %v151 = vunpack.c.l.b16 %v43
  %v152 = vunpack.c.l.b16 %v44
  %v153 = vunpack.c.l.b16 %v45
  %v154 = vunpack.c.l.b16 %v46
  %v155 = vpack.c.b16 %v124, %v123
  %v156 = vpack.c.b16 %v126, %v125
  %v157 = vpack.c.b16 %v128, %v127
  %v158 = vpack.c.b16 %v130, %v129
  %v159 = vpack.c.b16 %v132, %v131
  %v160 = vpack.c.b16 %v134, %v133
  %v161 = vpack.c.b16 %v136, %v135
  %v162 = vpack.c.b16 %v138, %v137
  %v163 = vpack.c.b16 %v140, %v139
  %v164 = vpack.c.b16 %v142, %v141
  %v165 = vpack.c.b16 %v144, %v143
  %v166 = vpack.c.b16 %v146, %v145
  %v167 = vpack.c.b16 %v148, %v147
  %v168 = vpack.c.b16 %v150, %v149
  %v169 = vpack.c.b16 %v152, %v151
  %v170 = vpack.c.b16 %v154, %v153
  %187 = vmatprep.subr.bf16.mxu0 0
  %188 = vmatpush1.bf16.msra.mxu0 %v155
  %189 = vmatprep.subr.bf16.mxu0 0
  %190 = vmatpush1.bf16.msra.mxu0 %v156
  %191 = vmatprep.subr.bf16.mxu0 0
  %192 = vmatpush1.bf16.msra.mxu0 %v157
  %193 = vmatprep.subr.bf16.mxu0 0
  %194 = vmatpush1.bf16.msra.mxu0 %v158
  %195 = vmatprep.subr.bf16.mxu0 0
  %196 = vmatpush1.bf16.msra.mxu0 %v159
  %197 = vmatprep.subr.bf16.mxu0 0
  %198 = vmatpush1.bf16.msra.mxu0 %v160
  %199 = vmatprep.subr.bf16.mxu0 0
  %200 = vmatpush1.bf16.msra.mxu0 %v161
  %201 = vmatprep.subr.bf16.mxu0 0
  %202 = vmatpush1.bf16.msra.mxu0 %v162
  %203 = vmatprep.subr.bf16.mxu0 0
  %204 = vmatpush1.bf16.msra.mxu0 %v163
  %205 = vmatprep.subr.bf16.mxu0 0
  %206 = vmatpush1.bf16.msra.mxu0 %v164
  %207 = vmatprep.subr.bf16.mxu0 0
  %208 = vmatpush1.bf16.msra.mxu0 %v165
  %209 = vmatprep.subr.bf16.mxu0 0
  %210 = vmatpush1.bf16.msra.mxu0 %v166
  %211 = vmatprep.subr.bf16.mxu0 0
  %212 = vmatpush1.bf16.msra.mxu0 %v167
  %213 = vmatprep.subr.bf16.mxu0 0
  %214 = vmatpush1.bf16.msra.mxu0 %v168
  %215 = vmatprep.subr.bf16.mxu0 0
  %216 = vmatpush1.bf16.msra.mxu0 %v169
  %217 = vmatprep.subr.bf16.mxu0 0
  %218 = vmatpush1.bf16.msra.mxu0 %v170
  %219 = vmatprep.mubr.bf16.mxu0 %v76
  %220 = vmatmul.mubr.bf16.gmra.mrb[0].mxu0 %v75
  %v221 = vpop.f32.mrb[0].mxu0
  %v222 = vadd.f32 0.0, %v221
  %v223 = vpop.f32.mrb[0].mxu0
  %v224 = vpop.f32.mrb[0].mxu0
  %v225 = vadd.f32 0.0, %v224
  %v226 = vpop.f32.mrb[0].mxu0
  %227 = vmatprep.mubr.bf16.mxu0 %v78
  %228 = vmatmul.mubr.bf16.gmra.mrb[0].mxu0 %v77
  %v229 = vpop.f32.mrb[0].mxu0
  %v230 = vadd.f32 0.0, %v229
  %v231 = vpop.f32.mrb[0].mxu0
  %v232 = vpop.f32.mrb[0].mxu0
  %v233 = vadd.f32 0.0, %v232
  %v234 = vpop.f32.mrb[0].mxu0
  %235 = vmatprep.mubr.bf16.mxu0 %v80
  %236 = vmatmul.mubr.bf16.gmra.mrb[0].mxu0 %v79
  %v237 = vpop.f32.mrb[0].mxu0
  %v238 = vadd.f32 0.0, %v237
  %v239 = vpop.f32.mrb[0].mxu0
  %v240 = vpop.f32.mrb[0].mxu0
  %v241 = vadd.f32 0.0, %v240
  %v242 = vpop.f32.mrb[0].mxu0
  %243 = vmatprep.mubr.bf16.mxu0 %v82
  %244 = vmatmul.mubr.bf16.gmra.mrb[0].mxu0 %v81
  %v245 = vpop.f32.mrb[0].mxu0
  %v246 = vadd.f32 0.0, %v245
  %v247 = vpop.f32.mrb[0].mxu0
  %v248 = vpop.f32.mrb[0].mxu0
  %v249 = vpop.f32.mrb[0].mxu0
  %250 = vdwg.mxu0
  %s251 = scalar_lea.vmem %s0, 56
  %v252 = vld [vmem:[%s251] sm:$0xff]
  %v253 = vld [vmem:[%s251 + $0x8] sm:$0xff]
  %v254 = vld [vmem:[%s251 + $0x10] sm:$0xff]
  %v255 = vld [vmem:[%s251 + $0x18] sm:$0xff]
  %v256 = vld [vmem:[%s251 + $0x20] sm:$0xff]
  %v257 = vld [vmem:[%s251 + $0x28] sm:$0xff]
  %v258 = vld [vmem:[%s251 + $0x30] sm:$0x11]
  %v266 = vunpack.c.l.b16 %v252
  %v267 = vunpack.c.h.b16 %v252
  %v268 = vunpack.c.l.b16 %v253
  %v269 = vunpack.c.h.b16 %v253
  %v270 = vunpack.c.l.b16 %v254
  %v271 = vunpack.c.h.b16 %v254
  %v272 = vunpack.c.l.b16 %v255
  %v273 = vunpack.c.h.b16 %v255
  %v274 = vunpack.c.l.b16 %v256
  %v275 = vunpack.c.h.b16 %v256
  %v276 = vunpack.c.l.b16 %v257
  %v277 = vunpack.c.h.b16 %v257
  %v278 = vunpack.c.l.b16 %v258
  %v279 = vunpack.c.h.b16 %v258
  %v280 = vpack.c.b16 %v268, %v266
  %v281 = vpack.c.b16 %v269, %v267
  %v282 = vpack.c.b16 %v272, %v270
  %v283 = vpack.c.b16 %v273, %v271
  %v284 = vpack.c.b16 %v276, %v274
  %v285 = vpack.c.b16 %v277, %v275
  %v286 = vpack.c.b16 %v278, %v278
  %v287 = vpack.c.b16 %v279, %v279
  %296 = vmatprep.subr.bf16.mxu0 0
  %297 = vmatpush1.bf16.msra.mxu0 %v155
  %298 = vmatprep.subr.bf16.mxu0 0
  %299 = vmatpush1.bf16.msra.mxu0 %v156
  %300 = vmatprep.subr.bf16.mxu0 0
  %301 = vmatpush1.bf16.msra.mxu0 %v157
  %302 = vmatprep.subr.bf16.mxu0 0
  %303 = vmatpush1.bf16.msra.mxu0 %v158
  %304 = vmatprep.subr.bf16.mxu0 0
  %305 = vmatpush1.bf16.msra.mxu0 %v159
  %306 = vmatprep.subr.bf16.mxu0 0
  %307 = vmatpush1.bf16.msra.mxu0 %v160
  %308 = vmatprep.subr.bf16.mxu0 0
  %309 = vmatpush1.bf16.msra.mxu0 %v161
  %310 = vmatprep.subr.bf16.mxu0 0
  %311 = vmatpush1.bf16.msra.mxu0 %v162
  %312 = vmatprep.subr.bf16.mxu0 0
  %313 = vmatpush1.bf16.msra.mxu0 %v163
  %314 = vmatprep.subr.bf16.mxu0 0
  %315 = vmatpush1.bf16.msra.mxu0 %v164
  %316 = vmatprep.subr.bf16.mxu0 0
  %317 = vmatpush1.bf16.msra.mxu0 %v165
  %318 = vmatprep.subr.bf16.mxu0 0
  %319 = vmatpush1.bf16.msra.mxu0 %v166
  %320 = vmatprep.subr.bf16.mxu0 0
  %321 = vmatpush1.bf16.msra.mxu0 %v167
  %322 = vmatprep.subr.bf16.mxu0 0
  %323 = vmatpush1.bf16.msra.mxu0 %v168
  %324 = vmatprep.subr.bf16.mxu0 0
  %325 = vmatpush1.bf16.msra.mxu0 %v169
  %326 = vmatprep.subr.bf16.mxu0 0
  %327 = vmatpush1.bf16.msra.mxu0 %v170
  %328 = vmatprep.mubr.bf16.mxu0 %v281
  %329 = vmatmul.mubr.bf16.gmra.mrb[0].mxu0 %v280
  %v330 = vpop.f32.mrb[0].mxu0
  %v331 = vadd.f32 0.0, %v330
  %v332 = vpop.f32.mrb[0].mxu0
  %v333 = vpop.f32.mrb[0].mxu0
  %v334 = vadd.f32 0.0, %v333
  %v335 = vpop.f32.mrb[0].mxu0
  %336 = vmatprep.mubr.bf16.mxu0 %v283
  %337 = vmatmul.mubr.bf16.gmra.mrb[0].mxu0 %v282
  %v338 = vpop.f32.mrb[0].mxu0
  %v339 = vadd.f32 0.0, %v338
  %v340 = vpop.f32.mrb[0].mxu0
  %v341 = vpop.f32.mrb[0].mxu0
  %v342 = vadd.f32 0.0, %v341
  %v343 = vpop.f32.mrb[0].mxu0
  %344 = vmatprep.mubr.bf16.mxu0 %v285
  %345 = vmatmul.mubr.bf16.gmra.mrb[0].mxu0 %v284
  %v346 = vpop.f32.mrb[0].mxu0
  %v347 = vadd.f32 0.0, %v346
  %v348 = vpop.f32.mrb[0].mxu0
  %v349 = vpop.f32.mrb[0].mxu0
  %v350 = vadd.f32 0.0, %v349
  %v351 = vpop.f32.mrb[0].mxu0
  %352 = vmatprep.mubr.bf16.mxu0 %v287
  %353 = vmatmul.mubr.bf16.gmra.mrb[0].mxu0 %v286
  %v354 = vpop.f32.mrb[0].mxu0
  %v355 = vadd.f32 0.0, %v354
  %v356 = vpop.f32.mrb[0].mxu0
  %v357 = vpop.f32.mrb[0].mxu0
  %v358 = vpop.f32.mrb[0].mxu0
  %359 = vdwg.mxu0
  %v360 = vmax.f32 %v222, %v331
  %v361 = vmax.f32 %v225, %v334
  %v362 = vmax.f32 %v230, %v339
  %v363 = vmax.f32 %v233, %v342
  %v364 = vmax.f32 %v238, %v347
  %v365 = vmax.f32 %v241, %v350
  %v366 = vmax.f32 %v246, %v355
  %s367 = scalar_lea.vmem %s0, 112
  %v368 = vld [vmem:[%s367] sm:$0xff]
  %v369 = vld [vmem:[%s367 + $0x8] sm:$0xff]
  %v370 = vld [vmem:[%s367 + $0x10] sm:$0xff]
  %v371 = vld [vmem:[%s367 + $0x18] sm:$0xff]
  %v372 = vld [vmem:[%s367 + $0x20] sm:$0xff]
  %v373 = vld [vmem:[%s367 + $0x28] sm:$0xff]
  %v374 = vld [vmem:[%s367 + $0x30] sm:$0x11]
  %v382 = vunpack.c.l.b16 %v368
  %v383 = vunpack.c.h.b16 %v368
  %v384 = vunpack.c.l.b16 %v369
  %v385 = vunpack.c.h.b16 %v369
  %v386 = vunpack.c.l.b16 %v370
  %v387 = vunpack.c.h.b16 %v370
  %v388 = vunpack.c.l.b16 %v371
  %v389 = vunpack.c.h.b16 %v371
  %v390 = vunpack.c.l.b16 %v372
  %v391 = vunpack.c.h.b16 %v372
  %v392 = vunpack.c.l.b16 %v373
  %v393 = vunpack.c.h.b16 %v373
  %v394 = vunpack.c.l.b16 %v374
  %v395 = vunpack.c.h.b16 %v374
  %v396 = vpack.c.b16 %v384, %v382
  %v397 = vpack.c.b16 %v385, %v383
  %v398 = vpack.c.b16 %v388, %v386
  %v399 = vpack.c.b16 %v389, %v387
  %v400 = vpack.c.b16 %v392, %v390
  %v401 = vpack.c.b16 %v393, %v391
  %v402 = vpack.c.b16 %v394, %v394
  %v403 = vpack.c.b16 %v395, %v395
  %412 = vmatprep.subr.bf16.mxu0 0
  %413 = vmatpush1.bf16.msra.mxu0 %v155
  %414 = vmatprep.subr.bf16.mxu0 0
  %415 = vmatpush1.bf16.msra.mxu0 %v156
  %416 = vmatprep.subr.bf16.mxu0 0
  %417 = vmatpush1.bf16.msra.mxu0 %v157
  %418 = vmatprep.subr.bf16.mxu0 0
  %419 = vmatpush1.bf16.msra.mxu0 %v158
  %420 = vmatprep.subr.bf16.mxu0 0
  %421 = vmatpush1.bf16.msra.mxu0 %v159
  %422 = vmatprep.subr.bf16.mxu0 0
  %423 = vmatpush1.bf16.msra.mxu0 %v160
  %424 = vmatprep.subr.bf16.mxu0 0
  %425 = vmatpush1.bf16.msra.mxu0 %v161
  %426 = vmatprep.subr.bf16.mxu0 0
  %427 = vmatpush1.bf16.msra.mxu0 %v162
  %428 = vmatprep.subr.bf16.mxu0 0
  %429 = vmatpush1.bf16.msra.mxu0 %v163
  %430 = vmatprep.subr.bf16.mxu0 0
  %431 = vmatpush1.bf16.msra.mxu0 %v164
  %432 = vmatprep.subr.bf16.mxu0 0
  %433 = vmatpush1.bf16.msra.mxu0 %v165
  %434 = vmatprep.subr.bf16.mxu0 0
  %435 = vmatpush1.bf16.msra.mxu0 %v166
  %436 = vmatprep.subr.bf16.mxu0 0
  %437 = vmatpush1.bf16.msra.mxu0 %v167
  %438 = vmatprep.subr.bf16.mxu0 0
  %439 = vmatpush1.bf16.msra.mxu0 %v168
  %440 = vmatprep.subr.bf16.mxu0 0
  %441 = vmatpush1.bf16.msra.mxu0 %v169
  %442 = vmatprep.subr.bf16.mxu0 0
  %443 = vmatpush1.bf16.msra.mxu0 %v170
  %444 = vmatprep.mubr.bf16.mxu0 %v397
  %445 = vmatmul.mubr.bf16.gmra.mrb[0].mxu0 %v396
  %v446 = vpop.f32.mrb[0].mxu0
  %v447 = vadd.f32 0.0, %v446
  %v448 = vpop.f32.mrb[0].mxu0
  %v449 = vpop.f32.mrb[0].mxu0
  %v450 = vadd.f32 0.0, %v449
  %v451 = vpop.f32.mrb[0].mxu0
  %452 = vmatprep.mubr.bf16.mxu0 %v399
  %453 = vmatmul.mubr.bf16.gmra.mrb[0].mxu0 %v398
  %v454 = vpop.f32.mrb[0].mxu0
  %v455 = vadd.f32 0.0, %v454
  %v456 = vpop.f32.mrb[0].mxu0
  %v457 = vpop.f32.mrb[0].mxu0
  %v458 = vadd.f32 0.0, %v457
  %v459 = vpop.f32.mrb[0].mxu0
  %460 = vmatprep.mubr.bf16.mxu0 %v401
  %461 = vmatmul.mubr.bf16.gmra.mrb[0].mxu0 %v400
  %v462 = vpop.f32.mrb[0].mxu0
  %v463 = vadd.f32 0.0, %v462
  %v464 = vpop.f32.mrb[0].mxu0
  %v465 = vpop.f32.mrb[0].mxu0
  %v466 = vadd.f32 0.0, %v465
  %v467 = vpop.f32.mrb[0].mxu0
  %468 = vmatprep.mubr.bf16.mxu0 %v403
  %469 = vmatmul.mubr.bf16.gmra.mrb[0].mxu0 %v402
  %v470 = vpop.f32.mrb[0].mxu0
  %v471 = vadd.f32 0.0, %v470
  %v472 = vpop.f32.mrb[0].mxu0
  %v473 = vpop.f32.mrb[0].mxu0
  %v474 = vpop.f32.mrb[0].mxu0
  %475 = vdwg.mxu0
  %v476 = vmax.f32 %v360, %v447
  %v477 = vmax.f32 %v361, %v450
  %v478 = vmax.f32 %v362, %v455
  %v479 = vmax.f32 %v363, %v458
  %v480 = vmax.f32 %v364, %v463
  %v481 = vmax.f32 %v365, %v466
  %v482 = vmax.f32 %v366, %v471
  %s483 = scalar_lea.vmem %s0, 168
  %v484 = vld [vmem:[%s483] sm:$0xff]
  %v485 = vld [vmem:[%s483 + $0x8] sm:$0xff]
  %v486 = vld [vmem:[%s483 + $0x10] sm:$0xff]
  %v487 = vld [vmem:[%s483 + $0x18] sm:$0xff]
  %v488 = vld [vmem:[%s483 + $0x20] sm:$0xff]
  %v489 = vld [vmem:[%s483 + $0x28] sm:$0xff]
  %v490 = vld [vmem:[%s483 + $0x30] sm:$0x11]
  %v498 = vunpack.c.l.b16 %v484
  %v499 = vunpack.c.h.b16 %v484
  %v500 = vunpack.c.l.b16 %v485
  %v501 = vunpack.c.h.b16 %v485
  %v502 = vunpack.c.l.b16 %v486
  %v503 = vunpack.c.h.b16 %v486
  %v504 = vunpack.c.l.b16 %v487
  %v505 = vunpack.c.h.b16 %v487
  %v506 = vunpack.c.l.b16 %v488
  %v507 = vunpack.c.h.b16 %v488
  %v508 = vunpack.c.l.b16 %v489
  %v509 = vunpack.c.h.b16 %v489
  %v510 = vunpack.c.l.b16 %v490
  %v511 = vunpack.c.h.b16 %v490
  %v512 = vpack.c.b16 %v500, %v498
  %v513 = vpack.c.b16 %v501, %v499
  %v514 = vpack.c.b16 %v504, %v502
  %v515 = vpack.c.b16 %v505, %v503
  %v516 = vpack.c.b16 %v508, %v506
  %v517 = vpack.c.b16 %v509, %v507
  %v518 = vpack.c.b16 %v510, %v510
  %v519 = vpack.c.b16 %v511, %v511
  %528 = vmatprep.subr.bf16.mxu0 0
  %529 = vmatpush1.bf16.msra.mxu0 %v155
  %530 = vmatprep.subr.bf16.mxu0 0
  %531 = vmatpush1.bf16.msra.mxu0 %v156
  %532 = vmatprep.subr.bf16.mxu0 0
  %533 = vmatpush1.bf16.msra.mxu0 %v157
  %534 = vmatprep.subr.bf16.mxu0 0
  %535 = vmatpush1.bf16.msra.mxu0 %v158
  %536 = vmatprep.subr.bf16.mxu0 0
  %537 = vmatpush1.bf16.msra.mxu0 %v159
  %538 = vmatprep.subr.bf16.mxu0 0
  %539 = vmatpush1.bf16.msra.mxu0 %v160
  %540 = vmatprep.subr.bf16.mxu0 0
  %541 = vmatpush1.bf16.msra.mxu0 %v161
  %542 = vmatprep.subr.bf16.mxu0 0
  %543 = vmatpush1.bf16.msra.mxu0 %v162
  %544 = vmatprep.subr.bf16.mxu0 0
  %545 = vmatpush1.bf16.msra.mxu0 %v163
  %546 = vmatprep.subr.bf16.mxu0 0
  %547 = vmatpush1.bf16.msra.mxu0 %v164
  %548 = vmatprep.subr.bf16.mxu0 0
  %549 = vmatpush1.bf16.msra.mxu0 %v165
  %550 = vmatprep.subr.bf16.mxu0 0
  %551 = vmatpush1.bf16.msra.mxu0 %v166
  %552 = vmatprep.subr.bf16.mxu0 0
  %553 = vmatpush1.bf16.msra.mxu0 %v167
  %554 = vmatprep.subr.bf16.mxu0 0
  %555 = vmatpush1.bf16.msra.mxu0 %v168
  %556 = vmatprep.subr.bf16.mxu0 0
  %557 = vmatpush1.bf16.msra.mxu0 %v169
  %558 = vmatprep.subr.bf16.mxu0 0
  %559 = vmatpush1.bf16.msra.mxu0 %v170
  %560 = vmatprep.mubr.bf16.mxu0 %v513
  %561 = vmatmul.mubr.bf16.gmra.mrb[0].mxu0 %v512
  %v562 = vpop.f32.mrb[0].mxu0
  %v563 = vadd.f32 0.0, %v562
  %v564 = vpop.f32.mrb[0].mxu0
  %v565 = vpop.f32.mrb[0].mxu0
  %v566 = vadd.f32 0.0, %v565
  %v567 = vpop.f32.mrb[0].mxu0
  %568 = vmatprep.mubr.bf16.mxu0 %v515
  %569 = vmatmul.mubr.bf16.gmra.mrb[0].mxu0 %v514
  %v570 = vpop.f32.mrb[0].mxu0
  %v571 = vadd.f32 0.0, %v570
  %v572 = vpop.f32.mrb[0].mxu0
  %v573 = vpop.f32.mrb[0].mxu0
  %v574 = vadd.f32 0.0, %v573
  %v575 = vpop.f32.mrb[0].mxu0
  %576 = vmatprep.mubr.bf16.mxu0 %v517
  %577 = vmatmul.mubr.bf16.gmra.mrb[0].mxu0 %v516
  %v578 = vpop.f32.mrb[0].mxu0
  %v579 = vadd.f32 0.0, %v578
  %v580 = vpop.f32.mrb[0].mxu0
  %v581 = vpop.f32.mrb[0].mxu0
  %v582 = vadd.f32 0.0, %v581
  %v583 = vpop.f32.mrb[0].mxu0
  %584 = vmatprep.mubr.bf16.mxu0 %v519
  %585 = vmatmul.mubr.bf16.gmra.mrb[0].mxu0 %v518
  %v586 = vpop.f32.mrb[0].mxu0
  %v587 = vadd.f32 0.0, %v586
  %v588 = vpop.f32.mrb[0].mxu0
  %v589 = vpop.f32.mrb[0].mxu0
  %v590 = vpop.f32.mrb[0].mxu0
  %591 = vdwg.mxu0
  %v592 = vmax.f32 %v476, %v563
  %v593 = vmax.f32 %v477, %v566
  %v594 = vmax.f32 %v478, %v571
  %v595 = vmax.f32 %v479, %v574
  %v596 = vmax.f32 %v480, %v579
  %v597 = vmax.f32 %v481, %v582
  %v598 = vmax.f32 %v482, %v587
  %v599 = vld [vmem:[%s2] sm:$0x1]
  %v601 = vlaneseq
  %v602 = vshrl.u32 %v601, 7
  %v603 = vsub.s32 0, %v602
  %v604 = vrot.slane %v599, %v603
  %v606 = vadd.f32 %v592, %v604
  %v607 = vadd.f32 %v593, %v604
  %v608 = vadd.f32 %v594, %v604
  %v609 = vadd.f32 %v595, %v604
  %v610 = vadd.f32 %v596, %v604
  %v611 = vadd.f32 %v597, %v604
  %v612 = vadd.f32 %v598, %v604
  %v613 = vmax.f32 %v606, 0.0
  %v614 = vmax.f32 %v607, 0.0
  %v615 = vmax.f32 %v608, 0.0
  %v616 = vmax.f32 %v609, 0.0
  %v617 = vmax.f32 %v610, 0.0
  %v618 = vmax.f32 %v611, 0.0
  %v619 = vmax.f32 %v612, 0.0
  %v620 = vpack.c.bf16 %v614, %v613
  %v621 = vpack.c.bf16 %v616, %v615
  %v622 = vpack.c.bf16 %v618, %v617
  %v623 = vpack.c.bf16 %v619, %v619
  %v628 = vunpack.c.l.b16 %v620
  %v629 = vunpack.c.h.b16 %v620
  %v630 = vunpack.c.l.b16 %v621
  %v631 = vunpack.c.h.b16 %v621
  %v632 = vunpack.c.l.b16 %v622
  %v633 = vunpack.c.h.b16 %v622
  %v634 = vunpack.c.l.b16 %v623
  %v635 = vpack.c.b16 %v628, %v628
  %v636 = vpack.c.b16 %v629, %v629
  %v637 = vpack.c.b16 %v630, %v630
  %v638 = vpack.c.b16 %v631, %v631
  %v639 = vpack.c.b16 %v632, %v632
  %v640 = vpack.c.b16 %v633, %v633
  %v641 = vpack.c.b16 %v634, %v634
  %649 = vst [vmem:[%s3] sm:$0xf] %v635
  %650 = vst [vmem:[%s3 + $0x4] sm:$0xf] %v636
  %651 = vst [vmem:[%s3 + $0x8] sm:$0xf] %v637
  %652 = vst [vmem:[%s3 + $0xc] sm:$0xf] %v638
  %653 = vst [vmem:[%s3 + $0x10] sm:$0xf] %v639
  %654 = vst [vmem:[%s3 + $0x14] sm:$0xf] %v640
  %655 = vst [vmem:[%s3 + $0x18] sm:$0x1] %v641
  // Predicated region
  $region14: #{_lambda_.4} parent=0 // pred_check
    _
  $region15: #{_lambda_.4} parent=0 // pred_check_branch
    %657 = sbr.rel (0) target = $region17
  $region16: #{_lambda_.4} parent=0 // pred_region
    _
  $region17: #{_lambda_.4} parent=0 // pred_fallthru
    _
  // Predicated region
  $region18: #{_lambda_.4} parent=0 // pred_check
    _
  $region19: #{_lambda_.4} parent=0 // pred_check_branch
    %659 = sbr.rel (0) target = $region21
  $region20: #{_lambda_.4} parent=0 // pred_region
    _
  $region21: #{_lambda_.4} parent=0 // pred_fallthru
    _

// kernel: _lambda_.5
$region0: #{_lambda_.5}
  #allocation0 [shape = 'u32[]', space=smem, size = 0x4, offset = 0x4, fixed_abs, tag = 'smem constant byte address 0x4 - core index']
  #allocation1 [shape = 'u32[144,128]{1,0:T(1,128)}', space=vmem, size = 0x12000, scoped, tag = 'internal scratch']
  %s0 = inlined_call_operand.vmem [shape: bf16[2,3200], index: 0, kind: input, shape index: {}]
  %s1 = inlined_call_operand.vmem [shape: bf16[3200,128], index: 1, kind: input, shape index: {}]
  %s2 = inlined_call_operand.vmem [shape: f32[1,128], index: 2, kind: input, shape index: {}]
  %s3 = inlined_call_operand.vmem [shape: bf16[128,128], index: 3, kind: input, shape index: {}]
  %s4 = inlined_call_operand.vmem [shape: f32[1,128], index: 4, kind: input, shape index: {}]
  %s5 = inlined_call_operand.vmem [shape: bf16[128,128], index: 5, kind: input, shape index: {}]
  %s6 = inlined_call_operand.vmem [shape: f32[1,128], index: 6, kind: input, shape index: {}]
  %s7 = inlined_call_operand.hbm [shape: f32[2,128], index: 7, kind: output, shape index: {}]
  %s8 = sld [smem:[#allocation0]]
  $region38: #{_lambda_.5} parent=0
    _
  %s10 = ssub.s32 1, %s8
  %s11 = scalar_select 0, %s10, %s8
  $region1: #{_lambda_.5} parent=0
    #allocation2 [shape = 'u8[1024]{0}', space=vmem, size = 0x400, scoped, tag = 'output window, operand 0, single buffered']
    #allocation3 [shape = 's32[1]{0}', space=sflag, size = 0x4, scoped, tag = 'scoped memory for _lambda_.5']
    %12 = vsyncpa [#allocation3], 0
    // Predicated region
    $region2: #{_lambda_.5} parent=1 // pred_check
      _
    $region3: #{_lambda_.5} parent=1 // pred_check_branch
      %14 = sbr.rel (0) target = $region5
    $region4: #{_lambda_.5} parent=1 // pred_region
      _
    $region5: #{_lambda_.5} parent=1 // pred_fallthru
      _
    // Predicated region
    $region6: #{_lambda_.5} parent=1 // pred_check
      _
    $region7: #{_lambda_.5} parent=1 // pred_check_branch
      %16 = sbr.rel (0) target = $region9
    $region8: #{_lambda_.5} parent=1 // pred_region
      _
    $region9: #{_lambda_.5} parent=1 // pred_fallthru
      _
    // Predicated region
    $region10: #{_lambda_.5} parent=1 // pred_check
      _
    $region11: #{_lambda_.5} parent=1 // pred_check_branch
      %18 = sbr.rel (0) target = $region13
    $region12: #{_lambda_.5} parent=1 // pred_region
      _
    $region13: #{_lambda_.5} parent=1 // pred_fallthru
      _
    // Predicated region
    $region14: #{_lambda_.5} parent=1 // pred_check
      _
    $region15: #{_lambda_.5} parent=1 // pred_check_branch
      %20 = sbr.rel (0) target = $region17
    $region16: #{_lambda_.5} parent=1 // pred_region
      _
    $region17: #{_lambda_.5} parent=1 // pred_fallthru
      _
    // Predicated region
    $region18: #{_lambda_.5} parent=1 // pred_check
      _
    $region19: #{_lambda_.5} parent=1 // pred_check_branch
      %22 = sbr.rel (0) target = $region21
    $region20: #{_lambda_.5} parent=1 // pred_region
      _
    $region21: #{_lambda_.5} parent=1 // pred_fallthru
      _
    // Predicated region
    $region22: #{_lambda_.5} parent=1 // pred_check
      _
    $region23: #{_lambda_.5} parent=1 // pred_check_branch
      %24 = sbr.rel (0) target = $region25
    $region24: #{_lambda_.5} parent=1 // pred_region
      _
    $region25: #{_lambda_.5} parent=1 // pred_fallthru
      _
    // Predicated region
    $region26: #{_lambda_.5} parent=1 // pred_check
      _
    $region27: #{_lambda_.5} parent=1 // pred_check_branch
      %26 = sbr.rel (0) target = $region29
    $region28: #{_lambda_.5} parent=1 // pred_region
      _
    $region29: #{_lambda_.5} parent=1 // pred_fallthru
      _
    %v28 = vld [vmem:[%s0] sm:$0xff]
    %v29 = vld [vmem:[%s0 + $0x8] sm:$0xff]
    %v30 = vld [vmem:[%s0 + $0x10] sm:$0xff]
    %v31 = vld [vmem:[%s0 + $0x18] sm:$0x1]
    %v32 = vld [vmem:[%s1] sm:$0xf]
    %v33 = vld [vmem:[%s1 + $0x4] sm:$0xf]
    %v34 = vld [vmem:[%s1 + $0x8] sm:$0xf]
    %v35 = vld [vmem:[%s1 + $0xc] sm:$0xf]
    %v36 = vld [vmem:[%s1 + $0x10] sm:$0xf]
    %v37 = vld [vmem:[%s1 + $0x14] sm:$0xf]
    %v38 = vld [vmem:[%s1 + $0x18] sm:$0xf]
    %v39 = vld [vmem:[%s1 + $0x1c] sm:$0xf]
    %v40 = vld [vmem:[%s1 + $0x20] sm:$0xf]
    %v41 = vld [vmem:[%s1 + $0x24] sm:$0xf]
    %v42 = vld [vmem:[%s1 + $0x28] sm:$0xf]
    %v43 = vld [vmem:[%s1 + $0x2c] sm:$0xf]
    %v44 = vld [vmem:[%s1 + $0x30] sm:$0xf]
    %v45 = vld [vmem:[%s1 + $0x34] sm:$0xf]
    %v46 = vld [vmem:[%s1 + $0x38] sm:$0xf]
    %v47 = vld [vmem:[%s1 + $0x3c] sm:$0xf]
    %v48 = vld [vmem:[%s1 + $0x40] sm:$0xf]
    %v49 = vld [vmem:[%s1 + $0x44] sm:$0xf]
    %v50 = vld [vmem:[%s1 + $0x48] sm:$0xf]
    %v51 = vld [vmem:[%s1 + $0x4c] sm:$0xf]
    %v52 = vld [vmem:[%s1 + $0x50] sm:$0xf]
    %v53 = vld [vmem:[%s1 + $0x54] sm:$0xf]
    %v54 = vld [vmem:[%s1 + $0x58] sm:$0xf]
    %v55 = vld [vmem:[%s1 + $0x5c] sm:$0xf]
    %v56 = vld [vmem:[%s1 + $0x60] sm:$0xf]
    %v57 = vld [vmem:[%s1 + $0x64] sm:$0xf]
    %v58 = vld [vmem:[%s1 + $0x68] sm:$0xf]
    %v59 = vld [vmem:[%s1 + $0x6c] sm:$0xf]
    %v60 = vld [vmem:[%s1 + $0x70] sm:$0xf]
    %v61 = vld [vmem:[%s1 + $0x74] sm:$0xf]
    %v62 = vld [vmem:[%s1 + $0x78] sm:$0xf]
    %v63 = vld [vmem:[%s1 + $0x7c] sm:$0xf]
    %v64 = vld [vmem:[%s1 + $0x80] sm:$0xf]
    %v65 = vld [vmem:[%s1 + $0x84] sm:$0xf]
    %v66 = vld [vmem:[%s1 + $0x88] sm:$0xf]
    %v67 = vld [vmem:[%s1 + $0x8c] sm:$0xf]
    %v68 = vld [vmem:[%s1 + $0x90] sm:$0xf]
    %v69 = vld [vmem:[%s1 + $0x94] sm:$0xf]
    %v70 = vld [vmem:[%s1 + $0x98] sm:$0xf]
    %v71 = vld [vmem:[%s1 + $0x9c] sm:$0xf]
    %v72 = vld [vmem:[%s1 + $0xa0] sm:$0xf]
    %v73 = vld [vmem:[%s1 + $0xa4] sm:$0xf]
    %v74 = vld [vmem:[%s1 + $0xa8] sm:$0xf]
    %v75 = vld [vmem:[%s1 + $0xac] sm:$0xf]
    %v76 = vld [vmem:[%s1 + $0xb0] sm:$0xf]
    %v77 = vld [vmem:[%s1 + $0xb4] sm:$0xf]
    %v78 = vld [vmem:[%s1 + $0xb8] sm:$0xf]
    %v79 = vld [vmem:[%s1 + $0xbc] sm:$0xf]
    %v80 = vld [vmem:[%s1 + $0xc0] sm:$0xf]
    %v81 = vld [vmem:[%s1 + $0xc4] sm:$0xf]
    %v82 = vld [vmem:[%s1 + $0xc8] sm:$0xf]
    %v83 = vld [vmem:[%s1 + $0xcc] sm:$0xf]
    %v84 = vld [vmem:[%s1 + $0xd0] sm:$0xf]
    %v85 = vld [vmem:[%s1 + $0xd4] sm:$0xf]
    %v86 = vld [vmem:[%s1 + $0xd8] sm:$0xf]
    %v87 = vld [vmem:[%s1 + $0xdc] sm:$0xf]
    %v88 = vld [vmem:[%s1 + $0xe0] sm:$0xf]
    %v89 = vld [vmem:[%s1 + $0xe4] sm:$0xf]
    %v90 = vld [vmem:[%s1 + $0xe8] sm:$0xf]
    %v91 = vld [vmem:[%s1 + $0xec] sm:$0xf]
    %v92 = vld [vmem:[%s1 + $0xf0] sm:$0xf]
    %v93 = vld [vmem:[%s1 + $0xf4] sm:$0xf]
    %v94 = vld [vmem:[%s1 + $0xf8] sm:$0xf]
    %v95 = vld [vmem:[%s1 + $0xfc] sm:$0xf]
    %v96 = vld [vmem:[%s1 + $0x100] sm:$0xf]
    %v97 = vld [vmem:[%s1 + $0x104] sm:$0xf]
    %v98 = vld [vmem:[%s1 + $0x108] sm:$0xf]
    %v99 = vld [vmem:[%s1 + $0x10c] sm:$0xf]
    %v100 = vld [vmem:[%s1 + $0x110] sm:$0xf]
    %v101 = vld [vmem:[%s1 + $0x114] sm:$0xf]
    %v102 = vld [vmem:[%s1 + $0x118] sm:$0xf]
    %v103 = vld [vmem:[%s1 + $0x11c] sm:$0xf]
    %v104 = vld [vmem:[%s1 + $0x120] sm:$0xf]
    %v105 = vld [vmem:[%s1 + $0x124] sm:$0xf]
    %v106 = vld [vmem:[%s1 + $0x128] sm:$0xf]
    %v107 = vld [vmem:[%s1 + $0x12c] sm:$0xf]
    %v108 = vld [vmem:[%s1 + $0x130] sm:$0xf]
    %v109 = vld [vmem:[%s1 + $0x134] sm:$0xf]
    %v110 = vld [vmem:[%s1 + $0x138] sm:$0xf]
    %v111 = vld [vmem:[%s1 + $0x13c] sm:$0xf]
    %v112 = vld [vmem:[%s1 + $0x140] sm:$0xf]
    %v113 = vld [vmem:[%s1 + $0x144] sm:$0xf]
    %v114 = vld [vmem:[%s1 + $0x148] sm:$0xf]
    %v115 = vld [vmem:[%s1 + $0x14c] sm:$0xf]
    %v116 = vld [vmem:[%s1 + $0x150] sm:$0xf]
    %v117 = vld [vmem:[%s1 + $0x154] sm:$0xf]
    %v118 = vld [vmem:[%s1 + $0x158] sm:$0xf]
    %v119 = vld [vmem:[%s1 + $0x15c] sm:$0xf]
    %v120 = vld [vmem:[%s1 + $0x160] sm:$0xf]
    %v121 = vld [vmem:[%s1 + $0x164] sm:$0xf]
    %v122 = vld [vmem:[%s1 + $0x168] sm:$0xf]
    %v123 = vld [vmem:[%s1 + $0x16c] sm:$0xf]
    %v124 = vld [vmem:[%s1 + $0x170] sm:$0xf]
    %v125 = vld [vmem:[%s1 + $0x174] sm:$0xf]
    %v126 = vld [vmem:[%s1 + $0x178] sm:$0xf]
    %v127 = vld [vmem:[%s1 + $0x17c] sm:$0xf]
    %v128 = vld [vmem:[%s1 + $0x180] sm:$0xf]
    %v129 = vld [vmem:[%s1 + $0x184] sm:$0xf]
    %v130 = vld [vmem:[%s1 + $0x188] sm:$0xf]
    %v131 = vld [vmem:[%s1 + $0x18c] sm:$0xf]
    %v132 = vld [vmem:[%s1 + $0x190] sm:$0xf]
    %v133 = vld [vmem:[%s1 + $0x194] sm:$0xf]
    %v134 = vld [vmem:[%s1 + $0x198] sm:$0xf]
    %v135 = vld [vmem:[%s1 + $0x19c] sm:$0xf]
    %v136 = vld [vmem:[%s1 + $0x1a0] sm:$0xf]
    %v137 = vld [vmem:[%s1 + $0x1a4] sm:$0xf]
    %v138 = vld [vmem:[%s1 + $0x1a8] sm:$0xf]
    %v139 = vld [vmem:[%s1 + $0x1ac] sm:$0xf]
    %v140 = vld [vmem:[%s1 + $0x1b0] sm:$0xf]
    %v141 = vld [vmem:[%s1 + $0x1b4] sm:$0xf]
    %v142 = vld [vmem:[%s1 + $0x1b8] sm:$0xf]
    %v143 = vld [vmem:[%s1 + $0x1bc] sm:$0xf]
    %v144 = vld [vmem:[%s1 + $0x1c0] sm:$0xf]
    %v145 = vld [vmem:[%s1 + $0x1c4] sm:$0xf]
    %v146 = vld [vmem:[%s1 + $0x1c8] sm:$0xf]
    %v147 = vld [vmem:[%s1 + $0x1cc] sm:$0xf]
    %v148 = vld [vmem:[%s1 + $0x1d0] sm:$0xf]
    %v149 = vld [vmem:[%s1 + $0x1d4] sm:$0xf]
    %v150 = vld [vmem:[%s1 + $0x1d8] sm:$0xf]
    %v151 = vld [vmem:[%s1 + $0x1dc] sm:$0xf]
    %v152 = vld [vmem:[%s1 + $0x1e0] sm:$0xf]
    %v153 = vld [vmem:[%s1 + $0x1e4] sm:$0xf]
    %v154 = vld [vmem:[%s1 + $0x1e8] sm:$0xf]
    %v155 = vld [vmem:[%s1 + $0x1ec] sm:$0xf]
    %v156 = vld [vmem:[%s1 + $0x1f0] sm:$0xf]
    %v157 = vld [vmem:[%s1 + $0x1f4] sm:$0xf]
    %v158 = vld [vmem:[%s1 + $0x1f8] sm:$0xf]
    %v159 = vld [vmem:[%s1 + $0x1fc] sm:$0xf]
    %v160 = vld [vmem:[%s1 + $0x200] sm:$0xf]
    %v161 = vld [vmem:[%s1 + $0x204] sm:$0xf]
    %v162 = vld [vmem:[%s1 + $0x208] sm:$0xf]
    %v163 = vld [vmem:[%s1 + $0x20c] sm:$0xf]
    %v164 = vld [vmem:[%s1 + $0x210] sm:$0xf]
    %v165 = vld [vmem:[%s1 + $0x214] sm:$0xf]
    %v166 = vld [vmem:[%s1 + $0x218] sm:$0xf]
    %v167 = vld [vmem:[%s1 + $0x21c] sm:$0xf]
    %v168 = vld [vmem:[%s1 + $0x220] sm:$0xf]
    %v169 = vld [vmem:[%s1 + $0x224] sm:$0xf]
    %v170 = vld [vmem:[%s1 + $0x228] sm:$0xf]
    %v171 = vld [vmem:[%s1 + $0x22c] sm:$0xf]
    %v172 = vld [vmem:[%s1 + $0x230] sm:$0xf]
    %v173 = vld [vmem:[%s1 + $0x234] sm:$0xf]
    %v174 = vld [vmem:[%s1 + $0x238] sm:$0xf]
    %v175 = vld [vmem:[%s1 + $0x23c] sm:$0xf]
    %v176 = vld [vmem:[%s1 + $0x240] sm:$0xf]
    %v177 = vld [vmem:[%s1 + $0x244] sm:$0xf]
    %v178 = vld [vmem:[%s1 + $0x248] sm:$0xf]
    %v179 = vld [vmem:[%s1 + $0x24c] sm:$0xf]
    %v180 = vld [vmem:[%s1 + $0x250] sm:$0xf]
    %v181 = vld [vmem:[%s1 + $0x254] sm:$0xf]
    %v182 = vld [vmem:[%s1 + $0x258] sm:$0xf]
    %v183 = vld [vmem:[%s1 + $0x25c] sm:$0xf]
    %v184 = vld [vmem:[%s1 + $0x260] sm:$0xf]
    %v185 = vld [vmem:[%s1 + $0x264] sm:$0xf]
    %v186 = vld [vmem:[%s1 + $0x268] sm:$0xf]
    %v187 = vld [vmem:[%s1 + $0x26c] sm:$0xf]
    %v188 = vld [vmem:[%s1 + $0x270] sm:$0xf]
    %v189 = vld [vmem:[%s1 + $0x274] sm:$0xf]
    %v190 = vld [vmem:[%s1 + $0x278] sm:$0xf]
    %v191 = vld [vmem:[%s1 + $0x27c] sm:$0xf]
    %v192 = vld [vmem:[%s1 + $0x280] sm:$0xf]
    %v193 = vld [vmem:[%s1 + $0x284] sm:$0xf]
    %v194 = vld [vmem:[%s1 + $0x288] sm:$0xf]
    %v195 = vld [vmem:[%s1 + $0x28c] sm:$0xf]
    %v196 = vld [vmem:[%s1 + $0x290] sm:$0xf]
    %v197 = vld [vmem:[%s1 + $0x294] sm:$0xf]
    %v198 = vld [vmem:[%s1 + $0x298] sm:$0xf]
    %v199 = vld [vmem:[%s1 + $0x29c] sm:$0xf]
    %v200 = vld [vmem:[%s1 + $0x2a0] sm:$0xf]
    %v201 = vld [vmem:[%s1 + $0x2a4] sm:$0xf]
    %v202 = vld [vmem:[%s1 + $0x2a8] sm:$0xf]
    %v203 = vld [vmem:[%s1 + $0x2ac] sm:$0xf]
    %v204 = vld [vmem:[%s1 + $0x2b0] sm:$0xf]
    %v205 = vld [vmem:[%s1 + $0x2b4] sm:$0xf]
    %v206 = vld [vmem:[%s1 + $0x2b8] sm:$0xf]
    %v207 = vld [vmem:[%s1 + $0x2bc] sm:$0xf]
    %v208 = vld [vmem:[%s1 + $0x2c0] sm:$0xf]
    %v209 = vld [vmem:[%s1 + $0x2c4] sm:$0xf]
    %v210 = vld [vmem:[%s1 + $0x2c8] sm:$0xf]
    %v211 = vld [vmem:[%s1 + $0x2cc] sm:$0xf]
    %v212 = vld [vmem:[%s1 + $0x2d0] sm:$0xf]
    %v213 = vld [vmem:[%s1 + $0x2d4] sm:$0xf]
    %v214 = vld [vmem:[%s1 + $0x2d8] sm:$0xf]
    %v215 = vld [vmem:[%s1 + $0x2dc] sm:$0xf]
    %v216 = vld [vmem:[%s1 + $0x2e0] sm:$0xf]
    %v217 = vld [vmem:[%s1 + $0x2e4] sm:$0xf]
    %v218 = vld [vmem:[%s1 + $0x2e8] sm:$0xf]
    %v219 = vld [vmem:[%s1 + $0x2ec] sm:$0xf]
    %v220 = vld [vmem:[%s1 + $0x2f0] sm:$0xf]
    %v221 = vld [vmem:[%s1 + $0x2f4] sm:$0xf]
    %v222 = vld [vmem:[%s1 + $0x2f8] sm:$0xf]
    %v223 = vld [vmem:[%s1 + $0x2fc] sm:$0xf]
    %v224 = vld [vmem:[%s1 + $0x300] sm:$0xf]
    %v225 = vld [vmem:[%s1 + $0x304] sm:$0xf]
    %v226 = vld [vmem:[%s1 + $0x308] sm:$0xf]
    %v227 = vld [vmem:[%s1 + $0x30c] sm:$0xf]
    %v228 = vld [vmem:[%s1 + $0x310] sm:$0xf]
    %v229 = vld [vmem:[%s1 + $0x314] sm:$0xf]
    %v230 = vld [vmem:[%s1 + $0x318] sm:$0xf]
    %v231 = vld [vmem:[%s1 + $0x31c] sm:$0xf]
    %v232 = vld [vmem:[%s1 + $0x320] sm:$0xf]
    %v233 = vld [vmem:[%s1 + $0x324] sm:$0xf]
    %v234 = vld [vmem:[%s1 + $0x328] sm:$0xf]
    %v235 = vld [vmem:[%s1 + $0x32c] sm:$0xf]
    %v236 = vld [vmem:[%s1 + $0x330] sm:$0xf]
    %v237 = vld [vmem:[%s1 + $0x334] sm:$0xf]
    %v238 = vld [vmem:[%s1 + $0x338] sm:$0xf]
    %v239 = vld [vmem:[%s1 + $0x33c] sm:$0xf]
    %v240 = vld [vmem:[%s1 + $0x340] sm:$0xf]
    %v241 = vld [vmem:[%s1 + $0x344] sm:$0xf]
    %v242 = vld [vmem:[%s1 + $0x348] sm:$0xf]
    %v243 = vld [vmem:[%s1 + $0x34c] sm:$0xf]
    %v244 = vld [vmem:[%s1 + $0x350] sm:$0xf]
    %v245 = vld [vmem:[%s1 + $0x354] sm:$0xf]
    %v246 = vld [vmem:[%s1 + $0x358] sm:$0xf]
    %v247 = vld [vmem:[%s1 + $0x35c] sm:$0xf]
    %v248 = vld [vmem:[%s1 + $0x360] sm:$0xf]
    %v249 = vld [vmem:[%s1 + $0x364] sm:$0xf]
    %v250 = vld [vmem:[%s1 + $0x368] sm:$0xf]
    %v251 = vld [vmem:[%s1 + $0x36c] sm:$0xf]
    %v252 = vld [vmem:[%s1 + $0x370] sm:$0xf]
    %v253 = vld [vmem:[%s1 + $0x374] sm:$0xf]
    %v254 = vld [vmem:[%s1 + $0x378] sm:$0xf]
    %v255 = vld [vmem:[%s1 + $0x37c] sm:$0xf]
    %v256 = vld [vmem:[%s1 + $0x380] sm:$0xf]
    %v257 = vld [vmem:[%s1 + $0x384] sm:$0xf]
    %v258 = vld [vmem:[%s1 + $0x388] sm:$0xf]
    %v259 = vld [vmem:[%s1 + $0x38c] sm:$0xf]
    %v260 = vld [vmem:[%s1 + $0x390] sm:$0xf]
    %v261 = vld [vmem:[%s1 + $0x394] sm:$0xf]
    %v262 = vld [vmem:[%s1 + $0x398] sm:$0xf]
    %v263 = vld [vmem:[%s1 + $0x39c] sm:$0xf]
    %v264 = vld [vmem:[%s1 + $0x3a0] sm:$0xf]
    %v265 = vld [vmem:[%s1 + $0x3a4] sm:$0xf]
    %v266 = vld [vmem:[%s1 + $0x3a8] sm:$0xf]
    %v267 = vld [vmem:[%s1 + $0x3ac] sm:$0xf]
    %v268 = vld [vmem:[%s1 + $0x3b0] sm:$0xf]
    %v269 = vld [vmem:[%s1 + $0x3b4] sm:$0xf]
    %v270 = vld [vmem:[%s1 + $0x3b8] sm:$0xf]
    %v271 = vld [vmem:[%s1 + $0x3bc] sm:$0xf]
    %v272 = vld [vmem:[%s1 + $0x3c0] sm:$0xf]
    %v273 = vld [vmem:[%s1 + $0x3c4] sm:$0xf]
    %v274 = vld [vmem:[%s1 + $0x3c8] sm:$0xf]
    %v275 = vld [vmem:[%s1 + $0x3cc] sm:$0xf]
    %v276 = vld [vmem:[%s1 + $0x3d0] sm:$0xf]
    %v277 = vld [vmem:[%s1 + $0x3d4] sm:$0xf]
    %v278 = vld [vmem:[%s1 + $0x3d8] sm:$0xf]
    %v279 = vld [vmem:[%s1 + $0x3dc] sm:$0xf]
    %v280 = vld [vmem:[%s1 + $0x3e0] sm:$0xf]
    %v281 = vld [vmem:[%s1 + $0x3e4] sm:$0xf]
    %v282 = vld [vmem:[%s1 + $0x3e8] sm:$0xf]
    %v283 = vld [vmem:[%s1 + $0x3ec] sm:$0xf]
    %v284 = vld [vmem:[%s1 + $0x3f0] sm:$0xf]
    %v285 = vld [vmem:[%s1 + $0x3f4] sm:$0xf]
    %v286 = vld [vmem:[%s1 + $0x3f8] sm:$0xf]
    %v287 = vld [vmem:[%s1 + $0x3fc] sm:$0xf]
    %v288 = vld [vmem:[%s1 + $0x400] sm:$0xf]
    %v289 = vld [vmem:[%s1 + $0x404] sm:$0xf]
    %v290 = vld [vmem:[%s1 + $0x408] sm:$0xf]
    %v291 = vld [vmem:[%s1 + $0x40c] sm:$0xf]
    %v292 = vld [vmem:[%s1 + $0x410] sm:$0xf]
    %v293 = vld [vmem:[%s1 + $0x414] sm:$0xf]
    %v294 = vld [vmem:[%s1 + $0x418] sm:$0xf]
    %v295 = vld [vmem:[%s1 + $0x41c] sm:$0xf]
    %v296 = vld [vmem:[%s1 + $0x420] sm:$0xf]
    %v297 = vld [vmem:[%s1 + $0x424] sm:$0xf]
    %v298 = vld [vmem:[%s1 + $0x428] sm:$0xf]
    %v299 = vld [vmem:[%s1 + $0x42c] sm:$0xf]
    %v300 = vld [vmem:[%s1 + $0x430] sm:$0xf]
    %v301 = vld [vmem:[%s1 + $0x434] sm:$0xf]
    %v302 = vld [vmem:[%s1 + $0x438] sm:$0xf]
    %v303 = vld [vmem:[%s1 + $0x43c] sm:$0xf]
    %v304 = vld [vmem:[%s1 + $0x440] sm:$0xf]
    %v305 = vld [vmem:[%s1 + $0x444] sm:$0xf]
    %v306 = vld [vmem:[%s1 + $0x448] sm:$0xf]
    %v307 = vld [vmem:[%s1 + $0x44c] sm:$0xf]
    %v308 = vld [vmem:[%s1 + $0x450] sm:$0xf]
    %v309 = vld [vmem:[%s1 + $0x454] sm:$0xf]
    %v310 = vld [vmem:[%s1 + $0x458] sm:$0xf]
    %v311 = vld [vmem:[%s1 + $0x45c] sm:$0xf]
    %v312 = vld [vmem:[%s1 + $0x460] sm:$0xf]
    %v313 = vld [vmem:[%s1 + $0x464] sm:$0xf]
    %v314 = vld [vmem:[%s1 + $0x468] sm:$0xf]
    %v315 = vld [vmem:[%s1 + $0x46c] sm:$0xf]
    %v316 = vld [vmem:[%s1 + $0x470] sm:$0xf]
    %v317 = vld [vmem:[%s1 + $0x474] sm:$0xf]
    %v318 = vld [vmem:[%s1 + $0x478] sm:$0xf]
    %v319 = vld [vmem:[%s1 + $0x47c] sm:$0xf]
    %v320 = vld [vmem:[%s1 + $0x480] sm:$0xf]
    %v321 = vld [vmem:[%s1 + $0x484] sm:$0xf]
    %v322 = vld [vmem:[%s1 + $0x488] sm:$0xf]
    %v323 = vld [vmem:[%s1 + $0x48c] sm:$0xf]
    %v324 = vld [vmem:[%s1 + $0x490] sm:$0xf]
    %v325 = vld [vmem:[%s1 + $0x494] sm:$0xf]
    %v326 = vld [vmem:[%s1 + $0x498] sm:$0xf]
    %v327 = vld [vmem:[%s1 + $0x49c] sm:$0xf]
    %v328 = vld [vmem:[%s1 + $0x4a0] sm:$0xf]
    %v329 = vld [vmem:[%s1 + $0x4a4] sm:$0xf]
    %v330 = vld [vmem:[%s1 + $0x4a8] sm:$0xf]
    %v331 = vld [vmem:[%s1 + $0x4ac] sm:$0xf]
    %v332 = vld [vmem:[%s1 + $0x4b0] sm:$0xf]
    %v333 = vld [vmem:[%s1 + $0x4b4] sm:$0xf]
    %v334 = vld [vmem:[%s1 + $0x4b8] sm:$0xf]
    %v335 = vld [vmem:[%s1 + $0x4bc] sm:$0xf]
    %v336 = vld [vmem:[%s1 + $0x4c0] sm:$0xf]
    %v337 = vld [vmem:[%s1 + $0x4c4] sm:$0xf]
    %v338 = vld [vmem:[%s1 + $0x4c8] sm:$0xf]
    %v339 = vld [vmem:[%s1 + $0x4cc] sm:$0xf]
    %v340 = vld [vmem:[%s1 + $0x4d0] sm:$0xf]
    %v341 = vld [vmem:[%s1 + $0x4d4] sm:$0xf]
    %v342 = vld [vmem:[%s1 + $0x4d8] sm:$0xf]
    %v343 = vld [vmem:[%s1 + $0x4dc] sm:$0xf]
    %v344 = vld [vmem:[%s1 + $0x4e0] sm:$0xf]
    %v345 = vld [vmem:[%s1 + $0x4e4] sm:$0xf]
    %v346 = vld [vmem:[%s1 + $0x4e8] sm:$0xf]
    %v347 = vld [vmem:[%s1 + $0x4ec] sm:$0xf]
    %v348 = vld [vmem:[%s1 + $0x4f0] sm:$0xf]
    %v349 = vld [vmem:[%s1 + $0x4f4] sm:$0xf]
    %v350 = vld [vmem:[%s1 + $0x4f8] sm:$0xf]
    %v351 = vld [vmem:[%s1 + $0x4fc] sm:$0xf]
    %v352 = vld [vmem:[%s1 + $0x500] sm:$0xf]
    %v353 = vld [vmem:[%s1 + $0x504] sm:$0xf]
    %v354 = vld [vmem:[%s1 + $0x508] sm:$0xf]
    %v355 = vld [vmem:[%s1 + $0x50c] sm:$0xf]
    %v356 = vld [vmem:[%s1 + $0x510] sm:$0xf]
    %v357 = vld [vmem:[%s1 + $0x514] sm:$0xf]
    %v358 = vld [vmem:[%s1 + $0x518] sm:$0xf]
    %v359 = vld [vmem:[%s1 + $0x51c] sm:$0xf]
    %v360 = vld [vmem:[%s1 + $0x520] sm:$0xf]
    %v361 = vld [vmem:[%s1 + $0x524] sm:$0xf]
    %v362 = vld [vmem:[%s1 + $0x528] sm:$0xf]
    %v363 = vld [vmem:[%s1 + $0x52c] sm:$0xf]
    %v364 = vld [vmem:[%s1 + $0x530] sm:$0xf]
    %v365 = vld [vmem:[%s1 + $0x534] sm:$0xf]
    %v366 = vld [vmem:[%s1 + $0x538] sm:$0xf]
    %v367 = vld [vmem:[%s1 + $0x53c] sm:$0xf]
    %v368 = vld [vmem:[%s1 + $0x540] sm:$0xf]
    %v369 = vld [vmem:[%s1 + $0x544] sm:$0xf]
    %v370 = vld [vmem:[%s1 + $0x548] sm:$0xf]
    %v371 = vld [vmem:[%s1 + $0x54c] sm:$0xf]
    %v372 = vld [vmem:[%s1 + $0x550] sm:$0xf]
    %v373 = vld [vmem:[%s1 + $0x554] sm:$0xf]
    %v374 = vld [vmem:[%s1 + $0x558] sm:$0xf]
    %v375 = vld [vmem:[%s1 + $0x55c] sm:$0xf]
    %v376 = vld [vmem:[%s1 + $0x560] sm:$0xf]
    %v377 = vld [vmem:[%s1 + $0x564] sm:$0xf]
    %v378 = vld [vmem:[%s1 + $0x568] sm:$0xf]
    %v379 = vld [vmem:[%s1 + $0x56c] sm:$0xf]
    %v380 = vld [vmem:[%s1 + $0x570] sm:$0xf]
    %v381 = vld [vmem:[%s1 + $0x574] sm:$0xf]
    %v382 = vld [vmem:[%s1 + $0x578] sm:$0xf]
    %v383 = vld [vmem:[%s1 + $0x57c] sm:$0xf]
    %v384 = vld [vmem:[%s1 + $0x580] sm:$0xf]
    %v385 = vld [vmem:[%s1 + $0x584] sm:$0xf]
    %v386 = vld [vmem:[%s1 + $0x588] sm:$0xf]
    %v387 = vld [vmem:[%s1 + $0x58c] sm:$0xf]
    %v388 = vld [vmem:[%s1 + $0x590] sm:$0xf]
    %v389 = vld [vmem:[%s1 + $0x594] sm:$0xf]
    %v390 = vld [vmem:[%s1 + $0x598] sm:$0xf]
    %v391 = vld [vmem:[%s1 + $0x59c] sm:$0xf]
    %v392 = vld [vmem:[%s1 + $0x5a0] sm:$0xf]
    %v393 = vld [vmem:[%s1 + $0x5a4] sm:$0xf]
    %v394 = vld [vmem:[%s1 + $0x5a8] sm:$0xf]
    %v395 = vld [vmem:[%s1 + $0x5ac] sm:$0xf]
    %v396 = vld [vmem:[%s1 + $0x5b0] sm:$0xf]
    %v397 = vld [vmem:[%s1 + $0x5b4] sm:$0xf]
    %v398 = vld [vmem:[%s1 + $0x5b8] sm:$0xf]
    %v399 = vld [vmem:[%s1 + $0x5bc] sm:$0xf]
    %v400 = vld [vmem:[%s1 + $0x5c0] sm:$0xf]
    %v401 = vld [vmem:[%s1 + $0x5c4] sm:$0xf]
    %v402 = vld [vmem:[%s1 + $0x5c8] sm:$0xf]
    %v403 = vld [vmem:[%s1 + $0x5cc] sm:$0xf]
    %v404 = vld [vmem:[%s1 + $0x5d0] sm:$0xf]
    %v405 = vld [vmem:[%s1 + $0x5d4] sm:$0xf]
    %v406 = vld [vmem:[%s1 + $0x5d8] sm:$0xf]
    %v407 = vld [vmem:[%s1 + $0x5dc] sm:$0xf]
    %v408 = vld [vmem:[%s1 + $0x5e0] sm:$0xf]
    %v409 = vld [vmem:[%s1 + $0x5e4] sm:$0xf]
    %v410 = vld [vmem:[%s1 + $0x5e8] sm:$0xf]
    %v411 = vld [vmem:[%s1 + $0x5ec] sm:$0xf]
    %v412 = vld [vmem:[%s1 + $0x5f0] sm:$0xf]
    %v413 = vld [vmem:[%s1 + $0x5f4] sm:$0xf]
    %v414 = vld [vmem:[%s1 + $0x5f8] sm:$0xf]
    %v415 = vld [vmem:[%s1 + $0x5fc] sm:$0xf]
    %v416 = vld [vmem:[%s1 + $0x600] sm:$0xf]
    %v417 = vld [vmem:[%s1 + $0x604] sm:$0xf]
    %v418 = vld [vmem:[%s1 + $0x608] sm:$0xf]
    %v419 = vld [vmem:[%s1 + $0x60c] sm:$0xf]
    %v420 = vld [vmem:[%s1 + $0x610] sm:$0xf]
    %v421 = vld [vmem:[%s1 + $0x614] sm:$0xf]
    %v422 = vld [vmem:[%s1 + $0x618] sm:$0xf]
    %v423 = vld [vmem:[%s1 + $0x61c] sm:$0xf]
    %v424 = vld [vmem:[%s1 + $0x620] sm:$0xf]
    %v425 = vld [vmem:[%s1 + $0x624] sm:$0xf]
    %v426 = vld [vmem:[%s1 + $0x628] sm:$0xf]
    %v427 = vld [vmem:[%s1 + $0x62c] sm:$0xf]
    %v428 = vld [vmem:[%s1 + $0x630] sm:$0xf]
    %v429 = vld [vmem:[%s1 + $0x634] sm:$0xf]
    %v430 = vld [vmem:[%s1 + $0x638] sm:$0xf]
    %v431 = vld [vmem:[%s1 + $0x63c] sm:$0xf]
    %v432 = vld [vmem:[%s2] sm:$0x1]
    %v434 = vlaneseq
    %v435 = vshrl.u32 %v434, 7
    %v436 = vsub.s32 0, %v435
    %v437 = vrot.slane %v432, %v436
    %v443 = vcombine.high %v28, %v28
    %v445 = vunpack.c.l.s4 1966171168
    %v446 = vunpack.c.0.s8 %v445
    %v447 = vlaneseq
    %v448 = vshrl.u32 %v447, 7
    %v449 = vsub.s32 %v446, %v448
    %v450 = vrot.slane %v28, %v449
    %v452 = vunpack.c.l.s4 1966171168
    %v453 = vunpack.c.0.s8 %v452
    %v454 = vlaneseq
    %v455 = vshrl.u32 %v454, 7
    %v456 = vsub.s32 %v453, %v455
    %v457 = vrot.slane %v443, %v456
    %v458 = vcombine.high %v450, %v450
    %v459 = vcombine.high %v457, %v457
    %v461 = vunpack.c.l.s4 1966171168
    %v462 = vunpack.c.0.s8 %v461
    %v463 = vlaneseq
    %v464 = vshrl.u32 %v463, 7
    %v465 = vsub.s32 %v462, %v464
    %v466 = vrot.slane %v450, %v465
    %v468 = vunpack.c.l.s4 1966171168
    %v469 = vunpack.c.0.s8 %v468
    %v470 = vlaneseq
    %v471 = vshrl.u32 %v470, 7
    %v472 = vsub.s32 %v469, %v471
    %v473 = vrot.slane %v457, %v472
    %v475 = vunpack.c.l.s4 1966171168
    %v476 = vunpack.c.0.s8 %v475
    %v477 = vlaneseq
    %v478 = vshrl.u32 %v477, 7
    %v479 = vsub.s32 %v476, %v478
    %v480 = vrot.slane %v458, %v479
    %v482 = vunpack.c.l.s4 1966171168
    %v483 = vunpack.c.0.s8 %v482
    %v484 = vlaneseq
    %v485 = vshrl.u32 %v484, 7
    %v486 = vsub.s32 %v483, %v485
    %v487 = vrot.slane %v459, %v486
    %v488 = vcombine.high %v466, %v466
    %v489 = vcombine.high %v473, %v473
    %v490 = vcombine.high %v480, %v480
    %v491 = vcombine.high %v487, %v487
    %v492 = vcombine.high %v29, %v29
    %v494 = vunpack.c.l.s4 1966171168
    %v495 = vunpack.c.0.s8 %v494
    %v496 = vlaneseq
    %v497 = vshrl.u32 %v496, 7
    %v498 = vsub.s32 %v495, %v497
    %v499 = vrot.slane %v29, %v498
    %v501 = vunpack.c.l.s4 1966171168
    %v502 = vunpack.c.0.s8 %v501
    %v503 = vlaneseq
    %v504 = vshrl.u32 %v503, 7
    %v505 = vsub.s32 %v502, %v504
    %v506 = vrot.slane %v492, %v505
    %v507 = vcombine.high %v499, %v499
    %v508 = vcombine.high %v506, %v506
    %v510 = vunpack.c.l.s4 1966171168
    %v511 = vunpack.c.0.s8 %v510
    %v512 = vlaneseq
    %v513 = vshrl.u32 %v512, 7
    %v514 = vsub.s32 %v511, %v513
    %v515 = vrot.slane %v499, %v514
    %v517 = vunpack.c.l.s4 1966171168
    %v518 = vunpack.c.0.s8 %v517
    %v519 = vlaneseq
    %v520 = vshrl.u32 %v519, 7
    %v521 = vsub.s32 %v518, %v520
    %v522 = vrot.slane %v506, %v521
    %v524 = vunpack.c.l.s4 1966171168
    %v525 = vunpack.c.0.s8 %v524
    %v526 = vlaneseq
    %v527 = vshrl.u32 %v526, 7
    %v528 = vsub.s32 %v525, %v527
    %v529 = vrot.slane %v507, %v528
    %v531 = vunpack.c.l.s4 1966171168
    %v532 = vunpack.c.0.s8 %v531
    %v533 = vlaneseq
    %v534 = vshrl.u32 %v533, 7
    %v535 = vsub.s32 %v532, %v534
    %v536 = vrot.slane %v508, %v535
    %v537 = vcombine.high %v515, %v515
    %v538 = vcombine.high %v522, %v522
    %v539 = vcombine.high %v529, %v529
    %v540 = vcombine.high %v536, %v536
    %v541 = vcombine.high %v30, %v30
    %v543 = vunpack.c.l.s4 1966171168
    %v544 = vunpack.c.0.s8 %v543
    %v545 = vlaneseq
    %v546 = vshrl.u32 %v545, 7
    %v547 = vsub.s32 %v544, %v546
    %v548 = vrot.slane %v30, %v547
    %v550 = vunpack.c.l.s4 1966171168
    %v551 = vunpack.c.0.s8 %v550
    %v552 = vlaneseq
    %v553 = vshrl.u32 %v552, 7
    %v554 = vsub.s32 %v551, %v553
    %v555 = vrot.slane %v541, %v554
    %v556 = vcombine.high %v548, %v548
    %v557 = vcombine.high %v555, %v555
    %v559 = vunpack.c.l.s4 1966171168
    %v560 = vunpack.c.0.s8 %v559
    %v561 = vlaneseq
    %v562 = vshrl.u32 %v561, 7
    %v563 = vsub.s32 %v560, %v562
    %v564 = vrot.slane %v548, %v563
    %v566 = vunpack.c.l.s4 1966171168
    %v567 = vunpack.c.0.s8 %v566
    %v568 = vlaneseq
    %v569 = vshrl.u32 %v568, 7
    %v570 = vsub.s32 %v567, %v569
    %v571 = vrot.slane %v555, %v570
    %v573 = vunpack.c.l.s4 1966171168
    %v574 = vunpack.c.0.s8 %v573
    %v575 = vlaneseq
    %v576 = vshrl.u32 %v575, 7
    %v577 = vsub.s32 %v574, %v576
    %v578 = vrot.slane %v556, %v577
    %v580 = vunpack.c.l.s4 1966171168
    %v581 = vunpack.c.0.s8 %v580
    %v582 = vlaneseq
    %v583 = vshrl.u32 %v582, 7
    %v584 = vsub.s32 %v581, %v583
    %v585 = vrot.slane %v557, %v584
    %v586 = vcombine.high %v564, %v564
    %v587 = vcombine.high %v571, %v571
    %v588 = vcombine.high %v578, %v578
    %v589 = vcombine.high %v585, %v585
    %v591 = vunpack.c.l.s4 1966171168
    %v592 = vunpack.c.0.s8 %v591
    %v593 = vlaneseq
    %v594 = vshrl.u32 %v593, 7
    %v595 = vsub.s32 %v592, %v594
    %v596 = vrot.slane %v31, %v595
    %v598 = vunpack.c.l.s4 1966171168
    %v599 = vunpack.c.0.s8 %v598
    %v600 = vlaneseq
    %v601 = vshrl.u32 %v600, 7
    %v602 = vsub.s32 %v599, %v601
    %v603 = vrot.slane %v596, %v602
    %v1029 = vunpack.c.l.b16 %v32
    %v1030 = vunpack.c.l.b16 %v33
    %v1031 = vunpack.c.l.b16 %v34
    %v1032 = vunpack.c.l.b16 %v35
    %v1033 = vunpack.c.l.b16 %v36
    %v1034 = vunpack.c.l.b16 %v37
    %v1035 = vunpack.c.l.b16 %v38
    %v1036 = vunpack.c.l.b16 %v39
    %v1037 = vunpack.c.l.b16 %v40
    %v1038 = vunpack.c.l.b16 %v41
    %v1039 = vunpack.c.l.b16 %v42
    %v1040 = vunpack.c.l.b16 %v43
    %v1041 = vunpack.c.l.b16 %v44
    %v1042 = vunpack.c.l.b16 %v45
    %v1043 = vunpack.c.l.b16 %v46
    %v1044 = vunpack.c.l.b16 %v47
    %v1045 = vunpack.c.l.b16 %v48
    %v1046 = vunpack.c.l.b16 %v49
    %v1047 = vunpack.c.l.b16 %v50
    %v1048 = vunpack.c.l.b16 %v51
    %v1049 = vunpack.c.l.b16 %v52
    %v1050 = vunpack.c.l.b16 %v53
    %v1051 = vunpack.c.l.b16 %v54
    %v1052 = vunpack.c.l.b16 %v55
    %v1053 = vunpack.c.l.b16 %v56
    %v1054 = vunpack.c.l.b16 %v57
    %v1055 = vunpack.c.l.b16 %v58
    %v1056 = vunpack.c.l.b16 %v59
    %v1057 = vunpack.c.l.b16 %v60
    %v1058 = vunpack.c.l.b16 %v61
    %v1059 = vunpack.c.l.b16 %v62
    %v1060 = vunpack.c.l.b16 %v63
    %v1061 = vunpack.c.l.b16 %v64
    %v1062 = vunpack.c.l.b16 %v65
    %v1063 = vunpack.c.l.b16 %v66
    %v1064 = vunpack.c.l.b16 %v67
    %v1065 = vunpack.c.l.b16 %v68
    %v1066 = vunpack.c.l.b16 %v69
    %v1067 = vunpack.c.l.b16 %v70
    %v1068 = vunpack.c.l.b16 %v71
    %v1069 = vunpack.c.l.b16 %v72
    %v1070 = vunpack.c.l.b16 %v73
    %v1071 = vunpack.c.l.b16 %v74
    %v1072 = vunpack.c.l.b16 %v75
    %v1073 = vunpack.c.l.b16 %v76
    %v1074 = vunpack.c.l.b16 %v77
    %v1075 = vunpack.c.l.b16 %v78
    %v1076 = vunpack.c.l.b16 %v79
    %v1077 = vunpack.c.l.b16 %v80
    %v1078 = vunpack.c.l.b16 %v81
    %v1079 = vunpack.c.l.b16 %v82
    %v1080 = vunpack.c.l.b16 %v83
    %v1081 = vunpack.c.l.b16 %v84
    %v1082 = vunpack.c.l.b16 %v85
    %v1083 = vunpack.c.l.b16 %v86
    %v1084 = vunpack.c.l.b16 %v87
    %v1085 = vunpack.c.l.b16 %v88
    %v1086 = vunpack.c.l.b16 %v89
    %v1087 = vunpack.c.l.b16 %v90
    %v1088 = vunpack.c.l.b16 %v91
    %v1089 = vunpack.c.l.b16 %v92
    %v1090 = vunpack.c.l.b16 %v93
    %v1091 = vunpack.c.l.b16 %v94
    %v1092 = vunpack.c.l.b16 %v95
    %v1093 = vunpack.c.l.b16 %v96
    %v1094 = vunpack.c.l.b16 %v97
    %v1095 = vunpack.c.l.b16 %v98
    %v1096 = vunpack.c.l.b16 %v99
    %v1097 = vunpack.c.l.b16 %v100
    %v1098 = vunpack.c.l.b16 %v101
    %v1099 = vunpack.c.l.b16 %v102
    %v1100 = vunpack.c.l.b16 %v103
    %v1101 = vunpack.c.l.b16 %v104
    %v1102 = vunpack.c.l.b16 %v105
    %v1103 = vunpack.c.l.b16 %v106
    %v1104 = vunpack.c.l.b16 %v107
    %v1105 = vunpack.c.l.b16 %v108
    %v1106 = vunpack.c.l.b16 %v109
    %v1107 = vunpack.c.l.b16 %v110
    %v1108 = vunpack.c.l.b16 %v111
    %v1109 = vunpack.c.l.b16 %v112
    %v1110 = vunpack.c.l.b16 %v113
    %v1111 = vunpack.c.l.b16 %v114
    %v1112 = vunpack.c.l.b16 %v115
    %v1113 = vunpack.c.l.b16 %v116
    %v1114 = vunpack.c.l.b16 %v117
    %v1115 = vunpack.c.l.b16 %v118
    %v1116 = vunpack.c.l.b16 %v119
    %v1117 = vunpack.c.l.b16 %v120
    %v1118 = vunpack.c.l.b16 %v121
    %v1119 = vunpack.c.l.b16 %v122
    %v1120 = vunpack.c.l.b16 %v123
    %v1121 = vunpack.c.l.b16 %v124
    %v1122 = vunpack.c.l.b16 %v125
    %v1123 = vunpack.c.l.b16 %v126
    %v1124 = vunpack.c.l.b16 %v127
    %v1125 = vunpack.c.l.b16 %v128
    %v1126 = vunpack.c.l.b16 %v129
    %v1127 = vunpack.c.l.b16 %v130
    %v1128 = vunpack.c.l.b16 %v131
    %v1129 = vunpack.c.l.b16 %v132
    %v1130 = vunpack.c.l.b16 %v133
    %v1131 = vunpack.c.l.b16 %v134
    %v1132 = vunpack.c.l.b16 %v135
    %v1133 = vunpack.c.l.b16 %v136
    %v1134 = vunpack.c.l.b16 %v137
    %v1135 = vunpack.c.l.b16 %v138
    %v1136 = vunpack.c.l.b16 %v139
    %v1137 = vunpack.c.l.b16 %v140
    %v1138 = vunpack.c.l.b16 %v141
    %v1139 = vunpack.c.l.b16 %v142
    %v1140 = vunpack.c.l.b16 %v143
    %v1141 = vunpack.c.l.b16 %v144
    %v1142 = vunpack.c.l.b16 %v145
    %v1143 = vunpack.c.l.b16 %v146
    %v1144 = vunpack.c.l.b16 %v147
    %v1145 = vunpack.c.l.b16 %v148
    %v1146 = vunpack.c.l.b16 %v149
    %v1147 = vunpack.c.l.b16 %v150
    %v1148 = vunpack.c.l.b16 %v151
    %v1149 = vunpack.c.l.b16 %v152
    %v1150 = vunpack.c.l.b16 %v153
    %v1151 = vunpack.c.l.b16 %v154
    %v1152 = vunpack.c.l.b16 %v155
    %v1153 = vunpack.c.l.b16 %v156
    %v1154 = vunpack.c.l.b16 %v157
    %v1155 = vunpack.c.l.b16 %v158
    %v1156 = vunpack.c.l.b16 %v159
    %v1157 = vunpack.c.l.b16 %v160
    %v1158 = vunpack.c.l.b16 %v161
    %v1159 = vunpack.c.l.b16 %v162
    %v1160 = vunpack.c.l.b16 %v163
    %v1161 = vunpack.c.l.b16 %v164
    %v1162 = vunpack.c.l.b16 %v165
    %v1163 = vunpack.c.l.b16 %v166
    %v1164 = vunpack.c.l.b16 %v167
    %v1165 = vunpack.c.l.b16 %v168
    %v1166 = vunpack.c.l.b16 %v169
    %v1167 = vunpack.c.l.b16 %v170
    %v1168 = vunpack.c.l.b16 %v171
    %v1169 = vunpack.c.l.b16 %v172
    %v1170 = vunpack.c.l.b16 %v173
    %v1171 = vunpack.c.l.b16 %v174
    %v1172 = vunpack.c.l.b16 %v175
    %v1173 = vunpack.c.l.b16 %v176
    %v1174 = vunpack.c.l.b16 %v177
    %v1175 = vunpack.c.l.b16 %v178
    %v1176 = vunpack.c.l.b16 %v179
    %v1177 = vunpack.c.l.b16 %v180
    %v1178 = vunpack.c.l.b16 %v181
    %v1179 = vunpack.c.l.b16 %v182
    %v1180 = vunpack.c.l.b16 %v183
    %v1181 = vunpack.c.l.b16 %v184
    %v1182 = vunpack.c.l.b16 %v185
    %v1183 = vunpack.c.l.b16 %v186
    %v1184 = vunpack.c.l.b16 %v187
    %v1185 = vunpack.c.l.b16 %v188
    %v1186 = vunpack.c.l.b16 %v189
    %v1187 = vunpack.c.l.b16 %v190
    %v1188 = vunpack.c.l.b16 %v191
    %v1189 = vunpack.c.l.b16 %v192
    %v1190 = vunpack.c.l.b16 %v193
    %v1191 = vunpack.c.l.b16 %v194
    %v1192 = vunpack.c.l.b16 %v195
    %v1193 = vunpack.c.l.b16 %v196
    %v1194 = vunpack.c.l.b16 %v197
    %v1195 = vunpack.c.l.b16 %v198
    %v1196 = vunpack.c.l.b16 %v199
    %v1197 = vunpack.c.l.b16 %v200
    %v1198 = vunpack.c.l.b16 %v201
    %v1199 = vunpack.c.l.b16 %v202
    %v1200 = vunpack.c.l.b16 %v203
    %v1201 = vunpack.c.l.b16 %v204
    %v1202 = vunpack.c.l.b16 %v205
    %v1203 = vunpack.c.l.b16 %v206
    %v1204 = vunpack.c.l.b16 %v207
    %v1205 = vunpack.c.l.b16 %v208
    %v1206 = vunpack.c.l.b16 %v209
    %v1207 = vunpack.c.l.b16 %v210
    %v1208 = vunpack.c.l.b16 %v211
    %v1209 = vunpack.c.l.b16 %v212
    %v1210 = vunpack.c.l.b16 %v213
    %v1211 = vunpack.c.l.b16 %v214
    %v1212 = vunpack.c.l.b16 %v215
    %v1213 = vunpack.c.l.b16 %v216
    %v1214 = vunpack.c.l.b16 %v217
    %v1215 = vunpack.c.l.b16 %v218
    %v1216 = vunpack.c.l.b16 %v219
    %v1217 = vunpack.c.l.b16 %v220
    %v1218 = vunpack.c.l.b16 %v221
    %v1219 = vunpack.c.l.b16 %v222
    %v1220 = vunpack.c.l.b16 %v223
    %v1221 = vunpack.c.l.b16 %v224
    %v1222 = vunpack.c.l.b16 %v225
    %v1223 = vunpack.c.l.b16 %v226
    %v1224 = vunpack.c.l.b16 %v227
    %v1225 = vunpack.c.l.b16 %v228
    %v1226 = vunpack.c.l.b16 %v229
    %v1227 = vunpack.c.l.b16 %v230
    %v1228 = vunpack.c.l.b16 %v231
    %v1229 = vunpack.c.l.b16 %v232
    %v1230 = vunpack.c.l.b16 %v233
    %v1231 = vunpack.c.l.b16 %v234
    %v1232 = vunpack.c.l.b16 %v235
    %v1233 = vunpack.c.l.b16 %v236
    %v1234 = vunpack.c.l.b16 %v237
    %v1235 = vunpack.c.l.b16 %v238
    %v1236 = vunpack.c.l.b16 %v239
    %v1237 = vunpack.c.l.b16 %v240
    %v1238 = vunpack.c.l.b16 %v241
    %v1239 = vunpack.c.l.b16 %v242
    %v1240 = vunpack.c.l.b16 %v243
    %v1241 = vunpack.c.l.b16 %v244
    %v1242 = vunpack.c.l.b16 %v245
    %v1243 = vunpack.c.l.b16 %v246
    %v1244 = vunpack.c.l.b16 %v247
    %v1245 = vunpack.c.l.b16 %v248
    %v1246 = vunpack.c.l.b16 %v249
    %v1247 = vunpack.c.l.b16 %v250
    %v1248 = vunpack.c.l.b16 %v251
    %v1249 = vunpack.c.l.b16 %v252
    %v1250 = vunpack.c.l.b16 %v253
    %v1251 = vunpack.c.l.b16 %v254
    %v1252 = vunpack.c.l.b16 %v255
    %v1253 = vunpack.c.l.b16 %v256
    %v1254 = vunpack.c.l.b16 %v257
    %v1255 = vunpack.c.l.b16 %v258
    %v1256 = vunpack.c.l.b16 %v259
    %v1257 = vunpack.c.l.b16 %v260
    %v1258 = vunpack.c.l.b16 %v261
    %v1259 = vunpack.c.l.b16 %v262
    %v1260 = vunpack.c.l.b16 %v263
    %v1261 = vunpack.c.l.b16 %v264
    %v1262 = vunpack.c.l.b16 %v265
    %v1263 = vunpack.c.l.b16 %v266
    %v1264 = vunpack.c.l.b16 %v267
    %v1265 = vunpack.c.l.b16 %v268
    %v1266 = vunpack.c.l.b16 %v269
    %v1267 = vunpack.c.l.b16 %v270
    %v1268 = vunpack.c.l.b16 %v271
    %v1269 = vunpack.c.l.b16 %v272
    %v1270 = vunpack.c.l.b16 %v273
    %v1271 = vunpack.c.l.b16 %v274
    %v1272 = vunpack.c.l.b16 %v275
    %v1273 = vunpack.c.l.b16 %v276
    %v1274 = vunpack.c.l.b16 %v277
    %v1275 = vunpack.c.l.b16 %v278
    %v1276 = vunpack.c.l.b16 %v279
    %v1277 = vunpack.c.l.b16 %v280
    %v1278 = vunpack.c.l.b16 %v281
    %v1279 = vunpack.c.l.b16 %v282
    %v1280 = vunpack.c.l.b16 %v283
    %v1281 = vunpack.c.l.b16 %v284
    %v1282 = vunpack.c.l.b16 %v285
    %v1283 = vunpack.c.l.b16 %v286
    %v1284 = vunpack.c.l.b16 %v287
    %v1285 = vunpack.c.l.b16 %v288
    %v1286 = vunpack.c.l.b16 %v289
    %v1287 = vunpack.c.l.b16 %v290
    %v1288 = vunpack.c.l.b16 %v291
    %v1289 = vunpack.c.l.b16 %v292
    %v1290 = vunpack.c.l.b16 %v293
    %v1291 = vunpack.c.l.b16 %v294
    %v1292 = vunpack.c.l.b16 %v295
    %v1293 = vunpack.c.l.b16 %v296
    %v1294 = vunpack.c.l.b16 %v297
    %v1295 = vunpack.c.l.b16 %v298
    %v1296 = vunpack.c.l.b16 %v299
    %v1297 = vunpack.c.l.b16 %v300
    %v1298 = vunpack.c.l.b16 %v301
    %v1299 = vunpack.c.l.b16 %v302
    %v1300 = vunpack.c.l.b16 %v303
    %v1301 = vunpack.c.l.b16 %v304
    %v1302 = vunpack.c.l.b16 %v305
    %v1303 = vunpack.c.l.b16 %v306
    %v1304 = vunpack.c.l.b16 %v307
    %v1305 = vunpack.c.l.b16 %v308
    %v1306 = vunpack.c.l.b16 %v309
    %v1307 = vunpack.c.l.b16 %v310
    %v1308 = vunpack.c.l.b16 %v311
    %v1309 = vunpack.c.l.b16 %v312
    %v1310 = vunpack.c.l.b16 %v313
    %v1311 = vunpack.c.l.b16 %v314
    %v1312 = vunpack.c.l.b16 %v315
    %v1313 = vunpack.c.l.b16 %v316
    %v1314 = vunpack.c.l.b16 %v317
    %v1315 = vunpack.c.l.b16 %v318
    %v1316 = vunpack.c.l.b16 %v319
    %v1317 = vunpack.c.l.b16 %v320
    %v1318 = vunpack.c.l.b16 %v321
    %v1319 = vunpack.c.l.b16 %v322
    %v1320 = vunpack.c.l.b16 %v323
    %v1321 = vunpack.c.l.b16 %v324
    %v1322 = vunpack.c.l.b16 %v325
    %v1323 = vunpack.c.l.b16 %v326
    %v1324 = vunpack.c.l.b16 %v327
    %v1325 = vunpack.c.l.b16 %v328
    %v1326 = vunpack.c.l.b16 %v329
    %v1327 = vunpack.c.l.b16 %v330
    %v1328 = vunpack.c.l.b16 %v331
    %v1329 = vunpack.c.l.b16 %v332
    %v1330 = vunpack.c.l.b16 %v333
    %v1331 = vunpack.c.l.b16 %v334
    %v1332 = vunpack.c.l.b16 %v335
    %v1333 = vunpack.c.l.b16 %v336
    %v1334 = vunpack.c.l.b16 %v337
    %v1335 = vunpack.c.l.b16 %v338
    %v1336 = vunpack.c.l.b16 %v339
    %v1337 = vunpack.c.l.b16 %v340
    %v1338 = vunpack.c.l.b16 %v341
    %v1339 = vunpack.c.l.b16 %v342
    %v1340 = vunpack.c.l.b16 %v343
    %v1341 = vunpack.c.l.b16 %v344
    %v1342 = vunpack.c.l.b16 %v345
    %v1343 = vunpack.c.l.b16 %v346
    %v1344 = vunpack.c.l.b16 %v347
    %v1345 = vunpack.c.l.b16 %v348
    %v1346 = vunpack.c.l.b16 %v349
    %v1347 = vunpack.c.l.b16 %v350
    %v1348 = vunpack.c.l.b16 %v351
    %v1349 = vunpack.c.l.b16 %v352
    %v1350 = vunpack.c.l.b16 %v353
    %v1351 = vunpack.c.l.b16 %v354
    %v1352 = vunpack.c.l.b16 %v355
    %v1353 = vunpack.c.l.b16 %v356
    %v1354 = vunpack.c.l.b16 %v357
    %v1355 = vunpack.c.l.b16 %v358
    %v1356 = vunpack.c.l.b16 %v359
    %v1357 = vunpack.c.l.b16 %v360
    %v1358 = vunpack.c.l.b16 %v361
    %v1359 = vunpack.c.l.b16 %v362
    %v1360 = vunpack.c.l.b16 %v363
    %v1361 = vunpack.c.l.b16 %v364
    %v1362 = vunpack.c.l.b16 %v365
    %v1363 = vunpack.c.l.b16 %v366
    %v1364 = vunpack.c.l.b16 %v367
    %v1365 = vunpack.c.l.b16 %v368
    %v1366 = vunpack.c.l.b16 %v369
    %v1367 = vunpack.c.l.b16 %v370
    %v1368 = vunpack.c.l.b16 %v371
    %v1369 = vunpack.c.l.b16 %v372
    %v1370 = vunpack.c.l.b16 %v373
    %v1371 = vunpack.c.l.b16 %v374
    %v1372 = vunpack.c.l.b16 %v375
    %v1373 = vunpack.c.l.b16 %v376
    %v1374 = vunpack.c.l.b16 %v377
    %v1375 = vunpack.c.l.b16 %v378
    %v1376 = vunpack.c.l.b16 %v379
    %v1377 = vunpack.c.l.b16 %v380
    %v1378 = vunpack.c.l.b16 %v381
    %v1379 = vunpack.c.l.b16 %v382
    %v1380 = vunpack.c.l.b16 %v383
    %v1381 = vunpack.c.l.b16 %v384
    %v1382 = vunpack.c.l.b16 %v385
    %v1383 = vunpack.c.l.b16 %v386
    %v1384 = vunpack.c.l.b16 %v387
    %v1385 = vunpack.c.l.b16 %v388
    %v1386 = vunpack.c.l.b16 %v389
    %v1387 = vunpack.c.l.b16 %v390
    %v1388 = vunpack.c.l.b16 %v391
    %v1389 = vunpack.c.l.b16 %v392
    %v1390 = vunpack.c.l.b16 %v393
    %v1391 = vunpack.c.l.b16 %v394
    %v1392 = vunpack.c.l.b16 %v395
    %v1393 = vunpack.c.l.b16 %v396
    %v1394 = vunpack.c.l.b16 %v397
    %v1395 = vunpack.c.l.b16 %v398
    %v1396 = vunpack.c.l.b16 %v399
    %v1397 = vunpack.c.l.b16 %v400
    %v1398 = vunpack.c.l.b16 %v401
    %v1399 = vunpack.c.l.b16 %v402
    %v1400 = vunpack.c.l.b16 %v403
    %v1401 = vunpack.c.l.b16 %v404
    %v1402 = vunpack.c.l.b16 %v405
    %v1403 = vunpack.c.l.b16 %v406
    %v1404 = vunpack.c.l.b16 %v407
    %v1405 = vunpack.c.l.b16 %v408
    %v1406 = vunpack.c.l.b16 %v409
    %v1407 = vunpack.c.l.b16 %v410
    %v1408 = vunpack.c.l.b16 %v411
    %v1409 = vunpack.c.l.b16 %v412
    %v1410 = vunpack.c.l.b16 %v413
    %v1411 = vunpack.c.l.b16 %v414
    %v1412 = vunpack.c.l.b16 %v415
    %v1413 = vunpack.c.l.b16 %v416
    %v1414 = vunpack.c.l.b16 %v417
    %v1415 = vunpack.c.l.b16 %v418
    %v1416 = vunpack.c.l.b16 %v419
    %v1417 = vunpack.c.l.b16 %v420
    %v1418 = vunpack.c.l.b16 %v421
    %v1419 = vunpack.c.l.b16 %v422
    %v1420 = vunpack.c.l.b16 %v423
    %v1421 = vunpack.c.l.b16 %v424
    %v1422 = vunpack.c.l.b16 %v425
    %v1423 = vunpack.c.l.b16 %v426
    %v1424 = vunpack.c.l.b16 %v427
    %v1425 = vunpack.c.l.b16 %v428
    %v1426 = vunpack.c.l.b16 %v429
    %v1427 = vunpack.c.l.b16 %v430
    %v1428 = vunpack.c.l.b16 %v431
    %v1429 = vpack.c.b16 %v1030, %v1029
    %v1430 = vpack.c.b16 %v1032, %v1031
    %v1431 = vpack.c.b16 %v1034, %v1033
    %v1432 = vpack.c.b16 %v1036, %v1035
    %v1433 = vpack.c.b16 %v1038, %v1037
    %v1434 = vpack.c.b16 %v1040, %v1039
    %v1435 = vpack.c.b16 %v1042, %v1041
    %v1436 = vpack.c.b16 %v1044, %v1043
    %v1437 = vpack.c.b16 %v1046, %v1045
    %v1438 = vpack.c.b16 %v1048, %v1047
    %v1439 = vpack.c.b16 %v1050, %v1049
    %v1440 = vpack.c.b16 %v1052, %v1051
    %v1441 = vpack.c.b16 %v1054, %v1053
    %v1442 = vpack.c.b16 %v1056, %v1055
    %v1443 = vpack.c.b16 %v1058, %v1057
    %v1444 = vpack.c.b16 %v1060, %v1059
    %v1445 = vpack.c.b16 %v1062, %v1061
    %v1446 = vpack.c.b16 %v1064, %v1063
    %v1447 = vpack.c.b16 %v1066, %v1065
    %v1448 = vpack.c.b16 %v1068, %v1067
    %v1449 = vpack.c.b16 %v1070, %v1069
    %v1450 = vpack.c.b16 %v1072, %v1071
    %v1451 = vpack.c.b16 %v1074, %v1073
    %v1452 = vpack.c.b16 %v1076, %v1075
    %v1453 = vpack.c.b16 %v1078, %v1077
    %v1454 = vpack.c.b16 %v1080, %v1079
    %v1455 = vpack.c.b16 %v1082, %v1081
    %v1456 = vpack.c.b16 %v1084, %v1083
    %v1457 = vpack.c.b16 %v1086, %v1085
    %v1458 = vpack.c.b16 %v1088, %v1087
    %v1459 = vpack.c.b16 %v1090, %v1089
    %v1460 = vpack.c.b16 %v1092, %v1091
    %v1461 = vpack.c.b16 %v1094, %v1093
    %v1462 = vpack.c.b16 %v1096, %v1095
    %v1463 = vpack.c.b16 %v1098, %v1097
    %v1464 = vpack.c.b16 %v1100, %v1099
    %v1465 = vpack.c.b16 %v1102, %v1101
    %v1466 = vpack.c.b16 %v1104, %v1103
    %v1467 = vpack.c.b16 %v1106, %v1105
    %v1468 = vpack.c.b16 %v1108, %v1107
    %v1469 = vpack.c.b16 %v1110, %v1109
    %v1470 = vpack.c.b16 %v1112, %v1111
    %v1471 = vpack.c.b16 %v1114, %v1113
    %v1472 = vpack.c.b16 %v1116, %v1115
    %v1473 = vpack.c.b16 %v1118, %v1117
    %v1474 = vpack.c.b16 %v1120, %v1119
    %v1475 = vpack.c.b16 %v1122, %v1121
    %v1476 = vpack.c.b16 %v1124, %v1123
    %v1477 = vpack.c.b16 %v1126, %v1125
    %v1478 = vpack.c.b16 %v1128, %v1127
    %v1479 = vpack.c.b16 %v1130, %v1129
    %v1480 = vpack.c.b16 %v1132, %v1131
    %v1481 = vpack.c.b16 %v1134, %v1133
    %v1482 = vpack.c.b16 %v1136, %v1135
    %v1483 = vpack.c.b16 %v1138, %v1137
    %v1484 = vpack.c.b16 %v1140, %v1139
    %v1485 = vpack.c.b16 %v1142, %v1141
    %v1486 = vpack.c.b16 %v1144, %v1143
    %v1487 = vpack.c.b16 %v1146, %v1145
    %v1488 = vpack.c.b16 %v1148, %v1147
    %v1489 = vpack.c.b16 %v1150, %v1149
    %v1490 = vpack.c.b16 %v1152, %v1151
    %v1491 = vpack.c.b16 %v1154, %v1153
    %v1492 = vpack.c.b16 %v1156, %v1155
    %v1493 = vpack.c.b16 %v1158, %v1157
    %v1494 = vpack.c.b16 %v1160, %v1159
    %v1495 = vpack.c.b16 %v1162, %v1161
    %v1496 = vpack.c.b16 %v1164, %v1163
    %v1497 = vpack.c.b16 %v1166, %v1165
    %v1498 = vpack.c.b16 %v1168, %v1167
    %v1499 = vpack.c.b16 %v1170, %v1169
    %v1500 = vpack.c.b16 %v1172, %v1171
    %v1501 = vpack.c.b16 %v1174, %v1173
    %v1502 = vpack.c.b16 %v1176, %v1175
    %v1503 = vpack.c.b16 %v1178, %v1177
    %v1504 = vpack.c.b16 %v1180, %v1179
    %v1505 = vpack.c.b16 %v1182, %v1181
    %v1506 = vpack.c.b16 %v1184, %v1183
    %v1507 = vpack.c.b16 %v1186, %v1185
    %v1508 = vpack.c.b16 %v1188, %v1187
    %v1509 = vpack.c.b16 %v1190, %v1189
    %v1510 = vpack.c.b16 %v1192, %v1191
    %v1511 = vpack.c.b16 %v1194, %v1193
    %v1512 = vpack.c.b16 %v1196, %v1195
    %v1513 = vpack.c.b16 %v1198, %v1197
    %v1514 = vpack.c.b16 %v1200, %v1199
    %v1515 = vpack.c.b16 %v1202, %v1201
    %v1516 = vpack.c.b16 %v1204, %v1203
    %v1517 = vpack.c.b16 %v1206, %v1205
    %v1518 = vpack.c.b16 %v1208, %v1207
    %v1519 = vpack.c.b16 %v1210, %v1209
    %v1520 = vpack.c.b16 %v1212, %v1211
    %v1521 = vpack.c.b16 %v1214, %v1213
    %v1522 = vpack.c.b16 %v1216, %v1215
    %v1523 = vpack.c.b16 %v1218, %v1217
    %v1524 = vpack.c.b16 %v1220, %v1219
    %v1525 = vpack.c.b16 %v1222, %v1221
    %v1526 = vpack.c.b16 %v1224, %v1223
    %v1527 = vpack.c.b16 %v1226, %v1225
    %v1528 = vpack.c.b16 %v1228, %v1227
    %v1529 = vpack.c.b16 %v1230, %v1229
    %v1530 = vpack.c.b16 %v1232, %v1231
    %v1531 = vpack.c.b16 %v1234, %v1233
    %v1532 = vpack.c.b16 %v1236, %v1235
    %v1533 = vpack.c.b16 %v1238, %v1237
    %v1534 = vpack.c.b16 %v1240, %v1239
    %v1535 = vpack.c.b16 %v1242, %v1241
    %v1536 = vpack.c.b16 %v1244, %v1243
    %v1537 = vpack.c.b16 %v1246, %v1245
    %v1538 = vpack.c.b16 %v1248, %v1247
    %v1539 = vpack.c.b16 %v1250, %v1249
    %v1540 = vpack.c.b16 %v1252, %v1251
    %v1541 = vpack.c.b16 %v1254, %v1253
    %v1542 = vpack.c.b16 %v1256, %v1255
    %v1543 = vpack.c.b16 %v1258, %v1257
    %v1544 = vpack.c.b16 %v1260, %v1259
    %v1545 = vpack.c.b16 %v1262, %v1261
    %v1546 = vpack.c.b16 %v1264, %v1263
    %v1547 = vpack.c.b16 %v1266, %v1265
    %v1548 = vpack.c.b16 %v1268, %v1267
    %v1549 = vpack.c.b16 %v1270, %v1269
    %v1550 = vpack.c.b16 %v1272, %v1271
    %v1551 = vpack.c.b16 %v1274, %v1273
    %v1552 = vpack.c.b16 %v1276, %v1275
    %v1553 = vpack.c.b16 %v1278, %v1277
    %v1554 = vpack.c.b16 %v1280, %v1279
    %v1555 = vpack.c.b16 %v1282, %v1281
    %v1556 = vpack.c.b16 %v1284, %v1283
    %v1557 = vpack.c.b16 %v1286, %v1285
    %v1558 = vpack.c.b16 %v1288, %v1287
    %v1559 = vpack.c.b16 %v1290, %v1289
    %v1560 = vpack.c.b16 %v1292, %v1291
    %v1561 = vpack.c.b16 %v1294, %v1293
    %v1562 = vpack.c.b16 %v1296, %v1295
    %v1563 = vpack.c.b16 %v1298, %v1297
    %v1564 = vpack.c.b16 %v1300, %v1299
    %v1565 = vpack.c.b16 %v1302, %v1301
    %v1566 = vpack.c.b16 %v1304, %v1303
    %v1567 = vpack.c.b16 %v1306, %v1305
    %v1568 = vpack.c.b16 %v1308, %v1307
    %v1569 = vpack.c.b16 %v1310, %v1309
    %v1570 = vpack.c.b16 %v1312, %v1311
    %v1571 = vpack.c.b16 %v1314, %v1313
    %v1572 = vpack.c.b16 %v1316, %v1315
    %v1573 = vpack.c.b16 %v1318, %v1317
    %v1574 = vpack.c.b16 %v1320, %v1319
    %v1575 = vpack.c.b16 %v1322, %v1321
    %v1576 = vpack.c.b16 %v1324, %v1323
    %v1577 = vpack.c.b16 %v1326, %v1325
    %v1578 = vpack.c.b16 %v1328, %v1327
    %v1579 = vpack.c.b16 %v1330, %v1329
    %v1580 = vpack.c.b16 %v1332, %v1331
    %v1581 = vpack.c.b16 %v1334, %v1333
    %v1582 = vpack.c.b16 %v1336, %v1335
    %v1583 = vpack.c.b16 %v1338, %v1337
    %v1584 = vpack.c.b16 %v1340, %v1339
    %v1585 = vpack.c.b16 %v1342, %v1341
    %v1586 = vpack.c.b16 %v1344, %v1343
    %v1587 = vpack.c.b16 %v1346, %v1345
    %v1588 = vpack.c.b16 %v1348, %v1347
    %v1589 = vpack.c.b16 %v1350, %v1349
    %v1590 = vpack.c.b16 %v1352, %v1351
    %v1591 = vpack.c.b16 %v1354, %v1353
    %v1592 = vpack.c.b16 %v1356, %v1355
    %v1593 = vpack.c.b16 %v1358, %v1357
    %v1594 = vpack.c.b16 %v1360, %v1359
    %v1595 = vpack.c.b16 %v1362, %v1361
    %v1596 = vpack.c.b16 %v1364, %v1363
    %v1597 = vpack.c.b16 %v1366, %v1365
    %v1598 = vpack.c.b16 %v1368, %v1367
    %v1599 = vpack.c.b16 %v1370, %v1369
    %v1600 = vpack.c.b16 %v1372, %v1371
    %v1601 = vpack.c.b16 %v1374, %v1373
    %v1602 = vpack.c.b16 %v1376, %v1375
    %v1603 = vpack.c.b16 %v1378, %v1377
    %v1604 = vpack.c.b16 %v1380, %v1379
    %v1605 = vpack.c.b16 %v1382, %v1381
    %v1606 = vpack.c.b16 %v1384, %v1383
    %v1607 = vpack.c.b16 %v1386, %v1385
    %v1608 = vpack.c.b16 %v1388, %v1387
    %v1609 = vpack.c.b16 %v1390, %v1389
    %v1610 = vpack.c.b16 %v1392, %v1391
    %v1611 = vpack.c.b16 %v1394, %v1393
    %v1612 = vpack.c.b16 %v1396, %v1395
    %v1613 = vpack.c.b16 %v1398, %v1397
    %v1614 = vpack.c.b16 %v1400, %v1399
    %v1615 = vpack.c.b16 %v1402, %v1401
    %v1616 = vpack.c.b16 %v1404, %v1403
    %v1617 = vpack.c.b16 %v1406, %v1405
    %v1618 = vpack.c.b16 %v1408, %v1407
    %v1619 = vpack.c.b16 %v1410, %v1409
    %v1620 = vpack.c.b16 %v1412, %v1411
    %v1621 = vpack.c.b16 %v1414, %v1413
    %v1622 = vpack.c.b16 %v1416, %v1415
    %v1623 = vpack.c.b16 %v1418, %v1417
    %v1624 = vpack.c.b16 %v1420, %v1419
    %v1625 = vpack.c.b16 %v1422, %v1421
    %v1626 = vpack.c.b16 %v1424, %v1423
    %v1627 = vpack.c.b16 %v1426, %v1425
    %v1628 = vpack.c.b16 %v1428, %v1427
    %1829 = vmatprep.subr.bf16.mxu0 0
    %1830 = vmatpush1.bf16.msra.mxu0 %v1429
    %1831 = vmatprep.subr.bf16.mxu0 0
    %1832 = vmatpush1.bf16.msra.mxu0 %v1430
    %1833 = vmatprep.subr.bf16.mxu0 0
    %1834 = vmatpush1.bf16.msra.mxu0 %v1431
    %1835 = vmatprep.subr.bf16.mxu0 0
    %1836 = vmatpush1.bf16.msra.mxu0 %v1432
    %1837 = vmatprep.subr.bf16.mxu0 0
    %1838 = vmatpush1.bf16.msra.mxu0 %v1433
    %1839 = vmatprep.subr.bf16.mxu0 0
    %1840 = vmatpush1.bf16.msra.mxu0 %v1434
    %1841 = vmatprep.subr.bf16.mxu0 0
    %1842 = vmatpush1.bf16.msra.mxu0 %v1435
    %1843 = vmatprep.subr.bf16.mxu0 0
    %1844 = vmatpush1.bf16.msra.mxu0 %v1436
    %1845 = vmatprep.subr.bf16.mxu0 0
    %1846 = vmatpush1.bf16.msra.mxu0 %v1437
    %1847 = vmatprep.subr.bf16.mxu0 0
    %1848 = vmatpush1.bf16.msra.mxu0 %v1438
    %1849 = vmatprep.subr.bf16.mxu0 0
    %1850 = vmatpush1.bf16.msra.mxu0 %v1439
    %1851 = vmatprep.subr.bf16.mxu0 0
    %1852 = vmatpush1.bf16.msra.mxu0 %v1440
    %1853 = vmatprep.subr.bf16.mxu0 0
    %1854 = vmatpush1.bf16.msra.mxu0 %v1441
    %1855 = vmatprep.subr.bf16.mxu0 0
    %1856 = vmatpush1.bf16.msra.mxu0 %v1442
    %1857 = vmatprep.subr.bf16.mxu0 0
    %1858 = vmatpush1.bf16.msra.mxu0 %v1443
    %1859 = vmatprep.subr.bf16.mxu0 0
    %1860 = vmatpush1.bf16.msra.mxu0 %v1444
    %1861 = vmatprep.mubr.bf16.mxu0 %v480
    %1862 = vmatmul.mubr.bf16.gmra.mrb[0].mxu0 %v466
    %v1863 = vpop.f32.mrb[0].mxu0
    %v1864 = vadd.f32 %v437, %v1863
    %v1865 = vpop.f32.mrb[0].mxu0
    %v1866 = vpop.f32.mrb[0].mxu0
    %v1867 = vpop.f32.mrb[0].mxu0
    %1868 = vdwg.mxu0
    %1869 = vmatprep.subr.bf16.mxu0 0
    %1870 = vmatpush1.bf16.msra.mxu0 %v1445
    %1871 = vmatprep.subr.bf16.mxu0 0
    %1872 = vmatpush1.bf16.msra.mxu0 %v1446
    %1873 = vmatprep.subr.bf16.mxu0 0
    %1874 = vmatpush1.bf16.msra.mxu0 %v1447
    %1875 = vmatprep.subr.bf16.mxu0 0
    %1876 = vmatpush1.bf16.msra.mxu0 %v1448
    %1877 = vmatprep.subr.bf16.mxu0 0
    %1878 = vmatpush1.bf16.msra.mxu0 %v1449
    %1879 = vmatprep.subr.bf16.mxu0 0
    %1880 = vmatpush1.bf16.msra.mxu0 %v1450
    %1881 = vmatprep.subr.bf16.mxu0 0
    %1882 = vmatpush1.bf16.msra.mxu0 %v1451
    %1883 = vmatprep.subr.bf16.mxu0 0
    %1884 = vmatpush1.bf16.msra.mxu0 %v1452
    %1885 = vmatprep.subr.bf16.mxu0 0
    %1886 = vmatpush1.bf16.msra.mxu0 %v1453
    %1887 = vmatprep.subr.bf16.mxu0 0
    %1888 = vmatpush1.bf16.msra.mxu0 %v1454
    %1889 = vmatprep.subr.bf16.mxu0 0
    %1890 = vmatpush1.bf16.msra.mxu0 %v1455
    %1891 = vmatprep.subr.bf16.mxu0 0
    %1892 = vmatpush1.bf16.msra.mxu0 %v1456
    %1893 = vmatprep.subr.bf16.mxu0 0
    %1894 = vmatpush1.bf16.msra.mxu0 %v1457
    %1895 = vmatprep.subr.bf16.mxu0 0
    %1896 = vmatpush1.bf16.msra.mxu0 %v1458
    %1897 = vmatprep.subr.bf16.mxu0 0
    %1898 = vmatpush1.bf16.msra.mxu0 %v1459
    %1899 = vmatprep.subr.bf16.mxu0 0
    %1900 = vmatpush1.bf16.msra.mxu0 %v1460
    %1901 = vmatprep.mubr.bf16.mxu0 %v490
    %1902 = vmatmul.mubr.bf16.gmra.mrb[0].mxu0 %v488
    %v1903 = vpop.f32.mrb[0].mxu0
    %v1904 = vadd.f32 %v1864, %v1903
    %v1905 = vpop.f32.mrb[0].mxu0
    %v1906 = vpop.f32.mrb[0].mxu0
    %v1907 = vpop.f32.mrb[0].mxu0
    %1908 = vdwg.mxu0
    %1909 = vmatprep.subr.bf16.mxu0 0
    %1910 = vmatpush1.bf16.msra.mxu0 %v1461
    %1911 = vmatprep.subr.bf16.mxu0 0
    %1912 = vmatpush1.bf16.msra.mxu0 %v1462
    %1913 = vmatprep.subr.bf16.mxu0 0
    %1914 = vmatpush1.bf16.msra.mxu0 %v1463
    %1915 = vmatprep.subr.bf16.mxu0 0
    %1916 = vmatpush1.bf16.msra.mxu0 %v1464
    %1917 = vmatprep.subr.bf16.mxu0 0
    %1918 = vmatpush1.bf16.msra.mxu0 %v1465
    %1919 = vmatprep.subr.bf16.mxu0 0
    %1920 = vmatpush1.bf16.msra.mxu0 %v1466
    %1921 = vmatprep.subr.bf16.mxu0 0
    %1922 = vmatpush1.bf16.msra.mxu0 %v1467
    %1923 = vmatprep.subr.bf16.mxu0 0
    %1924 = vmatpush1.bf16.msra.mxu0 %v1468
    %1925 = vmatprep.subr.bf16.mxu0 0
    %1926 = vmatpush1.bf16.msra.mxu0 %v1469
    %1927 = vmatprep.subr.bf16.mxu0 0
    %1928 = vmatpush1.bf16.msra.mxu0 %v1470
    %1929 = vmatprep.subr.bf16.mxu0 0
    %1930 = vmatpush1.bf16.msra.mxu0 %v1471
    %1931 = vmatprep.subr.bf16.mxu0 0
    %1932 = vmatpush1.bf16.msra.mxu0 %v1472
    %1933 = vmatprep.subr.bf16.mxu0 0
    %1934 = vmatpush1.bf16.msra.mxu0 %v1473
    %1935 = vmatprep.subr.bf16.mxu0 0
    %1936 = vmatpush1.bf16.msra.mxu0 %v1474
    %1937 = vmatprep.subr.bf16.mxu0 0
    %1938 = vmatpush1.bf16.msra.mxu0 %v1475
    %1939 = vmatprep.subr.bf16.mxu0 0
    %1940 = vmatpush1.bf16.msra.mxu0 %v1476
    %1941 = vmatprep.mubr.bf16.mxu0 %v487
    %1942 = vmatmul.mubr.bf16.gmra.mrb[0].mxu0 %v473
    %v1943 = vpop.f32.mrb[0].mxu0
    %v1944 = vadd.f32 %v1904, %v1943
    %v1945 = vpop.f32.mrb[0].mxu0
    %v1946 = vpop.f32.mrb[0].mxu0
    %v1947 = vpop.f32.mrb[0].mxu0
    %1948 = vdwg.mxu0
    %1949 = vmatprep.subr.bf16.mxu0 0
    %1950 = vmatpush1.bf16.msra.mxu0 %v1477
    %1951 = vmatprep.subr.bf16.mxu0 0
    %1952 = vmatpush1.bf16.msra.mxu0 %v1478
    %1953 = vmatprep.subr.bf16.mxu0 0
    %1954 = vmatpush1.bf16.msra.mxu0 %v1479
    %1955 = vmatprep.subr.bf16.mxu0 0
    %1956 = vmatpush1.bf16.msra.mxu0 %v1480
    %1957 = vmatprep.subr.bf16.mxu0 0
    %1958 = vmatpush1.bf16.msra.mxu0 %v1481
    %1959 = vmatprep.subr.bf16.mxu0 0
    %1960 = vmatpush1.bf16.msra.mxu0 %v1482
    %1961 = vmatprep.subr.bf16.mxu0 0
    %1962 = vmatpush1.bf16.msra.mxu0 %v1483
    %1963 = vmatprep.subr.bf16.mxu0 0
    %1964 = vmatpush1.bf16.msra.mxu0 %v1484
    %1965 = vmatprep.subr.bf16.mxu0 0
    %1966 = vmatpush1.bf16.msra.mxu0 %v1485
    %1967 = vmatprep.subr.bf16.mxu0 0
    %1968 = vmatpush1.bf16.msra.mxu0 %v1486
    %1969 = vmatprep.subr.bf16.mxu0 0
    %1970 = vmatpush1.bf16.msra.mxu0 %v1487
    %1971 = vmatprep.subr.bf16.mxu0 0
    %1972 = vmatpush1.bf16.msra.mxu0 %v1488
    %1973 = vmatprep.subr.bf16.mxu0 0
    %1974 = vmatpush1.bf16.msra.mxu0 %v1489
    %1975 = vmatprep.subr.bf16.mxu0 0
    %1976 = vmatpush1.bf16.msra.mxu0 %v1490
    %1977 = vmatprep.subr.bf16.mxu0 0
    %1978 = vmatpush1.bf16.msra.mxu0 %v1491
    %1979 = vmatprep.subr.bf16.mxu0 0
    %1980 = vmatpush1.bf16.msra.mxu0 %v1492
    %1981 = vmatprep.mubr.bf16.mxu0 %v491
    %1982 = vmatmul.mubr.bf16.gmra.mrb[0].mxu0 %v489
    %v1983 = vpop.f32.mrb[0].mxu0
    %v1984 = vadd.f32 %v1944, %v1983
    %v1985 = vpop.f32.mrb[0].mxu0
    %v1986 = vpop.f32.mrb[0].mxu0
    %v1987 = vpop.f32.mrb[0].mxu0
    %1988 = vdwg.mxu0
    %1989 = vmatprep.subr.bf16.mxu0 0
    %1990 = vmatpush1.bf16.msra.mxu0 %v1493
    %1991 = vmatprep.subr.bf16.mxu0 0
    %1992 = vmatpush1.bf16.msra.mxu0 %v1494
    %1993 = vmatprep.subr.bf16.mxu0 0
    %1994 = vmatpush1.bf16.msra.mxu0 %v1495
    %1995 = vmatprep.subr.bf16.mxu0 0
    %1996 = vmatpush1.bf16.msra.mxu0 %v1496
    %1997 = vmatprep.subr.bf16.mxu0 0
    %1998 = vmatpush1.bf16.msra.mxu0 %v1497
    %1999 = vmatprep.subr.bf16.mxu0 0
    %2000 = vmatpush1.bf16.msra.mxu0 %v1498
    %2001 = vmatprep.subr.bf16.mxu0 0
    %2002 = vmatpush1.bf16.msra.mxu0 %v1499
    %2003 = vmatprep.subr.bf16.mxu0 0
    %2004 = vmatpush1.bf16.msra.mxu0 %v1500
    %2005 = vmatprep.subr.bf16.mxu0 0
    %2006 = vmatpush1.bf16.msra.mxu0 %v1501
    %2007 = vmatprep.subr.bf16.mxu0 0
    %2008 = vmatpush1.bf16.msra.mxu0 %v1502
    %2009 = vmatprep.subr.bf16.mxu0 0
    %2010 = vmatpush1.bf16.msra.mxu0 %v1503
    %2011 = vmatprep.subr.bf16.mxu0 0
    %2012 = vmatpush1.bf16.msra.mxu0 %v1504
    %2013 = vmatprep.subr.bf16.mxu0 0
    %2014 = vmatpush1.bf16.msra.mxu0 %v1505
    %2015 = vmatprep.subr.bf16.mxu0 0
    %2016 = vmatpush1.bf16.msra.mxu0 %v1506
    %2017 = vmatprep.subr.bf16.mxu0 0
    %2018 = vmatpush1.bf16.msra.mxu0 %v1507
    %2019 = vmatprep.subr.bf16.mxu0 0
    %2020 = vmatpush1.bf16.msra.mxu0 %v1508
    %2021 = vmatprep.mubr.bf16.mxu0 %v529
    %2022 = vmatmul.mubr.bf16.gmra.mrb[0].mxu0 %v515
    %v2023 = vpop.f32.mrb[0].mxu0
    %v2024 = vadd.f32 %v1984, %v2023
    %v2025 = vpop.f32.mrb[0].mxu0
    %v2026 = vpop.f32.mrb[0].mxu0
    %v2027 = vpop.f32.mrb[0].mxu0
    %2028 = vdwg.mxu0
    %2029 = vmatprep.subr.bf16.mxu0 0
    %2030 = vmatpush1.bf16.msra.mxu0 %v1509
    %2031 = vmatprep.subr.bf16.mxu0 0
    %2032 = vmatpush1.bf16.msra.mxu0 %v1510
    %2033 = vmatprep.subr.bf16.mxu0 0
    %2034 = vmatpush1.bf16.msra.mxu0 %v1511
    %2035 = vmatprep.subr.bf16.mxu0 0
    %2036 = vmatpush1.bf16.msra.mxu0 %v1512
    %2037 = vmatprep.subr.bf16.mxu0 0
    %2038 = vmatpush1.bf16.msra.mxu0 %v1513
    %2039 = vmatprep.subr.bf16.mxu0 0
    %2040 = vmatpush1.bf16.msra.mxu0 %v1514
    %2041 = vmatprep.subr.bf16.mxu0 0
    %2042 = vmatpush1.bf16.msra.mxu0 %v1515
    %2043 = vmatprep.subr.bf16.mxu0 0
    %2044 = vmatpush1.bf16.msra.mxu0 %v1516
    %2045 = vmatprep.subr.bf16.mxu0 0
    %2046 = vmatpush1.bf16.msra.mxu0 %v1517
    %2047 = vmatprep.subr.bf16.mxu0 0
    %2048 = vmatpush1.bf16.msra.mxu0 %v1518
    %2049 = vmatprep.subr.bf16.mxu0 0
    %2050 = vmatpush1.bf16.msra.mxu0 %v1519
    %2051 = vmatprep.subr.bf16.mxu0 0
    %2052 = vmatpush1.bf16.msra.mxu0 %v1520
    %2053 = vmatprep.subr.bf16.mxu0 0
    %2054 = vmatpush1.bf16.msra.mxu0 %v1521
    %2055 = vmatprep.subr.bf16.mxu0 0
    %2056 = vmatpush1.bf16.msra.mxu0 %v1522
    %2057 = vmatprep.subr.bf16.mxu0 0
    %2058 = vmatpush1.bf16.msra.mxu0 %v1523
    %2059 = vmatprep.subr.bf16.mxu0 0
    %2060 = vmatpush1.bf16.msra.mxu0 %v1524
    %2061 = vmatprep.mubr.bf16.mxu0 %v539
    %2062 = vmatmul.mubr.bf16.gmra.mrb[0].mxu0 %v537
    %v2063 = vpop.f32.mrb[0].mxu0
    %v2064 = vadd.f32 %v2024, %v2063
    %v2065 = vpop.f32.mrb[0].mxu0
    %v2066 = vpop.f32.mrb[0].mxu0
    %v2067 = vpop.f32.mrb[0].mxu0
    %2068 = vdwg.mxu0
    %2069 = vmatprep.subr.bf16.mxu0 0
    %2070 = vmatpush1.bf16.msra.mxu0 %v1525
    %2071 = vmatprep.subr.bf16.mxu0 0
    %2072 = vmatpush1.bf16.msra.mxu0 %v1526
    %2073 = vmatprep.subr.bf16.mxu0 0
    %2074 = vmatpush1.bf16.msra.mxu0 %v1527
    %2075 = vmatprep.subr.bf16.mxu0 0
    %2076 = vmatpush1.bf16.msra.mxu0 %v1528
    %2077 = vmatprep.subr.bf16.mxu0 0
    %2078 = vmatpush1.bf16.msra.mxu0 %v1529
    %2079 = vmatprep.subr.bf16.mxu0 0
    %2080 = vmatpush1.bf16.msra.mxu0 %v1530
    %2081 = vmatprep.subr.bf16.mxu0 0
    %2082 = vmatpush1.bf16.msra.mxu0 %v1531
    %2083 = vmatprep.subr.bf16.mxu0 0
    %2084 = vmatpush1.bf16.msra.mxu0 %v1532
    %2085 = vmatprep.subr.bf16.mxu0 0
    %2086 = vmatpush1.bf16.msra.mxu0 %v1533
    %2087 = vmatprep.subr.bf16.mxu0 0
    %2088 = vmatpush1.bf16.msra.mxu0 %v1534
    %2089 = vmatprep.subr.bf16.mxu0 0
    %2090 = vmatpush1.bf16.msra.mxu0 %v1535
    %2091 = vmatprep.subr.bf16.mxu0 0
    %2092 = vmatpush1.bf16.msra.mxu0 %v1536
    %2093 = vmatprep.subr.bf16.mxu0 0
    %2094 = vmatpush1.bf16.msra.mxu0 %v1537
    %2095 = vmatprep.subr.bf16.mxu0 0
    %2096 = vmatpush1.bf16.msra.mxu0 %v1538
    %2097 = vmatprep.subr.bf16.mxu0 0
    %2098 = vmatpush1.bf16.msra.mxu0 %v1539
    %2099 = vmatprep.subr.bf16.mxu0 0
    %2100 = vmatpush1.bf16.msra.mxu0 %v1540
    %2101 = vmatprep.mubr.bf16.mxu0 %v536
    %2102 = vmatmul.mubr.bf16.gmra.mrb[0].mxu0 %v522
    %v2103 = vpop.f32.mrb[0].mxu0
    %v2104 = vadd.f32 %v2064, %v2103
    %v2105 = vpop.f32.mrb[0].mxu0
    %v2106 = vpop.f32.mrb[0].mxu0
    %v2107 = vpop.f32.mrb[0].mxu0
    %2108 = vdwg.mxu0
    %2109 = vmatprep.subr.bf16.mxu0 0
    %2110 = vmatpush1.bf16.msra.mxu0 %v1541
    %2111 = vmatprep.subr.bf16.mxu0 0
    %2112 = vmatpush1.bf16.msra.mxu0 %v1542
    %2113 = vmatprep.subr.bf16.mxu0 0
    %2114 = vmatpush1.bf16.msra.mxu0 %v1543
    %2115 = vmatprep.subr.bf16.mxu0 0
    %2116 = vmatpush1.bf16.msra.mxu0 %v1544
    %2117 = vmatprep.subr.bf16.mxu0 0
    %2118 = vmatpush1.bf16.msra.mxu0 %v1545
    %2119 = vmatprep.subr.bf16.mxu0 0
    %2120 = vmatpush1.bf16.msra.mxu0 %v1546
    %2121 = vmatprep.subr.bf16.mxu0 0
    %2122 = vmatpush1.bf16.msra.mxu0 %v1547
    %2123 = vmatprep.subr.bf16.mxu0 0
    %2124 = vmatpush1.bf16.msra.mxu0 %v1548
    %2125 = vmatprep.subr.bf16.mxu0 0
    %2126 = vmatpush1.bf16.msra.mxu0 %v1549
    %2127 = vmatprep.subr.bf16.mxu0 0
    %2128 = vmatpush1.bf16.msra.mxu0 %v1550
    %2129 = vmatprep.subr.bf16.mxu0 0
    %2130 = vmatpush1.bf16.msra.mxu0 %v1551
    %2131 = vmatprep.subr.bf16.mxu0 0
    %2132 = vmatpush1.bf16.msra.mxu0 %v1552
    %2133 = vmatprep.subr.bf16.mxu0 0
    %2134 = vmatpush1.bf16.msra.mxu0 %v1553
    %2135 = vmatprep.subr.bf16.mxu0 0
    %2136 = vmatpush1.bf16.msra.mxu0 %v1554
    %2137 = vmatprep.subr.bf16.mxu0 0
    %2138 = vmatpush1.bf16.msra.mxu0 %v1555
    %2139 = vmatprep.subr.bf16.mxu0 0
    %2140 = vmatpush1.bf16.msra.mxu0 %v1556
    %2141 = vmatprep.mubr.bf16.mxu0 %v540
    %2142 = vmatmul.mubr.bf16.gmra.mrb[0].mxu0 %v538
    %v2143 = vpop.f32.mrb[0].mxu0
    %v2144 = vadd.f32 %v2104, %v2143
    %v2145 = vpop.f32.mrb[0].mxu0
    %v2146 = vpop.f32.mrb[0].mxu0
    %v2147 = vpop.f32.mrb[0].mxu0
    %2148 = vdwg.mxu0
    %2149 = vmatprep.subr.bf16.mxu0 0
    %2150 = vmatpush1.bf16.msra.mxu0 %v1557
    %2151 = vmatprep.subr.bf16.mxu0 0
    %2152 = vmatpush1.bf16.msra.mxu0 %v1558
    %2153 = vmatprep.subr.bf16.mxu0 0
    %2154 = vmatpush1.bf16.msra.mxu0 %v1559
    %2155 = vmatprep.subr.bf16.mxu0 0
    %2156 = vmatpush1.bf16.msra.mxu0 %v1560
    %2157 = vmatprep.subr.bf16.mxu0 0
    %2158 = vmatpush1.bf16.msra.mxu0 %v1561
    %2159 = vmatprep.subr.bf16.mxu0 0
    %2160 = vmatpush1.bf16.msra.mxu0 %v1562
    %2161 = vmatprep.subr.bf16.mxu0 0
    %2162 = vmatpush1.bf16.msra.mxu0 %v1563
    %2163 = vmatprep.subr.bf16.mxu0 0
    %2164 = vmatpush1.bf16.msra.mxu0 %v1564
    %2165 = vmatprep.subr.bf16.mxu0 0
    %2166 = vmatpush1.bf16.msra.mxu0 %v1565
    %2167 = vmatprep.subr.bf16.mxu0 0
    %2168 = vmatpush1.bf16.msra.mxu0 %v1566
    %2169 = vmatprep.subr.bf16.mxu0 0
    %2170 = vmatpush1.bf16.msra.mxu0 %v1567
    %2171 = vmatprep.subr.bf16.mxu0 0
    %2172 = vmatpush1.bf16.msra.mxu0 %v1568
    %2173 = vmatprep.subr.bf16.mxu0 0
    %2174 = vmatpush1.bf16.msra.mxu0 %v1569
    %2175 = vmatprep.subr.bf16.mxu0 0
    %2176 = vmatpush1.bf16.msra.mxu0 %v1570
    %2177 = vmatprep.subr.bf16.mxu0 0
    %2178 = vmatpush1.bf16.msra.mxu0 %v1571
    %2179 = vmatprep.subr.bf16.mxu0 0
    %2180 = vmatpush1.bf16.msra.mxu0 %v1572
    %2181 = vmatprep.mubr.bf16.mxu0 %v578
    %2182 = vmatmul.mubr.bf16.gmra.mrb[0].mxu0 %v564
    %v2183 = vpop.f32.mrb[0].mxu0
    %v2184 = vadd.f32 %v2144, %v2183
    %v2185 = vpop.f32.mrb[0].mxu0
    %v2186 = vpop.f32.mrb[0].mxu0
    %v2187 = vpop.f32.mrb[0].mxu0
    %2188 = vdwg.mxu0
    %2189 = vmatprep.subr.bf16.mxu0 0
    %2190 = vmatpush1.bf16.msra.mxu0 %v1573
    %2191 = vmatprep.subr.bf16.mxu0 0
    %2192 = vmatpush1.bf16.msra.mxu0 %v1574
    %2193 = vmatprep.subr.bf16.mxu0 0
    %2194 = vmatpush1.bf16.msra.mxu0 %v1575
    %2195 = vmatprep.subr.bf16.mxu0 0
    %2196 = vmatpush1.bf16.msra.mxu0 %v1576
    %2197 = vmatprep.subr.bf16.mxu0 0
    %2198 = vmatpush1.bf16.msra.mxu0 %v1577
    %2199 = vmatprep.subr.bf16.mxu0 0
    %2200 = vmatpush1.bf16.msra.mxu0 %v1578
    %2201 = vmatprep.subr.bf16.mxu0 0
    %2202 = vmatpush1.bf16.msra.mxu0 %v1579
    %2203 = vmatprep.subr.bf16.mxu0 0
    %2204 = vmatpush1.bf16.msra.mxu0 %v1580
    %2205 = vmatprep.subr.bf16.mxu0 0
    %2206 = vmatpush1.bf16.msra.mxu0 %v1581
    %2207 = vmatprep.subr.bf16.mxu0 0
    %2208 = vmatpush1.bf16.msra.mxu0 %v1582
    %2209 = vmatprep.subr.bf16.mxu0 0
    %2210 = vmatpush1.bf16.msra.mxu0 %v1583
    %2211 = vmatprep.subr.bf16.mxu0 0
    %2212 = vmatpush1.bf16.msra.mxu0 %v1584
    %2213 = vmatprep.subr.bf16.mxu0 0
    %2214 = vmatpush1.bf16.msra.mxu0 %v1585
    %2215 = vmatprep.subr.bf16.mxu0 0
    %2216 = vmatpush1.bf16.msra.mxu0 %v1586
    %2217 = vmatprep.subr.bf16.mxu0 0
    %2218 = vmatpush1.bf16.msra.mxu0 %v1587
    %2219 = vmatprep.subr.bf16.mxu0 0
    %2220 = vmatpush1.bf16.msra.mxu0 %v1588
    %2221 = vmatprep.mubr.bf16.mxu0 %v588
    %2222 = vmatmul.mubr.bf16.gmra.mrb[0].mxu0 %v586
    %v2223 = vpop.f32.mrb[0].mxu0
    %v2224 = vadd.f32 %v2184, %v2223
    %v2225 = vpop.f32.mrb[0].mxu0
    %v2226 = vpop.f32.mrb[0].mxu0
    %v2227 = vpop.f32.mrb[0].mxu0
    %2228 = vdwg.mxu0
    %2229 = vmatprep.subr.bf16.mxu0 0
    %2230 = vmatpush1.bf16.msra.mxu0 %v1589
    %2231 = vmatprep.subr.bf16.mxu0 0
    %2232 = vmatpush1.bf16.msra.mxu0 %v1590
    %2233 = vmatprep.subr.bf16.mxu0 0
    %2234 = vmatpush1.bf16.msra.mxu0 %v1591
    %2235 = vmatprep.subr.bf16.mxu0 0
    %2236 = vmatpush1.bf16.msra.mxu0 %v1592
    %2237 = vmatprep.subr.bf16.mxu0 0
    %2238 = vmatpush1.bf16.msra.mxu0 %v1593
    %2239 = vmatprep.subr.bf16.mxu0 0
    %2240 = vmatpush1.bf16.msra.mxu0 %v1594
    %2241 = vmatprep.subr.bf16.mxu0 0
    %2242 = vmatpush1.bf16.msra.mxu0 %v1595
    %2243 = vmatprep.subr.bf16.mxu0 0
    %2244 = vmatpush1.bf16.msra.mxu0 %v1596
    %2245 = vmatprep.subr.bf16.mxu0 0
    %2246 = vmatpush1.bf16.msra.mxu0 %v1597
    %2247 = vmatprep.subr.bf16.mxu0 0
    %2248 = vmatpush1.bf16.msra.mxu0 %v1598
    %2249 = vmatprep.subr.bf16.mxu0 0
    %2250 = vmatpush1.bf16.msra.mxu0 %v1599
    %2251 = vmatprep.subr.bf16.mxu0 0
    %2252 = vmatpush1.bf16.msra.mxu0 %v1600
    %2253 = vmatprep.subr.bf16.mxu0 0
    %2254 = vmatpush1.bf16.msra.mxu0 %v1601
    %2255 = vmatprep.subr.bf16.mxu0 0
    %2256 = vmatpush1.bf16.msra.mxu0 %v1602
    %2257 = vmatprep.subr.bf16.mxu0 0
    %2258 = vmatpush1.bf16.msra.mxu0 %v1603
    %2259 = vmatprep.subr.bf16.mxu0 0
    %2260 = vmatpush1.bf16.msra.mxu0 %v1604
    %2261 = vmatprep.mubr.bf16.mxu0 %v585
    %2262 = vmatmul.mubr.bf16.gmra.mrb[0].mxu0 %v571
    %v2263 = vpop.f32.mrb[0].mxu0
    %v2264 = vadd.f32 %v2224, %v2263
    %v2265 = vpop.f32.mrb[0].mxu0
    %v2266 = vpop.f32.mrb[0].mxu0
    %v2267 = vpop.f32.mrb[0].mxu0
    %2268 = vdwg.mxu0
    %2269 = vmatprep.subr.bf16.mxu0 0
    %2270 = vmatpush1.bf16.msra.mxu0 %v1605
    %2271 = vmatprep.subr.bf16.mxu0 0
    %2272 = vmatpush1.bf16.msra.mxu0 %v1606
    %2273 = vmatprep.subr.bf16.mxu0 0
    %2274 = vmatpush1.bf16.msra.mxu0 %v1607
    %2275 = vmatprep.subr.bf16.mxu0 0
    %2276 = vmatpush1.bf16.msra.mxu0 %v1608
    %2277 = vmatprep.subr.bf16.mxu0 0
    %2278 = vmatpush1.bf16.msra.mxu0 %v1609
    %2279 = vmatprep.subr.bf16.mxu0 0
    %2280 = vmatpush1.bf16.msra.mxu0 %v1610
    %2281 = vmatprep.subr.bf16.mxu0 0
    %2282 = vmatpush1.bf16.msra.mxu0 %v1611
    %2283 = vmatprep.subr.bf16.mxu0 0
    %2284 = vmatpush1.bf16.msra.mxu0 %v1612
    %2285 = vmatprep.subr.bf16.mxu0 0
    %2286 = vmatpush1.bf16.msra.mxu0 %v1613
    %2287 = vmatprep.subr.bf16.mxu0 0
    %2288 = vmatpush1.bf16.msra.mxu0 %v1614
    %2289 = vmatprep.subr.bf16.mxu0 0
    %2290 = vmatpush1.bf16.msra.mxu0 %v1615
    %2291 = vmatprep.subr.bf16.mxu0 0
    %2292 = vmatpush1.bf16.msra.mxu0 %v1616
    %2293 = vmatprep.subr.bf16.mxu0 0
    %2294 = vmatpush1.bf16.msra.mxu0 %v1617
    %2295 = vmatprep.subr.bf16.mxu0 0
    %2296 = vmatpush1.bf16.msra.mxu0 %v1618
    %2297 = vmatprep.subr.bf16.mxu0 0
    %2298 = vmatpush1.bf16.msra.mxu0 %v1619
    %2299 = vmatprep.subr.bf16.mxu0 0
    %2300 = vmatpush1.bf16.msra.mxu0 %v1620
    %2301 = vmatprep.mubr.bf16.mxu0 %v589
    %2302 = vmatmul.mubr.bf16.gmra.mrb[0].mxu0 %v587
    %v2303 = vpop.f32.mrb[0].mxu0
    %v2304 = vadd.f32 %v2264, %v2303
    %v2305 = vpop.f32.mrb[0].mxu0
    %v2306 = vpop.f32.mrb[0].mxu0
    %v2307 = vpop.f32.mrb[0].mxu0
    %2308 = vdwg.mxu0
    %2309 = vmatprep.subr.bf16.mxu0 0
    %2310 = vmatpush1.bf16.msra.mxu0 %v1621
    %2311 = vmatprep.subr.bf16.mxu0 0
    %2312 = vmatpush1.bf16.msra.mxu0 %v1622
    %2313 = vmatprep.subr.bf16.mxu0 0
    %2314 = vmatpush1.bf16.msra.mxu0 %v1623
    %2315 = vmatprep.subr.bf16.mxu0 0
    %2316 = vmatpush1.bf16.msra.mxu0 %v1624
    %2317 = vmatprep.subr.bf16.mxu0 0
    %2318 = vmatpush1.bf16.msra.mxu0 %v1625
    %2319 = vmatprep.subr.bf16.mxu0 0
    %2320 = vmatpush1.bf16.msra.mxu0 %v1626
    %2321 = vmatprep.subr.bf16.mxu0 0
    %2322 = vmatpush1.bf16.msra.mxu0 %v1627
    %2323 = vmatprep.subr.bf16.mxu0 0
    %2324 = vmatpush1.bf16.msra.mxu0 %v1628
    %2325 = vmatprep.subr.bf16.mxu0 0
    %2326 = vmatpush1.bf16.msra.mxu0 0
    %2327 = vmatprep.subr.bf16.mxu0 0
    %2328 = vmatpush1.bf16.msra.mxu0 0
    %2329 = vmatprep.subr.bf16.mxu0 0
    %2330 = vmatpush1.bf16.msra.mxu0 0
    %2331 = vmatprep.subr.bf16.mxu0 0
    %2332 = vmatpush1.bf16.msra.mxu0 0
    %2333 = vmatprep.subr.bf16.mxu0 0
    %2334 = vmatpush1.bf16.msra.mxu0 0
    %2335 = vmatprep.subr.bf16.mxu0 0
    %2336 = vmatpush1.bf16.msra.mxu0 0
    %2337 = vmatprep.subr.bf16.mxu0 0
    %2338 = vmatpush1.bf16.msra.mxu0 0
    %2339 = vmatprep.subr.bf16.mxu0 0
    %2340 = vmatpush1.bf16.msra.mxu0 0
    %2341 = vmatprep.mubr.bf16.mxu0 0
    %2342 = vmatmul.mubr.bf16.gmra.mrb[0].mxu0 %v603
    %v2343 = vpop.f32.mrb[0].mxu0
    %v2344 = vadd.f32 %v2304, %v2343
    %v2345 = vpop.f32.mrb[0].mxu0
    %v2346 = vpop.f32.mrb[0].mxu0
    %v2347 = vpop.f32.mrb[0].mxu0
    %2348 = vdwg.mxu0
    %v2349 = vmax.f32 %v2344, 0.0
    %v2350 = vpack.c.bf16 %v2349, %v2349
    %v2351 = vld [vmem:[%s3] sm:$0xf]
    %v2352 = vld [vmem:[%s3 + $0x4] sm:$0xf]
    %v2353 = vld [vmem:[%s3 + $0x8] sm:$0xf]
    %v2354 = vld [vmem:[%s3 + $0xc] sm:$0xf]
    %v2355 = vld [vmem:[%s3 + $0x10] sm:$0xf]
    %v2356 = vld [vmem:[%s3 + $0x14] sm:$0xf]
    %v2357 = vld [vmem:[%s3 + $0x18] sm:$0xf]
    %v2358 = vld [vmem:[%s3 + $0x1c] sm:$0xf]
    %v2359 = vld [vmem:[%s3 + $0x20] sm:$0xf]
    %v2360 = vld [vmem:[%s3 + $0x24] sm:$0xf]
    %v2361 = vld [vmem:[%s3 + $0x28] sm:$0xf]
    %v2362 = vld [vmem:[%s3 + $0x2c] sm:$0xf]
    %v2363 = vld [vmem:[%s3 + $0x30] sm:$0xf]
    %v2364 = vld [vmem:[%s3 + $0x34] sm:$0xf]
    %v2365 = vld [vmem:[%s3 + $0x38] sm:$0xf]
    %v2366 = vld [vmem:[%s3 + $0x3c] sm:$0xf]
    %v2367 = vld [vmem:[%s4] sm:$0x1]
    %v2369 = vlaneseq
    %v2370 = vshrl.u32 %v2369, 7
    %v2371 = vsub.s32 0, %v2370
    %v2372 = vrot.slane %v2367, %v2371
    %v2390 = vunpack.c.l.b16 %v2351
    %v2391 = vunpack.c.l.b16 %v2352
    %v2392 = vunpack.c.l.b16 %v2353
    %v2393 = vunpack.c.l.b16 %v2354
    %v2394 = vunpack.c.l.b16 %v2355
    %v2395 = vunpack.c.l.b16 %v2356
    %v2396 = vunpack.c.l.b16 %v2357
    %v2397 = vunpack.c.l.b16 %v2358
    %v2398 = vunpack.c.l.b16 %v2359
    %v2399 = vunpack.c.l.b16 %v2360
    %v2400 = vunpack.c.l.b16 %v2361
    %v2401 = vunpack.c.l.b16 %v2362
    %v2402 = vunpack.c.l.b16 %v2363
    %v2403 = vunpack.c.l.b16 %v2364
    %v2404 = vunpack.c.l.b16 %v2365
    %v2405 = vunpack.c.l.b16 %v2366
    %v2406 = vpack.c.b16 %v2391, %v2390
    %v2407 = vpack.c.b16 %v2393, %v2392
    %v2408 = vpack.c.b16 %v2395, %v2394
    %v2409 = vpack.c.b16 %v2397, %v2396
    %v2410 = vpack.c.b16 %v2399, %v2398
    %v2411 = vpack.c.b16 %v2401, %v2400
    %v2412 = vpack.c.b16 %v2403, %v2402
    %v2413 = vpack.c.b16 %v2405, %v2404
    %2422 = vmatprep.subr.bf16.mxu0 0
    %2423 = vmatpush1.bf16.msra.mxu0 %v2406
    %2424 = vmatprep.subr.bf16.mxu0 0
    %2425 = vmatpush1.bf16.msra.mxu0 %v2407
    %2426 = vmatprep.subr.bf16.mxu0 0
    %2427 = vmatpush1.bf16.msra.mxu0 %v2408
    %2428 = vmatprep.subr.bf16.mxu0 0
    %2429 = vmatpush1.bf16.msra.mxu0 %v2409
    %2430 = vmatprep.subr.bf16.mxu0 0
    %2431 = vmatpush1.bf16.msra.mxu0 %v2410
    %2432 = vmatprep.subr.bf16.mxu0 0
    %2433 = vmatpush1.bf16.msra.mxu0 %v2411
    %2434 = vmatprep.subr.bf16.mxu0 0
    %2435 = vmatpush1.bf16.msra.mxu0 %v2412
    %2436 = vmatprep.subr.bf16.mxu0 0
    %2437 = vmatpush1.bf16.msra.mxu0 %v2413
    %2438 = vmatprep.subr.bf16.mxu0 0
    %2439 = vmatpush1.bf16.msra.mxu0 0
    %2440 = vmatprep.subr.bf16.mxu0 0
    %2441 = vmatpush1.bf16.msra.mxu0 0
    %2442 = vmatprep.subr.bf16.mxu0 0
    %2443 = vmatpush1.bf16.msra.mxu0 0
    %2444 = vmatprep.subr.bf16.mxu0 0
    %2445 = vmatpush1.bf16.msra.mxu0 0
    %2446 = vmatprep.subr.bf16.mxu0 0
    %2447 = vmatpush1.bf16.msra.mxu0 0
    %2448 = vmatprep.subr.bf16.mxu0 0
    %2449 = vmatpush1.bf16.msra.mxu0 0
    %2450 = vmatprep.subr.bf16.mxu0 0
    %2451 = vmatpush1.bf16.msra.mxu0 0
    %2452 = vmatprep.subr.bf16.mxu0 0
    %2453 = vmatpush1.bf16.msra.mxu0 0
    %2454 = vmatprep.mubr.bf16.mxu0 0
    %2455 = vmatmul.mubr.bf16.gmra.mrb[0].mxu0 %v2350
    %v2456 = vpop.f32.mrb[0].mxu0
    %v2457 = vadd.f32 %v2372, %v2456
    %v2458 = vpop.f32.mrb[0].mxu0
    %v2459 = vpop.f32.mrb[0].mxu0
    %v2460 = vpop.f32.mrb[0].mxu0
    %2461 = vdwg.mxu0
    %v2462 = vmax.f32 %v2457, 0.0
    %v2463 = vpack.c.bf16 %v2462, %v2462
    %v2464 = vld [vmem:[%s5] sm:$0xf]
    %v2465 = vld [vmem:[%s5 + $0x4] sm:$0xf]
    %v2466 = vld [vmem:[%s5 + $0x8] sm:$0xf]
    %v2467 = vld [vmem:[%s5 + $0xc] sm:$0xf]
    %v2468 = vld [vmem:[%s5 + $0x10] sm:$0xf]
    %v2469 = vld [vmem:[%s5 + $0x14] sm:$0xf]
    %v2470 = vld [vmem:[%s5 + $0x18] sm:$0xf]
    %v2471 = vld [vmem:[%s5 + $0x1c] sm:$0xf]
    %v2472 = vld [vmem:[%s5 + $0x20] sm:$0xf]
    %v2473 = vld [vmem:[%s5 + $0x24] sm:$0xf]
    %v2474 = vld [vmem:[%s5 + $0x28] sm:$0xf]
    %v2475 = vld [vmem:[%s5 + $0x2c] sm:$0xf]
    %v2476 = vld [vmem:[%s5 + $0x30] sm:$0xf]
    %v2477 = vld [vmem:[%s5 + $0x34] sm:$0xf]
    %v2478 = vld [vmem:[%s5 + $0x38] sm:$0xf]
    %v2479 = vld [vmem:[%s5 + $0x3c] sm:$0xf]
    %v2480 = vld [vmem:[%s6] sm:$0x1]
    %v2482 = vlaneseq
    %v2483 = vshrl.u32 %v2482, 7
    %v2484 = vsub.s32 0, %v2483
    %v2485 = vrot.slane %v2480, %v2484
    %v2503 = vunpack.c.l.b16 %v2464
    %v2504 = vunpack.c.l.b16 %v2465
    %v2505 = vunpack.c.l.b16 %v2466
    %v2506 = vunpack.c.l.b16 %v2467
    %v2507 = vunpack.c.l.b16 %v2468
    %v2508 = vunpack.c.l.b16 %v2469
    %v2509 = vunpack.c.l.b16 %v2470
    %v2510 = vunpack.c.l.b16 %v2471
    %v2511 = vunpack.c.l.b16 %v2472
    %v2512 = vunpack.c.l.b16 %v2473
    %v2513 = vunpack.c.l.b16 %v2474
    %v2514 = vunpack.c.l.b16 %v2475
    %v2515 = vunpack.c.l.b16 %v2476
    %v2516 = vunpack.c.l.b16 %v2477
    %v2517 = vunpack.c.l.b16 %v2478
    %v2518 = vunpack.c.l.b16 %v2479
    %v2519 = vpack.c.b16 %v2504, %v2503
    %v2520 = vpack.c.b16 %v2506, %v2505
    %v2521 = vpack.c.b16 %v2508, %v2507
    %v2522 = vpack.c.b16 %v2510, %v2509
    %v2523 = vpack.c.b16 %v2512, %v2511
    %v2524 = vpack.c.b16 %v2514, %v2513
    %v2525 = vpack.c.b16 %v2516, %v2515
    %v2526 = vpack.c.b16 %v2518, %v2517
    %2535 = vmatprep.subr.bf16.mxu0 0
    %2536 = vmatpush1.bf16.msra.mxu0 %v2519
    %2537 = vmatprep.subr.bf16.mxu0 0
    %2538 = vmatpush1.bf16.msra.mxu0 %v2520
    %2539 = vmatprep.subr.bf16.mxu0 0
    %2540 = vmatpush1.bf16.msra.mxu0 %v2521
    %2541 = vmatprep.subr.bf16.mxu0 0
    %2542 = vmatpush1.bf16.msra.mxu0 %v2522
    %2543 = vmatprep.subr.bf16.mxu0 0
    %2544 = vmatpush1.bf16.msra.mxu0 %v2523
    %2545 = vmatprep.subr.bf16.mxu0 0
    %2546 = vmatpush1.bf16.msra.mxu0 %v2524
    %2547 = vmatprep.subr.bf16.mxu0 0
    %2548 = vmatpush1.bf16.msra.mxu0 %v2525
    %2549 = vmatprep.subr.bf16.mxu0 0
    %2550 = vmatpush1.bf16.msra.mxu0 %v2526
    %2551 = vmatprep.subr.bf16.mxu0 0
    %2552 = vmatpush1.bf16.msra.mxu0 0
    %2553 = vmatprep.subr.bf16.mxu0 0
    %2554 = vmatpush1.bf16.msra.mxu0 0
    %2555 = vmatprep.subr.bf16.mxu0 0
    %2556 = vmatpush1.bf16.msra.mxu0 0
    %2557 = vmatprep.subr.bf16.mxu0 0
    %2558 = vmatpush1.bf16.msra.mxu0 0
    %2559 = vmatprep.subr.bf16.mxu0 0
    %2560 = vmatpush1.bf16.msra.mxu0 0
    %2561 = vmatprep.subr.bf16.mxu0 0
    %2562 = vmatpush1.bf16.msra.mxu0 0
    %2563 = vmatprep.subr.bf16.mxu0 0
    %2564 = vmatpush1.bf16.msra.mxu0 0
    %2565 = vmatprep.subr.bf16.mxu0 0
    %2566 = vmatpush1.bf16.msra.mxu0 0
    %2567 = vmatprep.mubr.bf16.mxu0 0
    %2568 = vmatmul.mubr.bf16.gmra.mrb[0].mxu0 %v2463
    %v2569 = vpop.f32.mrb[0].mxu0
    %v2570 = vadd.f32 %v2485, %v2569
    %v2571 = vpop.f32.mrb[0].mxu0
    %v2572 = vpop.f32.mrb[0].mxu0
    %v2573 = vpop.f32.mrb[0].mxu0
    %2574 = vdwg.mxu0
    %2575 = vst [vmem:[#allocation2] sm:$0x3] %v2570
    // Predicated region
    $region30: #{_lambda_.5} parent=1 // pred_check
      _
    $region31: #{_lambda_.5} parent=1 // pred_check_branch
      %2577 = sbr.rel (0) target = $region33
    $region32: #{_lambda_.5} parent=1 // pred_region
      %s2579 = ssub.s32 32, 32
      %2580 = vsyncadd [#allocation3], %s2579
      %s2582 = sshll.u32 [#allocation2], 4
      %s2583 = int_to_ptr.vmem [resolvable:$true] %s2582
      %2585 = dma.vmem_to_hbm [thread:$0]  %s2583, 32, %s7, [#allocation3]
    $region33: #{_lambda_.5} parent=1 // pred_fallthru
      _
    // Predicated region
    $region34: #{_lambda_.5} parent=1 // pred_check
      _
    $region35: #{_lambda_.5} parent=1 // pred_check_branch
      %2587 = sbr.rel (0) target = $region37
    $region36: #{_lambda_.5} parent=1 // pred_region
      %2588 = dma.done [#allocation3], 32
    $region37: #{_lambda_.5} parent=1 // pred_fallthru
      _
    %2589 = vsyncpa [#allocation3], 1

</llo_original>
